<compile_context>
chip_gen: v7x
topology: tpu7x:2x2x1
jax: 0.10.0
libtpu: 0.0.40
codegen_flags: <defaults>
</compile_context>

<pallas_src>
import functools

import jax
import jax.numpy as jnp
import numpy as np
from jax.experimental import pallas as pl
from jax.experimental.pallas import tpu as pltpu


# --------------------------------------------------------------------------
# Fused kernel: one grid step == one sample, everything VMEM-resident.
# --------------------------------------------------------------------------
def _lenet5_kernel(p1_ref, w1_ref, b1_ref, w2_ref, b2_ref,
                   fw1_ref, fb1_ref, fw2_ref, fb2_ref, fw3_ref, fb3_ref,
                   logits_ref, probs_ref,
                   p2_scr, fcin_scr):
    f32 = jnp.float32

    # ---- conv1 (3->6, k5) + ReLU ------------------------------------------
    # p1 rows are ordered (q, ph, pw) with q = 2a+b the position inside the
    # 2x2 pool window and (ph, pw) the pool-1 output pixel, so pool1 below is
    # an elementwise max of 4 contiguous 196-row slabs (lane-dense, no
    # strided access).
    c1 = jnp.dot(p1_ref[0], w1_ref[...], preferred_element_type=f32)
    c1 = jnp.maximum(c1 + b1_ref[...], 0.0)                       # (784, 8)

    # ---- maxpool1 (2x2, stride 2) -------------------------------------------
    a1 = jnp.maximum(jnp.maximum(c1[0:196], c1[196:392]),
                     jnp.maximum(c1[392:588], c1[588:784]))        # (196, 8)
    # a1[14*h + w, c] = pool1[h, w, c],  h, w in [0, 14)

    # ---- conv2 (6->16, k5) + ReLU -------------------------------------------
    # Pack the conv2 im2col matrix in VMEM: column block k = (kh, kw) holds
    # the pool1 slab shifted by (kh, kw).  Row r = 14*h + w is a valid conv2
    # output for h, w < 10; other rows are ignored downstream.
    for k in range(25):
        kh, kw = divmod(k, 5)
        off = kh * 14 + kw
        p2_scr[:, k * 8:(k + 1) * 8] = a1[off:off + 136, :]
    c2 = jnp.dot(p2_scr[...], w2_ref[...], preferred_element_type=f32)
    c2 = jnp.maximum(c2 + b2_ref[...], 0.0)                        # (136, 16)

    # ---- maxpool2 (2x2, stride 2) -------------------------------------------
    # 2x2 window anchored at conv2 pixel (2i, 2j) = rows {r, r+1, r+14, r+15}.
    t = jnp.maximum(c2[0:135, :], c2[1:136, :])                    # (135, 16)
    v = jnp.maximum(t[0:121, :], t[14:135, :])                     # (121, 16)
    # pool2[i, j, c] = v[28*i + 2*j, c],  i, j in [0, 5)

    # ---- flatten -> fc1 input ------------------------------------------------
    # fcin[0, 16*(5*i + j) + c] = pool2[i, j, c]; fc1's weight rows were
    # permuted at packing time so this equals torch.flatten's (C, H, W) order.
    for i in range(5):
        for j in range(5):
            g = i * 5 + j
            r = 28 * i + 2 * j
            fcin_scr[:, g * 16:(g + 1) * 16] = v[r:r + 1, :]

    # ---- classifier (400 -> 120 -> 84 -> n_classes) + softmax -----------------
    h = jnp.dot(fcin_scr[...], fw1_ref[...], preferred_element_type=f32)
    h = jnp.maximum(h + fb1_ref[...], 0.0)                         # (1, 128)
    h = jnp.dot(h, fw2_ref[...], preferred_element_type=f32)
    h = jnp.maximum(h + fb2_ref[...], 0.0)                         # (1, 128)
    logits = jnp.dot(h, fw3_ref[...], preferred_element_type=f32) + fb3_ref[...]

    n_classes = logits_ref.shape[-1]
    col = jax.lax.broadcasted_iota(jnp.int32, logits.shape, 1)
    masked = jnp.where(col < n_classes, logits, -1e30)             # mask pad cols
    m = jnp.max(masked, axis=-1, keepdims=True)
    e = jnp.exp(masked - m)
    s = jnp.sum(e, axis=-1, keepdims=True)
    probs = e / s            # exact division -> sum(probs) == 1 to f32 eps

    logits_ref[0] = logits[:, :n_classes]
    probs_ref[0] = probs[:, :n_classes]


# --------------------------------------------------------------------------
# One-time XLA prep of the HBM input: conv1 im2col patches, pool-friendly order.
# --------------------------------------------------------------------------
def _conv1_patches(x):
    """(N, 3, 32, 32) -> (N, 784, 80).

    Per-sample row order is (q, ph, pw), q = 2a + b the offset inside the 2x2
    pool window, (ph, pw) the pool-1 output pixel; feature order is
    (ci, kh, kw) (matches the flattened torch conv weight), padded 75 -> 80.
    """
    n = x.shape[0]
    p = jnp.stack([x[:, :, kh:kh + 28, kw:kw + 28]
                   for kh in range(5) for kw in range(5)], axis=2)  # (N,3,25,28,28)
    p = p.reshape(n, 75, 28, 28)
    p = p.reshape(n, 75, 14, 2, 14, 2)            # (n, f, ph, a, pw, b)
    p = jnp.transpose(p, (0, 3, 5, 2, 4, 1))      # (n, a, b, ph, pw, f)
    p = p.reshape(n, 784, 75)
    return jnp.pad(p, ((0, 0), (0, 0), (0, 5)))


def lenet5_forward(x, params, *, n_classes):
    n = x.shape[0]
    p1 = _conv1_patches(x.astype(jnp.float32))

    const = lambda b: (0, 0)                      # weights: VMEM-resident block
    grid_spec = pltpu.PrefetchScalarGridSpec(
        num_scalar_prefetch=0,
        grid=(n,),
        in_specs=[
            pl.BlockSpec((1, 784, 80), lambda b: (b, 0, 0)),   # per-sample patches
            pl.BlockSpec((80, 8), const),      # w1
            pl.BlockSpec((1, 8), const),       # b1
            pl.BlockSpec((200, 16), const),    # w2
            pl.BlockSpec((1, 16), const),      # b2
            pl.BlockSpec((400, 128), const),   # fw1
            pl.BlockSpec((1, 128), const),     # fb1
            pl.BlockSpec((128, 128), const),   # fw2
            pl.BlockSpec((1, 128), const),     # fb2
            pl.BlockSpec((128, 128), const),   # fw3
            pl.BlockSpec((1, 128), const),     # fb3
        ],
        out_specs=(
            pl.BlockSpec((1, 1, n_classes), lambda b: (b, 0, 0)),
            pl.BlockSpec((1, 1, n_classes), lambda b: (b, 0, 0)),
        ),
        scratch_shapes=[
            pltpu.VMEM((136, 200), jnp.float32),   # conv2 im2col
            pltpu.VMEM((1, 400), jnp.float32),     # fc1 input
        ],
    )
    logits3, probs3 = pl.pallas_call(
        _lenet5_kernel,
        out_shape=(jax.ShapeDtypeStruct((n, 1, n_classes), jnp.float32),
                   jax.ShapeDtypeStruct((n, 1, n_classes), jnp.float32)),
        grid_spec=grid_spec,
        compiler_params=pltpu.CompilerParams(
            dimension_semantics=("arbitrary",),
            vmem_limit_bytes=32 * 1024 * 1024,
        ),
    )(p1,
      params["w1"], params["b1"], params["w2"], params["b2"],
      params["fw1"], params["fb1"], params["fw2"], params["fb2"],
      params["fw3"], params["fb3"])
    return logits3[:, 0, :], probs3[:, 0, :]


# --------------------------------------------------------------------------
# Deterministic params (PyTorch layout) + one-time repack into kernel layout.
# --------------------------------------------------------------------------
def init_torch_params(key, n_classes):
    def u(k, shape, fan_in):
        bound = 1.0 / np.sqrt(fan_in)
        return jax.random.uniform(k, shape, jnp.float32, -bound, bound)
    ks = jax.random.split(key, 10)
    return dict(
        conv1_w=u(ks[0], (6, 3, 5, 5), 75), conv1_b=u(ks[1], (6,), 75),
        conv2_w=u(ks[2], (16, 6, 5, 5), 150), conv2_b=u(ks[3], (16,), 150),
        fc1_w=u(ks[4], (120, 400), 400), fc1_b=u(ks[5], (120,), 400),
        fc2_w=u(ks[6], (84, 120), 120), fc2_b=u(ks[7], (84,), 120),
        fc3_w=u(ks[8], (n_classes, 84), 84), fc3_b=u(ks[9], (n_classes,), 84),
    )


def pack_params(tp, n_classes):
    """Repack torch-layout weights into padded, pre-permuted kernel layouts."""
    assert n_classes <= 128
    w1 = tp["conv1_w"].reshape(6, 75).T                        # row = ci*25+kh*5+kw
    w1 = jnp.pad(w1, ((0, 5), (0, 2)))                         # (80, 8)
    b1 = jnp.pad(tp["conv1_b"], (0, 2)).reshape(1, 8)

    w2 = jnp.transpose(tp["conv2_w"], (2, 3, 1, 0))            # (kh, kw, ci, co)
    w2 = jnp.pad(w2.reshape(25, 6, 16), ((0, 0), (0, 2), (0, 0)))
    w2 = w2.reshape(200, 16)                                   # row = (kh*5+kw)*8+ci
    b2 = tp["conv2_b"].reshape(1, 16)

    # fc1: torch feature order (c, i, j) -> kernel order (g = 5i+j, c)
    fw1 = tp["fc1_w"].reshape(120, 16, 25)                     # (o, c, g)
    fw1 = jnp.transpose(fw1, (2, 1, 0)).reshape(400, 120)      # row = g*16 + c
    fw1 = jnp.pad(fw1, ((0, 0), (0, 8)))                       # (400, 128)
    fb1 = jnp.pad(tp["fc1_b"], (0, 8)).reshape(1, 128)

    fw2 = jnp.pad(tp["fc2_w"].T, ((0, 8), (0, 44)))            # (128, 128)
    fb2 = jnp.pad(tp["fc2_b"], (0, 44)).reshape(1, 128)

    fw3 = jnp.pad(tp["fc3_w"].T, ((0, 44), (0, 128 - n_classes)))
    fb3 = jnp.pad(tp["fc3_b"], (0, 128 - n_classes)).reshape(1, 128)

    return dict(w1=w1, b1=b1, w2=w2, b2=b2,
                fw1=fw1, fb1=fb1, fw2=fw2, fb2=fb2, fw3=fw3, fb3=fb3)


# --------------------------------------------------------------------------
# Pure-JAX reference (torch semantics) for validation.
# --------------------------------------------------------------------------
def lenet5_reference(x, tp):
    hi = jax.lax.Precision.HIGHEST
    y = jax.lax.conv(x, tp["conv1_w"], (1, 1), "VALID", precision=hi)
    y = jnp.maximum(y + tp["conv1_b"].reshape(1, 6, 1, 1), 0.0)
    y = jax.lax.reduce_window(y, -jnp.inf, jax.lax.max,
                              (1, 1, 2, 2), (1, 1, 2, 2), "VALID")
    y = jax.lax.conv(y, tp["conv2_w"], (1, 1), "VALID", precision=hi)
    y = jnp.maximum(y + tp["conv2_b"].reshape(1, 16, 1, 1), 0.0)
    y = jax.lax.reduce_window(y, -jnp.inf, jax.lax.max,
                              (1, 1, 2, 2), (1, 1, 2, 2), "VALID")
    feat = y.reshape(x.shape[0], 400)
    h = jnp.maximum(jnp.dot(feat, tp["fc1_w"].T, precision=hi) + tp["fc1_b"], 0.0)
    h = jnp.maximum(jnp.dot(h, tp["fc2_w"].T, precision=hi) + tp["fc2_b"], 0.0)
    logits = jnp.dot(h, tp["fc3_w"].T, precision=hi) + tp["fc3_b"]
    return logits, jax.nn.softmax(logits, axis=-1)


if __name__ == "__main__":
    n_classes = 10
    key = jax.random.PRNGKey(0)
    k_x, k_p = jax.random.split(key)

    # LeNet-5 requires 3x32x32 inputs so the flattened feature size is 400.
    x = jax.random.normal(k_x, (2, 3, 32, 32), jnp.float32)
    torch_params = init_torch_params(k_p, n_classes)
    kernel_params = pack_params(torch_params, n_classes)

    fwd = jax.jit(functools.partial(lenet5_forward, n_classes=n_classes))
    logits, probs = jax.block_until_ready(fwd(x, kernel_params))

    assert logits.shape == (2, n_classes)
    assert probs.shape == (2, n_classes)
    assert bool(jnp.all(jnp.isfinite(logits)))
    assert bool(jnp.allclose(jnp.sum(probs, axis=1), 1.0, atol=1e-3))

    ref_logits, ref_probs = jax.jit(lenet5_reference)(x, torch_params)
    assert bool(jnp.allclose(logits, ref_logits, atol=5e-3, rtol=2e-2))
    assert bool(jnp.allclose(probs, ref_probs, atol=5e-3, rtol=2e-2))

    print("KERNEL_OK")
</pallas_src>

<mosaic_0001>
module attributes {stable_mosaic.version = 11 : i64} {
  func.func @_lenet5_kernel(%arg0: i32, %arg1: memref<1x784x80xf32, #tpu.memory_space<vmem>>, %arg2: memref<80x8xf32, #tpu.memory_space<vmem>>, %arg3: memref<1x8xf32, #tpu.memory_space<vmem>>, %arg4: memref<200x16xf32, #tpu.memory_space<vmem>>, %arg5: memref<1x16xf32, #tpu.memory_space<vmem>>, %arg6: memref<400x128xf32, #tpu.memory_space<vmem>>, %arg7: memref<1x128xf32, #tpu.memory_space<vmem>>, %arg8: memref<128x128xf32, #tpu.memory_space<vmem>>, %arg9: memref<1x128xf32, #tpu.memory_space<vmem>>, %arg10: memref<128x128xf32, #tpu.memory_space<vmem>>, %arg11: memref<1x128xf32, #tpu.memory_space<vmem>>, %arg12: memref<1x1x10xf32, #tpu.memory_space<vmem>>, %arg13: memref<1x1x10xf32, #tpu.memory_space<vmem>>, %arg14: memref<136x200xf32, #tpu.memory_space<vmem>>, %arg15: memref<1x400xf32, #tpu.memory_space<vmem>>) attributes {dimension_semantics = [#tpu.dimension_semantics<arbitrary>], iteration_bounds = array<i64: 2>, scalar_prefetch = 0 : i64, scratch_operands = 2 : i64, tpu.core_type = #tpu.core_type<tc>, window_params = [{transform_indices = @transform_0, window_bounds = array<i64: 1, 784, 80>}, {pipeline_mode = #tpu.pipeline_mode<synchronous>, transform_indices = @transform_1, window_bounds = array<i64: 80, 8>}, {pipeline_mode = #tpu.pipeline_mode<synchronous>, transform_indices = @transform_2, window_bounds = array<i64: 1, 8>}, {pipeline_mode = #tpu.pipeline_mode<synchronous>, transform_indices = @transform_3, window_bounds = array<i64: 200, 16>}, {pipeline_mode = #tpu.pipeline_mode<synchronous>, transform_indices = @transform_4, window_bounds = array<i64: 1, 16>}, {pipeline_mode = #tpu.pipeline_mode<synchronous>, transform_indices = @transform_5, window_bounds = array<i64: 400, 128>}, {pipeline_mode = #tpu.pipeline_mode<synchronous>, transform_indices = @transform_6, window_bounds = array<i64: 1, 128>}, {pipeline_mode = #tpu.pipeline_mode<synchronous>, transform_indices = @transform_7, window_bounds = array<i64: 128, 128>}, {pipeline_mode = #tpu.pipeline_mode<synchronous>, transform_indices = @transform_8, window_bounds = array<i64: 1, 128>}, {pipeline_mode = #tpu.pipeline_mode<synchronous>, transform_indices = @transform_9, window_bounds = array<i64: 128, 128>}, {pipeline_mode = #tpu.pipeline_mode<synchronous>, transform_indices = @transform_10, window_bounds = array<i64: 1, 128>}, {transform_indices = @transform_11, window_bounds = array<i64: 1, 1, 10>}, {transform_indices = @transform_12, window_bounds = array<i64: 1, 1, 10>}]} {
    %c0 = arith.constant 0 : index
    %c0_0 = arith.constant 0 : index
    %c0_1 = arith.constant 0 : index
    %0 = vector.load %arg1[%c0, %c0_0, %c0_1] : memref<1x784x80xf32, #tpu.memory_space<vmem>>, vector<1x784x80xf32>
    %1 = vector.shape_cast %0 : vector<1x784x80xf32> to vector<784x80xf32>
    %c0_2 = arith.constant 0 : index
    %c0_3 = arith.constant 0 : index
    %2 = vector.load %arg2[%c0_2, %c0_3] : memref<80x8xf32, #tpu.memory_space<vmem>>, vector<80x8xf32>
    %cst = arith.constant dense<0.000000e+00> : vector<784x8xf32>
    %3 = tpu.matmul %1, %2, %cst {dimension_numbers = #tpu.dot_dimension_numbers<[1], [0], [0], [1], [0, 0, 1, 1], [], []>} : vector<784x80xf32>, vector<80x8xf32>, vector<784x8xf32> -> vector<784x8xf32>
    %c0_4 = arith.constant 0 : index
    %c0_5 = arith.constant 0 : index
    %4 = vector.load %arg3[%c0_4, %c0_5] : memref<1x8xf32, #tpu.memory_space<vmem>>, vector<1x8xf32>
    %5 = vector.broadcast %4 : vector<1x8xf32> to vector<784x8xf32>
    %6 = arith.addf %3, %5 : vector<784x8xf32>
    %cst_6 = arith.constant 0.000000e+00 : f32
    %7 = vector.broadcast %cst_6 : f32 to vector<784x8xf32>
    %8 = arith.maximumf %6, %7 : vector<784x8xf32>
    %9 = vector.extract_strided_slice %8 {offsets = [0, 0], sizes = [196, 8], strides = [1, 1]} : vector<784x8xf32> to vector<196x8xf32>
    %10 = vector.extract_strided_slice %8 {offsets = [196, 0], sizes = [196, 8], strides = [1, 1]} : vector<784x8xf32> to vector<196x8xf32>
    %11 = arith.maximumf %9, %10 : vector<196x8xf32>
    %12 = vector.extract_strided_slice %8 {offsets = [392, 0], sizes = [196, 8], strides = [1, 1]} : vector<784x8xf32> to vector<196x8xf32>
    %13 = vector.extract_strided_slice %8 {offsets = [588, 0], sizes = [196, 8], strides = [1, 1]} : vector<784x8xf32> to vector<196x8xf32>
    %14 = arith.maximumf %12, %13 : vector<196x8xf32>
    %15 = arith.maximumf %11, %14 : vector<196x8xf32>
    %16 = vector.extract_strided_slice %15 {offsets = [0, 0], sizes = [136, 8], strides = [1, 1]} : vector<196x8xf32> to vector<136x8xf32>
    %c0_7 = arith.constant 0 : index
    %c0_8 = arith.constant 0 : index
    %17 = vector.load %arg14[%c0_7, %c0_8] : memref<136x200xf32, #tpu.memory_space<vmem>>, vector<136x8xf32>
    tpu.vector_store %arg14[%c0_7, %c0_8], %16 {strides = array<i32>} : memref<136x200xf32, #tpu.memory_space<vmem>>, vector<136x8xf32>,
    %18 = vector.extract_strided_slice %15 {offsets = [1, 0], sizes = [136, 8], strides = [1, 1]} : vector<196x8xf32> to vector<136x8xf32>
    %c0_9 = arith.constant 0 : index
    %c8 = arith.constant 8 : index
    %19 = vector.load %arg14[%c0_9, %c8] : memref<136x200xf32, #tpu.memory_space<vmem>>, vector<136x8xf32>
    tpu.vector_store %arg14[%c0_9, %c8], %18 {strides = array<i32>} : memref<136x200xf32, #tpu.memory_space<vmem>>, vector<136x8xf32>,
    %20 = vector.extract_strided_slice %15 {offsets = [2, 0], sizes = [136, 8], strides = [1, 1]} : vector<196x8xf32> to vector<136x8xf32>
    %c0_10 = arith.constant 0 : index
    %c16 = arith.constant 16 : index
    %21 = vector.load %arg14[%c0_10, %c16] : memref<136x200xf32, #tpu.memory_space<vmem>>, vector<136x8xf32>
    tpu.vector_store %arg14[%c0_10, %c16], %20 {strides = array<i32>} : memref<136x200xf32, #tpu.memory_space<vmem>>, vector<136x8xf32>,
    %22 = vector.extract_strided_slice %15 {offsets = [3, 0], sizes = [136, 8], strides = [1, 1]} : vector<196x8xf32> to vector<136x8xf32>
    %c0_11 = arith.constant 0 : index
    %c24 = arith.constant 24 : index
    %23 = vector.load %arg14[%c0_11, %c24] : memref<136x200xf32, #tpu.memory_space<vmem>>, vector<136x8xf32>
    tpu.vector_store %arg14[%c0_11, %c24], %22 {strides = array<i32>} : memref<136x200xf32, #tpu.memory_space<vmem>>, vector<136x8xf32>,
    %24 = vector.extract_strided_slice %15 {offsets = [4, 0], sizes = [136, 8], strides = [1, 1]} : vector<196x8xf32> to vector<136x8xf32>
    %c0_12 = arith.constant 0 : index
    %c32 = arith.constant 32 : index
    %25 = vector.load %arg14[%c0_12, %c32] : memref<136x200xf32, #tpu.memory_space<vmem>>, vector<136x8xf32>
    tpu.vector_store %arg14[%c0_12, %c32], %24 {strides = array<i32>} : memref<136x200xf32, #tpu.memory_space<vmem>>, vector<136x8xf32>,
    %26 = vector.extract_strided_slice %15 {offsets = [14, 0], sizes = [136, 8], strides = [1, 1]} : vector<196x8xf32> to vector<136x8xf32>
    %c0_13 = arith.constant 0 : index
    %c40 = arith.constant 40 : index
    %27 = vector.load %arg14[%c0_13, %c40] : memref<136x200xf32, #tpu.memory_space<vmem>>, vector<136x8xf32>
    tpu.vector_store %arg14[%c0_13, %c40], %26 {strides = array<i32>} : memref<136x200xf32, #tpu.memory_space<vmem>>, vector<136x8xf32>,
    %28 = vector.extract_strided_slice %15 {offsets = [15, 0], sizes = [136, 8], strides = [1, 1]} : vector<196x8xf32> to vector<136x8xf32>
    %c0_14 = arith.constant 0 : index
    %c48 = arith.constant 48 : index
    %29 = vector.load %arg14[%c0_14, %c48] : memref<136x200xf32, #tpu.memory_space<vmem>>, vector<136x8xf32>
    tpu.vector_store %arg14[%c0_14, %c48], %28 {strides = array<i32>} : memref<136x200xf32, #tpu.memory_space<vmem>>, vector<136x8xf32>,
    %30 = vector.extract_strided_slice %15 {offsets = [16, 0], sizes = [136, 8], strides = [1, 1]} : vector<196x8xf32> to vector<136x8xf32>
    %c0_15 = arith.constant 0 : index
    %c56 = arith.constant 56 : index
    %31 = vector.load %arg14[%c0_15, %c56] : memref<136x200xf32, #tpu.memory_space<vmem>>, vector<136x8xf32>
    tpu.vector_store %arg14[%c0_15, %c56], %30 {strides = array<i32>} : memref<136x200xf32, #tpu.memory_space<vmem>>, vector<136x8xf32>,
    %32 = vector.extract_strided_slice %15 {offsets = [17, 0], sizes = [136, 8], strides = [1, 1]} : vector<196x8xf32> to vector<136x8xf32>
    %c0_16 = arith.constant 0 : index
    %c64 = arith.constant 64 : index
    %33 = vector.load %arg14[%c0_16, %c64] : memref<136x200xf32, #tpu.memory_space<vmem>>, vector<136x8xf32>
    tpu.vector_store %arg14[%c0_16, %c64], %32 {strides = array<i32>} : memref<136x200xf32, #tpu.memory_space<vmem>>, vector<136x8xf32>,
    %34 = vector.extract_strided_slice %15 {offsets = [18, 0], sizes = [136, 8], strides = [1, 1]} : vector<196x8xf32> to vector<136x8xf32>
    %c0_17 = arith.constant 0 : index
    %c72 = arith.constant 72 : index
    %35 = vector.load %arg14[%c0_17, %c72] : memref<136x200xf32, #tpu.memory_space<vmem>>, vector<136x8xf32>
    tpu.vector_store %arg14[%c0_17, %c72], %34 {strides = array<i32>} : memref<136x200xf32, #tpu.memory_space<vmem>>, vector<136x8xf32>,
    %36 = vector.extract_strided_slice %15 {offsets = [28, 0], sizes = [136, 8], strides = [1, 1]} : vector<196x8xf32> to vector<136x8xf32>
    %c0_18 = arith.constant 0 : index
    %c80 = arith.constant 80 : index
    %37 = vector.load %arg14[%c0_18, %c80] : memref<136x200xf32, #tpu.memory_space<vmem>>, vector<136x8xf32>
    tpu.vector_store %arg14[%c0_18, %c80], %36 {strides = array<i32>} : memref<136x200xf32, #tpu.memory_space<vmem>>, vector<136x8xf32>,
    %38 = vector.extract_strided_slice %15 {offsets = [29, 0], sizes = [136, 8], strides = [1, 1]} : vector<196x8xf32> to vector<136x8xf32>
    %c0_19 = arith.constant 0 : index
    %c88 = arith.constant 88 : index
    %39 = vector.load %arg14[%c0_19, %c88] : memref<136x200xf32, #tpu.memory_space<vmem>>, vector<136x8xf32>
    tpu.vector_store %arg14[%c0_19, %c88], %38 {strides = array<i32>} : memref<136x200xf32, #tpu.memory_space<vmem>>, vector<136x8xf32>,
    %40 = vector.extract_strided_slice %15 {offsets = [30, 0], sizes = [136, 8], strides = [1, 1]} : vector<196x8xf32> to vector<136x8xf32>
    %c0_20 = arith.constant 0 : index
    %c96 = arith.constant 96 : index
    %41 = vector.load %arg14[%c0_20, %c96] : memref<136x200xf32, #tpu.memory_space<vmem>>, vector<136x8xf32>
    tpu.vector_store %arg14[%c0_20, %c96], %40 {strides = array<i32>} : memref<136x200xf32, #tpu.memory_space<vmem>>, vector<136x8xf32>,
    %42 = vector.extract_strided_slice %15 {offsets = [31, 0], sizes = [136, 8], strides = [1, 1]} : vector<196x8xf32> to vector<136x8xf32>
    %c0_21 = arith.constant 0 : index
    %c104 = arith.constant 104 : index
    %43 = vector.load %arg14[%c0_21, %c104] : memref<136x200xf32, #tpu.memory_space<vmem>>, vector<136x8xf32>
    tpu.vector_store %arg14[%c0_21, %c104], %42 {strides = array<i32>} : memref<136x200xf32, #tpu.memory_space<vmem>>, vector<136x8xf32>,
    %44 = vector.extract_strided_slice %15 {offsets = [32, 0], sizes = [136, 8], strides = [1, 1]} : vector<196x8xf32> to vector<136x8xf32>
    %c0_22 = arith.constant 0 : index
    %c112 = arith.constant 112 : index
    %45 = vector.load %arg14[%c0_22, %c112] : memref<136x200xf32, #tpu.memory_space<vmem>>, vector<136x8xf32>
    tpu.vector_store %arg14[%c0_22, %c112], %44 {strides = array<i32>} : memref<136x200xf32, #tpu.memory_space<vmem>>, vector<136x8xf32>,
    %46 = vector.extract_strided_slice %15 {offsets = [42, 0], sizes = [136, 8], strides = [1, 1]} : vector<196x8xf32> to vector<136x8xf32>
    %c0_23 = arith.constant 0 : index
    %c120 = arith.constant 120 : index
    %47 = vector.load %arg14[%c0_23, %c120] : memref<136x200xf32, #tpu.memory_space<vmem>>, vector<136x8xf32>
    tpu.vector_store %arg14[%c0_23, %c120], %46 {strides = array<i32>} : memref<136x200xf32, #tpu.memory_space<vmem>>, vector<136x8xf32>,
    %48 = vector.extract_strided_slice %15 {offsets = [43, 0], sizes = [136, 8], strides = [1, 1]} : vector<196x8xf32> to vector<136x8xf32>
    %c0_24 = arith.constant 0 : index
    %c128 = arith.constant 128 : index
    %49 = vector.load %arg14[%c0_24, %c128] : memref<136x200xf32, #tpu.memory_space<vmem>>, vector<136x8xf32>
    tpu.vector_store %arg14[%c0_24, %c128], %48 {strides = array<i32>} : memref<136x200xf32, #tpu.memory_space<vmem>>, vector<136x8xf32>,
    %50 = vector.extract_strided_slice %15 {offsets = [44, 0], sizes = [136, 8], strides = [1, 1]} : vector<196x8xf32> to vector<136x8xf32>
    %c0_25 = arith.constant 0 : index
    %c136 = arith.constant 136 : index
    %51 = vector.load %arg14[%c0_25, %c136] : memref<136x200xf32, #tpu.memory_space<vmem>>, vector<136x8xf32>
    tpu.vector_store %arg14[%c0_25, %c136], %50 {strides = array<i32>} : memref<136x200xf32, #tpu.memory_space<vmem>>, vector<136x8xf32>,
    %52 = vector.extract_strided_slice %15 {offsets = [45, 0], sizes = [136, 8], strides = [1, 1]} : vector<196x8xf32> to vector<136x8xf32>
    %c0_26 = arith.constant 0 : index
    %c144 = arith.constant 144 : index
    %53 = vector.load %arg14[%c0_26, %c144] : memref<136x200xf32, #tpu.memory_space<vmem>>, vector<136x8xf32>
    tpu.vector_store %arg14[%c0_26, %c144], %52 {strides = array<i32>} : memref<136x200xf32, #tpu.memory_space<vmem>>, vector<136x8xf32>,
    %54 = vector.extract_strided_slice %15 {offsets = [46, 0], sizes = [136, 8], strides = [1, 1]} : vector<196x8xf32> to vector<136x8xf32>
    %c0_27 = arith.constant 0 : index
    %c152 = arith.constant 152 : index
    %55 = vector.load %arg14[%c0_27, %c152] : memref<136x200xf32, #tpu.memory_space<vmem>>, vector<136x8xf32>
    tpu.vector_store %arg14[%c0_27, %c152], %54 {strides = array<i32>} : memref<136x200xf32, #tpu.memory_space<vmem>>, vector<136x8xf32>,
    %56 = vector.extract_strided_slice %15 {offsets = [56, 0], sizes = [136, 8], strides = [1, 1]} : vector<196x8xf32> to vector<136x8xf32>
    %c0_28 = arith.constant 0 : index
    %c160 = arith.constant 160 : index
    %57 = vector.load %arg14[%c0_28, %c160] : memref<136x200xf32, #tpu.memory_space<vmem>>, vector<136x8xf32>
    tpu.vector_store %arg14[%c0_28, %c160], %56 {strides = array<i32>} : memref<136x200xf32, #tpu.memory_space<vmem>>, vector<136x8xf32>,
    %58 = vector.extract_strided_slice %15 {offsets = [57, 0], sizes = [136, 8], strides = [1, 1]} : vector<196x8xf32> to vector<136x8xf32>
    %c0_29 = arith.constant 0 : index
    %c168 = arith.constant 168 : index
    %59 = vector.load %arg14[%c0_29, %c168] : memref<136x200xf32, #tpu.memory_space<vmem>>, vector<136x8xf32>
    tpu.vector_store %arg14[%c0_29, %c168], %58 {strides = array<i32>} : memref<136x200xf32, #tpu.memory_space<vmem>>, vector<136x8xf32>,
    %60 = vector.extract_strided_slice %15 {offsets = [58, 0], sizes = [136, 8], strides = [1, 1]} : vector<196x8xf32> to vector<136x8xf32>
    %c0_30 = arith.constant 0 : index
    %c176 = arith.constant 176 : index
    %61 = vector.load %arg14[%c0_30, %c176] : memref<136x200xf32, #tpu.memory_space<vmem>>, vector<136x8xf32>
    tpu.vector_store %arg14[%c0_30, %c176], %60 {strides = array<i32>} : memref<136x200xf32, #tpu.memory_space<vmem>>, vector<136x8xf32>,
    %62 = vector.extract_strided_slice %15 {offsets = [59, 0], sizes = [136, 8], strides = [1, 1]} : vector<196x8xf32> to vector<136x8xf32>
    %c0_31 = arith.constant 0 : index
    %c184 = arith.constant 184 : index
    %63 = vector.load %arg14[%c0_31, %c184] : memref<136x200xf32, #tpu.memory_space<vmem>>, vector<136x8xf32>
    tpu.vector_store %arg14[%c0_31, %c184], %62 {strides = array<i32>} : memref<136x200xf32, #tpu.memory_space<vmem>>, vector<136x8xf32>,
    %64 = vector.extract_strided_slice %15 {offsets = [60, 0], sizes = [136, 8], strides = [1, 1]} : vector<196x8xf32> to vector<136x8xf32>
    %c0_32 = arith.constant 0 : index
    %c192 = arith.constant 192 : index
    %65 = vector.load %arg14[%c0_32, %c192] : memref<136x200xf32, #tpu.memory_space<vmem>>, vector<136x8xf32>
    tpu.vector_store %arg14[%c0_32, %c192], %64 {strides = array<i32>} : memref<136x200xf32, #tpu.memory_space<vmem>>, vector<136x8xf32>,
    %c0_33 = arith.constant 0 : index
    %c0_34 = arith.constant 0 : index
    %66 = vector.load %arg14[%c0_33, %c0_34] : memref<136x200xf32, #tpu.memory_space<vmem>>, vector<136x200xf32>
    %c0_35 = arith.constant 0 : index
    %c0_36 = arith.constant 0 : index
    %67 = vector.load %arg4[%c0_35, %c0_36] : memref<200x16xf32, #tpu.memory_space<vmem>>, vector<200x16xf32>
    %cst_37 = arith.constant dense<0.000000e+00> : vector<136x16xf32>
    %68 = tpu.matmul %66, %67, %cst_37 {dimension_numbers = #tpu.dot_dimension_numbers<[1], [0], [0], [1], [0, 0, 1, 1], [], []>} : vector<136x200xf32>, vector<200x16xf32>, vector<136x16xf32> -> vector<136x16xf32>
    %c0_38 = arith.constant 0 : index
    %c0_39 = arith.constant 0 : index
    %69 = vector.load %arg5[%c0_38, %c0_39] : memref<1x16xf32, #tpu.memory_space<vmem>>, vector<1x16xf32>
    %70 = vector.broadcast %69 : vector<1x16xf32> to vector<136x16xf32>
    %71 = arith.addf %68, %70 : vector<136x16xf32>
    %cst_40 = arith.constant 0.000000e+00 : f32
    %72 = vector.broadcast %cst_40 : f32 to vector<136x16xf32>
    %73 = arith.maximumf %71, %72 : vector<136x16xf32>
    %74 = vector.extract_strided_slice %73 {offsets = [0, 0], sizes = [135, 16], strides = [1, 1]} : vector<136x16xf32> to vector<135x16xf32>
    %75 = vector.extract_strided_slice %73 {offsets = [1, 0], sizes = [135, 16], strides = [1, 1]} : vector<136x16xf32> to vector<135x16xf32>
    %76 = arith.maximumf %74, %75 : vector<135x16xf32>
    %77 = vector.extract_strided_slice %76 {offsets = [0, 0], sizes = [121, 16], strides = [1, 1]} : vector<135x16xf32> to vector<121x16xf32>
    %78 = vector.extract_strided_slice %76 {offsets = [14, 0], sizes = [121, 16], strides = [1, 1]} : vector<135x16xf32> to vector<121x16xf32>
    %79 = arith.maximumf %77, %78 : vector<121x16xf32>
    %80 = vector.extract_strided_slice %79 {offsets = [0, 0], sizes = [1, 16], strides = [1, 1]} : vector<121x16xf32> to vector<1x16xf32>
    %c0_41 = arith.constant 0 : index
    %c0_42 = arith.constant 0 : index
    %81 = vector.load %arg15[%c0_41, %c0_42] : memref<1x400xf32, #tpu.memory_space<vmem>>, vector<1x16xf32>
    tpu.vector_store %arg15[%c0_41, %c0_42], %80 {strides = array<i32>} : memref<1x400xf32, #tpu.memory_space<vmem>>, vector<1x16xf32>,
    %82 = vector.extract_strided_slice %79 {offsets = [2, 0], sizes = [1, 16], strides = [1, 1]} : vector<121x16xf32> to vector<1x16xf32>
    %c0_43 = arith.constant 0 : index
    %c16_44 = arith.constant 16 : index
    %83 = vector.load %arg15[%c0_43, %c16_44] : memref<1x400xf32, #tpu.memory_space<vmem>>, vector<1x16xf32>
    tpu.vector_store %arg15[%c0_43, %c16_44], %82 {strides = array<i32>} : memref<1x400xf32, #tpu.memory_space<vmem>>, vector<1x16xf32>,
    %84 = vector.extract_strided_slice %79 {offsets = [4, 0], sizes = [1, 16], strides = [1, 1]} : vector<121x16xf32> to vector<1x16xf32>
    %c0_45 = arith.constant 0 : index
    %c32_46 = arith.constant 32 : index
    %85 = vector.load %arg15[%c0_45, %c32_46] : memref<1x400xf32, #tpu.memory_space<vmem>>, vector<1x16xf32>
    tpu.vector_store %arg15[%c0_45, %c32_46], %84 {strides = array<i32>} : memref<1x400xf32, #tpu.memory_space<vmem>>, vector<1x16xf32>,
    %86 = vector.extract_strided_slice %79 {offsets = [6, 0], sizes = [1, 16], strides = [1, 1]} : vector<121x16xf32> to vector<1x16xf32>
    %c0_47 = arith.constant 0 : index
    %c48_48 = arith.constant 48 : index
    %87 = vector.load %arg15[%c0_47, %c48_48] : memref<1x400xf32, #tpu.memory_space<vmem>>, vector<1x16xf32>
    tpu.vector_store %arg15[%c0_47, %c48_48], %86 {strides = array<i32>} : memref<1x400xf32, #tpu.memory_space<vmem>>, vector<1x16xf32>,
    %88 = vector.extract_strided_slice %79 {offsets = [8, 0], sizes = [1, 16], strides = [1, 1]} : vector<121x16xf32> to vector<1x16xf32>
    %c0_49 = arith.constant 0 : index
    %c64_50 = arith.constant 64 : index
    %89 = vector.load %arg15[%c0_49, %c64_50] : memref<1x400xf32, #tpu.memory_space<vmem>>, vector<1x16xf32>
    tpu.vector_store %arg15[%c0_49, %c64_50], %88 {strides = array<i32>} : memref<1x400xf32, #tpu.memory_space<vmem>>, vector<1x16xf32>,
    %90 = vector.extract_strided_slice %79 {offsets = [28, 0], sizes = [1, 16], strides = [1, 1]} : vector<121x16xf32> to vector<1x16xf32>
    %c0_51 = arith.constant 0 : index
    %c80_52 = arith.constant 80 : index
    %91 = vector.load %arg15[%c0_51, %c80_52] : memref<1x400xf32, #tpu.memory_space<vmem>>, vector<1x16xf32>
    tpu.vector_store %arg15[%c0_51, %c80_52], %90 {strides = array<i32>} : memref<1x400xf32, #tpu.memory_space<vmem>>, vector<1x16xf32>,
    %92 = vector.extract_strided_slice %79 {offsets = [30, 0], sizes = [1, 16], strides = [1, 1]} : vector<121x16xf32> to vector<1x16xf32>
    %c0_53 = arith.constant 0 : index
    %c96_54 = arith.constant 96 : index
    %93 = vector.load %arg15[%c0_53, %c96_54] : memref<1x400xf32, #tpu.memory_space<vmem>>, vector<1x16xf32>
    tpu.vector_store %arg15[%c0_53, %c96_54], %92 {strides = array<i32>} : memref<1x400xf32, #tpu.memory_space<vmem>>, vector<1x16xf32>,
    %94 = vector.extract_strided_slice %79 {offsets = [32, 0], sizes = [1, 16], strides = [1, 1]} : vector<121x16xf32> to vector<1x16xf32>
    %c0_55 = arith.constant 0 : index
    %c112_56 = arith.constant 112 : index
    %95 = vector.load %arg15[%c0_55, %c112_56] : memref<1x400xf32, #tpu.memory_space<vmem>>, vector<1x16xf32>
    tpu.vector_store %arg15[%c0_55, %c112_56], %94 {strides = array<i32>} : memref<1x400xf32, #tpu.memory_space<vmem>>, vector<1x16xf32>,
    %96 = vector.extract_strided_slice %79 {offsets = [34, 0], sizes = [1, 16], strides = [1, 1]} : vector<121x16xf32> to vector<1x16xf32>
    %c0_57 = arith.constant 0 : index
    %c128_58 = arith.constant 128 : index
    %97 = vector.load %arg15[%c0_57, %c128_58] : memref<1x400xf32, #tpu.memory_space<vmem>>, vector<1x16xf32>
    tpu.vector_store %arg15[%c0_57, %c128_58], %96 {strides = array<i32>} : memref<1x400xf32, #tpu.memory_space<vmem>>, vector<1x16xf32>,
    %98 = vector.extract_strided_slice %79 {offsets = [36, 0], sizes = [1, 16], strides = [1, 1]} : vector<121x16xf32> to vector<1x16xf32>
    %c0_59 = arith.constant 0 : index
    %c144_60 = arith.constant 144 : index
    %99 = vector.load %arg15[%c0_59, %c144_60] : memref<1x400xf32, #tpu.memory_space<vmem>>, vector<1x16xf32>
    tpu.vector_store %arg15[%c0_59, %c144_60], %98 {strides = array<i32>} : memref<1x400xf32, #tpu.memory_space<vmem>>, vector<1x16xf32>,
    %100 = vector.extract_strided_slice %79 {offsets = [56, 0], sizes = [1, 16], strides = [1, 1]} : vector<121x16xf32> to vector<1x16xf32>
    %c0_61 = arith.constant 0 : index
    %c160_62 = arith.constant 160 : index
    %101 = vector.load %arg15[%c0_61, %c160_62] : memref<1x400xf32, #tpu.memory_space<vmem>>, vector<1x16xf32>
    tpu.vector_store %arg15[%c0_61, %c160_62], %100 {strides = array<i32>} : memref<1x400xf32, #tpu.memory_space<vmem>>, vector<1x16xf32>,
    %102 = vector.extract_strided_slice %79 {offsets = [58, 0], sizes = [1, 16], strides = [1, 1]} : vector<121x16xf32> to vector<1x16xf32>
    %c0_63 = arith.constant 0 : index
    %c176_64 = arith.constant 176 : index
    %103 = vector.load %arg15[%c0_63, %c176_64] : memref<1x400xf32, #tpu.memory_space<vmem>>, vector<1x16xf32>
    tpu.vector_store %arg15[%c0_63, %c176_64], %102 {strides = array<i32>} : memref<1x400xf32, #tpu.memory_space<vmem>>, vector<1x16xf32>,
    %104 = vector.extract_strided_slice %79 {offsets = [60, 0], sizes = [1, 16], strides = [1, 1]} : vector<121x16xf32> to vector<1x16xf32>
    %c0_65 = arith.constant 0 : index
    %c192_66 = arith.constant 192 : index
    %105 = vector.load %arg15[%c0_65, %c192_66] : memref<1x400xf32, #tpu.memory_space<vmem>>, vector<1x16xf32>
    tpu.vector_store %arg15[%c0_65, %c192_66], %104 {strides = array<i32>} : memref<1x400xf32, #tpu.memory_space<vmem>>, vector<1x16xf32>,
    %106 = vector.extract_strided_slice %79 {offsets = [62, 0], sizes = [1, 16], strides = [1, 1]} : vector<121x16xf32> to vector<1x16xf32>
    %c0_67 = arith.constant 0 : index
    %c208 = arith.constant 208 : index
    %107 = vector.load %arg15[%c0_67, %c208] : memref<1x400xf32, #tpu.memory_space<vmem>>, vector<1x16xf32>
    tpu.vector_store %arg15[%c0_67, %c208], %106 {strides = array<i32>} : memref<1x400xf32, #tpu.memory_space<vmem>>, vector<1x16xf32>,
    %108 = vector.extract_strided_slice %79 {offsets = [64, 0], sizes = [1, 16], strides = [1, 1]} : vector<121x16xf32> to vector<1x16xf32>
    %c0_68 = arith.constant 0 : index
    %c224 = arith.constant 224 : index
    %109 = vector.load %arg15[%c0_68, %c224] : memref<1x400xf32, #tpu.memory_space<vmem>>, vector<1x16xf32>
    tpu.vector_store %arg15[%c0_68, %c224], %108 {strides = array<i32>} : memref<1x400xf32, #tpu.memory_space<vmem>>, vector<1x16xf32>,
    %110 = vector.extract_strided_slice %79 {offsets = [84, 0], sizes = [1, 16], strides = [1, 1]} : vector<121x16xf32> to vector<1x16xf32>
    %c0_69 = arith.constant 0 : index
    %c240 = arith.constant 240 : index
    %111 = vector.load %arg15[%c0_69, %c240] : memref<1x400xf32, #tpu.memory_space<vmem>>, vector<1x16xf32>
    tpu.vector_store %arg15[%c0_69, %c240], %110 {strides = array<i32>} : memref<1x400xf32, #tpu.memory_space<vmem>>, vector<1x16xf32>,
    %112 = vector.extract_strided_slice %79 {offsets = [86, 0], sizes = [1, 16], strides = [1, 1]} : vector<121x16xf32> to vector<1x16xf32>
    %c0_70 = arith.constant 0 : index
    %c256 = arith.constant 256 : index
    %113 = vector.load %arg15[%c0_70, %c256] : memref<1x400xf32, #tpu.memory_space<vmem>>, vector<1x16xf32>
    tpu.vector_store %arg15[%c0_70, %c256], %112 {strides = array<i32>} : memref<1x400xf32, #tpu.memory_space<vmem>>, vector<1x16xf32>,
    %114 = vector.extract_strided_slice %79 {offsets = [88, 0], sizes = [1, 16], strides = [1, 1]} : vector<121x16xf32> to vector<1x16xf32>
    %c0_71 = arith.constant 0 : index
    %c272 = arith.constant 272 : index
    %115 = vector.load %arg15[%c0_71, %c272] : memref<1x400xf32, #tpu.memory_space<vmem>>, vector<1x16xf32>
    tpu.vector_store %arg15[%c0_71, %c272], %114 {strides = array<i32>} : memref<1x400xf32, #tpu.memory_space<vmem>>, vector<1x16xf32>,
    %116 = vector.extract_strided_slice %79 {offsets = [90, 0], sizes = [1, 16], strides = [1, 1]} : vector<121x16xf32> to vector<1x16xf32>
    %c0_72 = arith.constant 0 : index
    %c288 = arith.constant 288 : index
    %117 = vector.load %arg15[%c0_72, %c288] : memref<1x400xf32, #tpu.memory_space<vmem>>, vector<1x16xf32>
    tpu.vector_store %arg15[%c0_72, %c288], %116 {strides = array<i32>} : memref<1x400xf32, #tpu.memory_space<vmem>>, vector<1x16xf32>,
    %118 = vector.extract_strided_slice %79 {offsets = [92, 0], sizes = [1, 16], strides = [1, 1]} : vector<121x16xf32> to vector<1x16xf32>
    %c0_73 = arith.constant 0 : index
    %c304 = arith.constant 304 : index
    %119 = vector.load %arg15[%c0_73, %c304] : memref<1x400xf32, #tpu.memory_space<vmem>>, vector<1x16xf32>
    tpu.vector_store %arg15[%c0_73, %c304], %118 {strides = array<i32>} : memref<1x400xf32, #tpu.memory_space<vmem>>, vector<1x16xf32>,
    %120 = vector.extract_strided_slice %79 {offsets = [112, 0], sizes = [1, 16], strides = [1, 1]} : vector<121x16xf32> to vector<1x16xf32>
    %c0_74 = arith.constant 0 : index
    %c320 = arith.constant 320 : index
    %121 = vector.load %arg15[%c0_74, %c320] : memref<1x400xf32, #tpu.memory_space<vmem>>, vector<1x16xf32>
    tpu.vector_store %arg15[%c0_74, %c320], %120 {strides = array<i32>} : memref<1x400xf32, #tpu.memory_space<vmem>>, vector<1x16xf32>,
    %122 = vector.extract_strided_slice %79 {offsets = [114, 0], sizes = [1, 16], strides = [1, 1]} : vector<121x16xf32> to vector<1x16xf32>
    %c0_75 = arith.constant 0 : index
    %c336 = arith.constant 336 : index
    %123 = vector.load %arg15[%c0_75, %c336] : memref<1x400xf32, #tpu.memory_space<vmem>>, vector<1x16xf32>
    tpu.vector_store %arg15[%c0_75, %c336], %122 {strides = array<i32>} : memref<1x400xf32, #tpu.memory_space<vmem>>, vector<1x16xf32>,
    %124 = vector.extract_strided_slice %79 {offsets = [116, 0], sizes = [1, 16], strides = [1, 1]} : vector<121x16xf32> to vector<1x16xf32>
    %c0_76 = arith.constant 0 : index
    %c352 = arith.constant 352 : index
    %125 = vector.load %arg15[%c0_76, %c352] : memref<1x400xf32, #tpu.memory_space<vmem>>, vector<1x16xf32>
    tpu.vector_store %arg15[%c0_76, %c352], %124 {strides = array<i32>} : memref<1x400xf32, #tpu.memory_space<vmem>>, vector<1x16xf32>,
    %126 = vector.extract_strided_slice %79 {offsets = [118, 0], sizes = [1, 16], strides = [1, 1]} : vector<121x16xf32> to vector<1x16xf32>
    %c0_77 = arith.constant 0 : index
    %c368 = arith.constant 368 : index
    %127 = vector.load %arg15[%c0_77, %c368] : memref<1x400xf32, #tpu.memory_space<vmem>>, vector<1x16xf32>
    tpu.vector_store %arg15[%c0_77, %c368], %126 {strides = array<i32>} : memref<1x400xf32, #tpu.memory_space<vmem>>, vector<1x16xf32>,
    %128 = vector.extract_strided_slice %79 {offsets = [120, 0], sizes = [1, 16], strides = [1, 1]} : vector<121x16xf32> to vector<1x16xf32>
    %c0_78 = arith.constant 0 : index
    %c384 = arith.constant 384 : index
    %129 = vector.load %arg15[%c0_78, %c384] : memref<1x400xf32, #tpu.memory_space<vmem>>, vector<1x16xf32>
    tpu.vector_store %arg15[%c0_78, %c384], %128 {strides = array<i32>} : memref<1x400xf32, #tpu.memory_space<vmem>>, vector<1x16xf32>,
    %c0_79 = arith.constant 0 : index
    %c0_80 = arith.constant 0 : index
    %130 = vector.load %arg15[%c0_79, %c0_80] : memref<1x400xf32, #tpu.memory_space<vmem>>, vector<1x400xf32>
    %c0_81 = arith.constant 0 : index
    %c0_82 = arith.constant 0 : index
    %131 = vector.load %arg6[%c0_81, %c0_82] : memref<400x128xf32, #tpu.memory_space<vmem>>, vector<400x128xf32>
    %cst_83 = arith.constant dense<0.000000e+00> : vector<1x128xf32>
    %132 = tpu.matmul %130, %131, %cst_83 {dimension_numbers = #tpu.dot_dimension_numbers<[1], [0], [0], [1], [0, 0, 1, 1], [], []>} : vector<1x400xf32>, vector<400x128xf32>, vector<1x128xf32> -> vector<1x128xf32>
    %c0_84 = arith.constant 0 : index
    %c0_85 = arith.constant 0 : index
    %133 = vector.load %arg7[%c0_84, %c0_85] : memref<1x128xf32, #tpu.memory_space<vmem>>, vector<1x128xf32>
    %134 = arith.addf %132, %133 : vector<1x128xf32>
    %cst_86 = arith.constant 0.000000e+00 : f32
    %135 = vector.broadcast %cst_86 : f32 to vector<1x128xf32>
    %136 = arith.maximumf %134, %135 : vector<1x128xf32>
    %c0_87 = arith.constant 0 : index
    %c0_88 = arith.constant 0 : index
    %137 = vector.load %arg8[%c0_87, %c0_88] : memref<128x128xf32, #tpu.memory_space<vmem>>, vector<128x128xf32>
    %cst_89 = arith.constant dense<0.000000e+00> : vector<1x128xf32>
    %138 = tpu.matmul %136, %137, %cst_89 {dimension_numbers = #tpu.dot_dimension_numbers<[1], [0], [0], [1], [0, 0, 1, 1], [], []>} : vector<1x128xf32>, vector<128x128xf32>, vector<1x128xf32> -> vector<1x128xf32>
    %c0_90 = arith.constant 0 : index
    %c0_91 = arith.constant 0 : index
    %139 = vector.load %arg9[%c0_90, %c0_91] : memref<1x128xf32, #tpu.memory_space<vmem>>, vector<1x128xf32>
    %140 = arith.addf %138, %139 : vector<1x128xf32>
    %cst_92 = arith.constant 0.000000e+00 : f32
    %141 = vector.broadcast %cst_92 : f32 to vector<1x128xf32>
    %142 = arith.maximumf %140, %141 : vector<1x128xf32>
    %c0_93 = arith.constant 0 : index
    %c0_94 = arith.constant 0 : index
    %143 = vector.load %arg10[%c0_93, %c0_94] : memref<128x128xf32, #tpu.memory_space<vmem>>, vector<128x128xf32>
    %cst_95 = arith.constant dense<0.000000e+00> : vector<1x128xf32>
    %144 = tpu.matmul %142, %143, %cst_95 {dimension_numbers = #tpu.dot_dimension_numbers<[1], [0], [0], [1], [0, 0, 1, 1], [], []>} : vector<1x128xf32>, vector<128x128xf32>, vector<1x128xf32> -> vector<1x128xf32>
    %c0_96 = arith.constant 0 : index
    %c0_97 = arith.constant 0 : index
    %145 = vector.load %arg11[%c0_96, %c0_97] : memref<1x128xf32, #tpu.memory_space<vmem>>, vector<1x128xf32>
    %146 = arith.addf %144, %145 : vector<1x128xf32>
    %147 = tpu.iota {dimensions = array<i32: 1>} : vector<1x128xi32>
    %c10_i32 = arith.constant 10 : i32
    %148 = vector.broadcast %c10_i32 : i32 to vector<1x128xi32>
    %149 = arith.cmpi slt, %147, %148 : vector<1x128xi32>
    %cst_98 = arith.constant -1.000000e+30 : f32
    %150 = vector.broadcast %cst_98 : f32 to vector<1x128xf32>
    %151 = arith.select %149, %146, %150 : vector<1x128xi1>, vector<1x128xf32>
    %cst_99 = arith.constant dense<0xFF800000> : vector<1xf32>
    %152 = vector.multi_reduction <maximumf>, %151, %cst_99 [1] : vector<1x128xf32> to vector<1xf32>
    %153 = vector.shape_cast %152 : vector<1xf32> to vector<1x1xf32>
    %154 = vector.broadcast %153 : vector<1x1xf32> to vector<1x128xf32>
    %155 = arith.subf %151, %154 : vector<1x128xf32>
    %156 = math.exp %155 : vector<1x128xf32>
    %cst_100 = arith.constant dense<0.000000e+00> : vector<1xf32>
    %157 = vector.multi_reduction <add>, %156, %cst_100 [1] : vector<1x128xf32> to vector<1xf32>
    %158 = vector.shape_cast %157 : vector<1xf32> to vector<1x1xf32>
    %159 = vector.broadcast %158 : vector<1x1xf32> to vector<1x128xf32>
    %160 = arith.divf %156, %159 : vector<1x128xf32>
    %161 = vector.extract_strided_slice %146 {offsets = [0, 0], sizes = [1, 10], strides = [1, 1]} : vector<1x128xf32> to vector<1x10xf32>
    %c0_101 = arith.constant 0 : index
    %c0_102 = arith.constant 0 : index
    %c0_103 = arith.constant 0 : index
    %162 = vector.load %arg12[%c0_101, %c0_102, %c0_103] : memref<1x1x10xf32, #tpu.memory_space<vmem>>, vector<1x1x10xf32>
    %163 = vector.shape_cast %162 : vector<1x1x10xf32> to vector<1x10xf32>
    %164 = vector.shape_cast %161 : vector<1x10xf32> to vector<1x1x10xf32>
    tpu.vector_store %arg12[%c0_101, %c0_102, %c0_103], %164 {strides = array<i32>} : memref<1x1x10xf32, #tpu.memory_space<vmem>>, vector<1x1x10xf32>,
    %165 = vector.extract_strided_slice %160 {offsets = [0, 0], sizes = [1, 10], strides = [1, 1]} : vector<1x128xf32> to vector<1x10xf32>
    %c0_104 = arith.constant 0 : index
    %c0_105 = arith.constant 0 : index
    %c0_106 = arith.constant 0 : index
    %166 = vector.load %arg13[%c0_104, %c0_105, %c0_106] : memref<1x1x10xf32, #tpu.memory_space<vmem>>, vector<1x1x10xf32>
    %167 = vector.shape_cast %166 : vector<1x1x10xf32> to vector<1x10xf32>
    %168 = vector.shape_cast %165 : vector<1x10xf32> to vector<1x1x10xf32>
    tpu.vector_store %arg13[%c0_104, %c0_105, %c0_106], %168 {strides = array<i32>} : memref<1x1x10xf32, #tpu.memory_space<vmem>>, vector<1x1x10xf32>,
    return
  }
  func.func @transform_0(%arg0: i32) -> (i32, i32, i32) {
    %c0_i32 = arith.constant 0 : i32
    %c0_i32_0 = arith.constant 0 : i32
    %c0_i32_1 = arith.constant 0 : i32
    return %arg0, %c0_i32, %c0_i32_0 : i32, i32, i32
  }
  func.func @transform_1(%arg0: i32) -> (i32, i32) {
    %c0_i32 = arith.constant 0 : i32
    %c0_i32_0 = arith.constant 0 : i32
    %c0_i32_1 = arith.constant 0 : i32
    return %c0_i32, %c0_i32_0 : i32, i32
  }
  func.func @transform_2(%arg0: i32) -> (i32, i32) {
    %c0_i32 = arith.constant 0 : i32
    %c0_i32_0 = arith.constant 0 : i32
    %c0_i32_1 = arith.constant 0 : i32
    return %c0_i32, %c0_i32_0 : i32, i32
  }
  func.func @transform_3(%arg0: i32) -> (i32, i32) {
    %c0_i32 = arith.constant 0 : i32
    %c0_i32_0 = arith.constant 0 : i32
    %c0_i32_1 = arith.constant 0 : i32
    return %c0_i32, %c0_i32_0 : i32, i32
  }
  func.func @transform_4(%arg0: i32) -> (i32, i32) {
    %c0_i32 = arith.constant 0 : i32
    %c0_i32_0 = arith.constant 0 : i32
    %c0_i32_1 = arith.constant 0 : i32
    return %c0_i32, %c0_i32_0 : i32, i32
  }
  func.func @transform_5(%arg0: i32) -> (i32, i32) {
    %c0_i32 = arith.constant 0 : i32
    %c0_i32_0 = arith.constant 0 : i32
    %c0_i32_1 = arith.constant 0 : i32
    return %c0_i32, %c0_i32_0 : i32, i32
  }
  func.func @transform_6(%arg0: i32) -> (i32, i32) {
    %c0_i32 = arith.constant 0 : i32
    %c0_i32_0 = arith.constant 0 : i32
    %c0_i32_1 = arith.constant 0 : i32
    return %c0_i32, %c0_i32_0 : i32, i32
  }
  func.func @transform_7(%arg0: i32) -> (i32, i32) {
    %c0_i32 = arith.constant 0 : i32
    %c0_i32_0 = arith.constant 0 : i32
    %c0_i32_1 = arith.constant 0 : i32
    return %c0_i32, %c0_i32_0 : i32, i32
  }
  func.func @transform_8(%arg0: i32) -> (i32, i32) {
    %c0_i32 = arith.constant 0 : i32
    %c0_i32_0 = arith.constant 0 : i32
    %c0_i32_1 = arith.constant 0 : i32
    return %c0_i32, %c0_i32_0 : i32, i32
  }
  func.func @transform_9(%arg0: i32) -> (i32, i32) {
    %c0_i32 = arith.constant 0 : i32
    %c0_i32_0 = arith.constant 0 : i32
    %c0_i32_1 = arith.constant 0 : i32
    return %c0_i32, %c0_i32_0 : i32, i32
  }
  func.func @transform_10(%arg0: i32) -> (i32, i32) {
    %c0_i32 = arith.constant 0 : i32
    %c0_i32_0 = arith.constant 0 : i32
    %c0_i32_1 = arith.constant 0 : i32
    return %c0_i32, %c0_i32_0 : i32, i32
  }
  func.func @transform_11(%arg0: i32) -> (i32, i32, i32) {
    %c0_i32 = arith.constant 0 : i32
    %c0_i32_0 = arith.constant 0 : i32
    %c0_i32_1 = arith.constant 0 : i32
    return %arg0, %c0_i32, %c0_i32_0 : i32, i32, i32
  }
  func.func @transform_12(%arg0: i32) -> (i32, i32, i32) {
    %c0_i32 = arith.constant 0 : i32
    %c0_i32_0 = arith.constant 0 : i32
    %c0_i32_1 = arith.constant 0 : i32
    return %arg0, %c0_i32, %c0_i32_0 : i32, i32, i32
  }
}

</mosaic_0001>

<llo_original>
// kernel: lenet5_forward.1
$region0: #{lenet5_forward.1}
  #allocation0 [shape = 'u32[]', space=smem, size = 0x4, offset = 0x4, fixed_abs, tag = 'smem constant byte address 0x4 - core index']
  #allocation1 [shape = 'u32[144,128]{1,0:T(1,128)}', space=vmem, size = 0x12000, scoped, tag = 'internal scratch']
  #allocation2 [shape = 'f32[136,200]{1,0:T(8,128)}', space=vmem, size = 0x22000, scoped, tag = 'scratch operand']
  #allocation3 [shape = 'f32[1,400]{1,0:T(1,128)}', space=vmem, size = 0x800, scoped, tag = 'scratch operand']
  %s0 = inlined_call_operand.vmem [shape: f32[2,784,80], index: 0, kind: input, shape index: {}]
  %s1 = inlined_call_operand.vmem [shape: f32[80,8], index: 1, kind: input, shape index: {}]
  %s2 = inlined_call_operand.vmem [shape: f32[1,8], index: 2, kind: input, shape index: {}]
  %s3 = inlined_call_operand.vmem [shape: f32[200,16], index: 3, kind: input, shape index: {}]
  %s4 = inlined_call_operand.vmem [shape: f32[1,16], index: 4, kind: input, shape index: {}]
  %s5 = inlined_call_operand.vmem [shape: f32[400,128], index: 5, kind: input, shape index: {}]
  %s6 = inlined_call_operand.vmem [shape: f32[1,128], index: 6, kind: input, shape index: {}]
  %s7 = inlined_call_operand.vmem [shape: f32[128,128], index: 7, kind: input, shape index: {}]
  %s8 = inlined_call_operand.vmem [shape: f32[1,128], index: 8, kind: input, shape index: {}]
  %s9 = inlined_call_operand.vmem [shape: f32[128,128], index: 9, kind: input, shape index: {}]
  %s10 = inlined_call_operand.vmem [shape: f32[1,128], index: 10, kind: input, shape index: {}]
  %s11 = inlined_call_operand.hbm [shape: f32[2,1,10], index: 11, kind: output, shape index: {0}]
  %s12 = inlined_call_operand.hbm [shape: f32[2,1,10], index: 12, kind: output, shape index: {1}]
  %13 = xla_tuple %s11, %s12
  %s14 = sld [smem:[#allocation0]]
  $region85: #{lenet5_forward.1} parent=0
    _
  %s16 = ssub.s32 1, %s14
  %s17 = scalar_select 0, %s16, %s14
  $region1: #{lenet5_forward.1} parent=0
    #allocation4 [shape = 'u8[1024]{0}', space=vmem, size = 0x400, scoped, tag = 'output window, operand 0']
    #allocation5 [shape = 's32[2]{0}', space=sflag, size = 0x8, scoped, tag = 'scoped memory for lenet5_forward.1']
    #allocation6 [shape = 'u8[1024]{0}', space=vmem, size = 0x400, scoped, tag = 'output window, operand 1']
    #allocation7 [shape = 's32[2]{0}', space=sflag, size = 0x8, scoped, tag = 'scoped memory for lenet5_forward.1']
    %18 = vsyncpa [#allocation5], 0
    %s19 = scalar_lea.sflag [#allocation5], 1
    %20 = vsyncpa %s19, 0
    %21 = vsyncpa [#allocation7], 0
    %s22 = scalar_lea.sflag [#allocation7], 1
    %23 = vsyncpa %s22, 0
    loop: start=0, step=1, limit=4
    $region2: #{lenet5_forward.1} parent=1 // loop_pre_header
      _
    $region3: #{lenet5_forward.1} parent=1 // loop_header
      %s25 = sphi 0, %s29
      %p26 = scmp.ge.s32.totalorder %s25, 4
      %s35 = sphi 0, %s37
      %s38 = sphi 0, %s35
      %s39 = sphi 0, %s38
      %s55 = sphi 0, %s39
      %s59 = sphi 0, %s59
      %s61 = sphi 0, %s59
      %s62 = sphi 0, %s61
      %s76 = sphi 0, %s62
      %s80 = sphi 0, %s80
      %s82 = sphi 0, %s80
      %s83 = sphi 0, %s82
      %s97 = sphi 0, %s83
      %s101 = sphi 0, %s101
      %s103 = sphi 0, %s101
      %s104 = sphi 0, %s103
      %s118 = sphi 0, %s104
      %s122 = sphi 0, %s122
      %s124 = sphi 0, %s122
      %s125 = sphi 0, %s124
      %s139 = sphi 0, %s125
      %s143 = sphi 0, %s143
      %s145 = sphi 0, %s143
      %s146 = sphi 0, %s145
      %s160 = sphi 0, %s146
      %s164 = sphi 0, %s164
      %s166 = sphi 0, %s164
      %s167 = sphi 0, %s166
      %s181 = sphi 0, %s167
      %s185 = sphi 0, %s185
      %s187 = sphi 0, %s185
      %s188 = sphi 0, %s187
      %s202 = sphi 0, %s188
      %s206 = sphi 0, %s206
      %s208 = sphi 0, %s206
      %s209 = sphi 0, %s208
      %s223 = sphi 0, %s209
      %s227 = sphi 0, %s227
      %s229 = sphi 0, %s227
      %s230 = sphi 0, %s229
      %s244 = sphi 0, %s230
      %s248 = sphi 0, %s248
      %s250 = sphi 0, %s248
      %s251 = sphi 0, %s250
      %s265 = sphi 0, %s251
      %s271 = sphi 0, %s273
      %s274 = sphi 0, %s271
      %s275 = sphi 0, %s274
      %s291 = sphi 0, %s275
      %s297 = sphi 0, %s299
      %s300 = sphi 0, %s297
      %s301 = sphi 0, %s300
      %s317 = sphi 0, %s301
    $region4: #{lenet5_forward.1} parent=1 // loop_header_branch
      %28 = sbr.rel (%p26) target = $region8
    $region5: #{lenet5_forward.1} parent=1 // loop_body
      %s30 = ssub.s32 %s25, 1
      %s31 = ssub.s32 %s25, 2
      %s32 = sadd.s32 %s25, 1
      %s33 = ssub.s32 %s25, %s32
      %p34 = scmp.eq.s32.totalorder %s33, 0
      %s36 = sadd.s32 %s35, 1
      %s37 = scalar_select %p34, %s35, %s36
      %p40 = pneg %p34
      %p41 = scmp.eq.s32.totalorder %s25, 1
      %p42 = por %p40, %p41
      %p43 = scmp.ne.s32.totalorder %s35, %s38
      %p44 = scmp.eq.s32.totalorder %s25, 0
      %p45 = por %p43, %p44
      %p46 = scmp.ne.s32.totalorder %s35, %s38
      %p47 = scmp.eq.s32.totalorder %s30, 1
      %p48 = por %p46, %p47
      %p49 = scmp.ne.s32.totalorder %s38, %s39
      %p50 = scmp.eq.s32.totalorder %s30, 0
      %p51 = por %p49, %p50
      %p52 = scmp.ne.s32.totalorder %s38, %s39
      %p53 = scmp.eq.s32.totalorder %s31, 1
      %p54 = por %p52, %p53
      %p56 = scmp.ne.s32.totalorder %s39, %s55
      %p57 = scmp.eq.s32.totalorder %s31, 0
      %p58 = por %p56, %p57
      %s60 = sadd.s32 %s59, 1
      %p63 = scmp.eq.s32.totalorder %s25, 1
      %p64 = scmp.ne.s32.totalorder %s59, %s61
      %p65 = scmp.eq.s32.totalorder %s25, 0
      %p66 = por %p64, %p65
      %p67 = scmp.ne.s32.totalorder %s59, %s61
      %p68 = scmp.eq.s32.totalorder %s30, 1
      %p69 = por %p67, %p68
      %p70 = scmp.ne.s32.totalorder %s61, %s62
      %p71 = scmp.eq.s32.totalorder %s30, 0
      %p72 = por %p70, %p71
      %p73 = scmp.ne.s32.totalorder %s61, %s62
      %p74 = scmp.eq.s32.totalorder %s31, 1
      %p75 = por %p73, %p74
      %p77 = scmp.ne.s32.totalorder %s62, %s76
      %p78 = scmp.eq.s32.totalorder %s31, 0
      %p79 = por %p77, %p78
      %s81 = sadd.s32 %s80, 1
      %p84 = scmp.eq.s32.totalorder %s25, 1
      %p85 = scmp.ne.s32.totalorder %s80, %s82
      %p86 = scmp.eq.s32.totalorder %s25, 0
      %p87 = por %p85, %p86
      %p88 = scmp.ne.s32.totalorder %s80, %s82
      %p89 = scmp.eq.s32.totalorder %s30, 1
      %p90 = por %p88, %p89
      %p91 = scmp.ne.s32.totalorder %s82, %s83
      %p92 = scmp.eq.s32.totalorder %s30, 0
      %p93 = por %p91, %p92
      %p94 = scmp.ne.s32.totalorder %s82, %s83
      %p95 = scmp.eq.s32.totalorder %s31, 1
      %p96 = por %p94, %p95
      %p98 = scmp.ne.s32.totalorder %s83, %s97
      %p99 = scmp.eq.s32.totalorder %s31, 0
      %p100 = por %p98, %p99
      %s102 = sadd.s32 %s101, 1
      %p105 = scmp.eq.s32.totalorder %s25, 1
      %p106 = scmp.ne.s32.totalorder %s101, %s103
      %p107 = scmp.eq.s32.totalorder %s25, 0
      %p108 = por %p106, %p107
      %p109 = scmp.ne.s32.totalorder %s101, %s103
      %p110 = scmp.eq.s32.totalorder %s30, 1
      %p111 = por %p109, %p110
      %p112 = scmp.ne.s32.totalorder %s103, %s104
      %p113 = scmp.eq.s32.totalorder %s30, 0
      %p114 = por %p112, %p113
      %p115 = scmp.ne.s32.totalorder %s103, %s104
      %p116 = scmp.eq.s32.totalorder %s31, 1
      %p117 = por %p115, %p116
      %p119 = scmp.ne.s32.totalorder %s104, %s118
      %p120 = scmp.eq.s32.totalorder %s31, 0
      %p121 = por %p119, %p120
      %s123 = sadd.s32 %s122, 1
      %p126 = scmp.eq.s32.totalorder %s25, 1
      %p127 = scmp.ne.s32.totalorder %s122, %s124
      %p128 = scmp.eq.s32.totalorder %s25, 0
      %p129 = por %p127, %p128
      %p130 = scmp.ne.s32.totalorder %s122, %s124
      %p131 = scmp.eq.s32.totalorder %s30, 1
      %p132 = por %p130, %p131
      %p133 = scmp.ne.s32.totalorder %s124, %s125
      %p134 = scmp.eq.s32.totalorder %s30, 0
      %p135 = por %p133, %p134
      %p136 = scmp.ne.s32.totalorder %s124, %s125
      %p137 = scmp.eq.s32.totalorder %s31, 1
      %p138 = por %p136, %p137
      %p140 = scmp.ne.s32.totalorder %s125, %s139
      %p141 = scmp.eq.s32.totalorder %s31, 0
      %p142 = por %p140, %p141
      %s144 = sadd.s32 %s143, 1
      %p147 = scmp.eq.s32.totalorder %s25, 1
      %p148 = scmp.ne.s32.totalorder %s143, %s145
      %p149 = scmp.eq.s32.totalorder %s25, 0
      %p150 = por %p148, %p149
      %p151 = scmp.ne.s32.totalorder %s143, %s145
      %p152 = scmp.eq.s32.totalorder %s30, 1
      %p153 = por %p151, %p152
      %p154 = scmp.ne.s32.totalorder %s145, %s146
      %p155 = scmp.eq.s32.totalorder %s30, 0
      %p156 = por %p154, %p155
      %p157 = scmp.ne.s32.totalorder %s145, %s146
      %p158 = scmp.eq.s32.totalorder %s31, 1
      %p159 = por %p157, %p158
      %p161 = scmp.ne.s32.totalorder %s146, %s160
      %p162 = scmp.eq.s32.totalorder %s31, 0
      %p163 = por %p161, %p162
      %s165 = sadd.s32 %s164, 1
      %p168 = scmp.eq.s32.totalorder %s25, 1
      %p169 = scmp.ne.s32.totalorder %s164, %s166
      %p170 = scmp.eq.s32.totalorder %s25, 0
      %p171 = por %p169, %p170
      %p172 = scmp.ne.s32.totalorder %s164, %s166
      %p173 = scmp.eq.s32.totalorder %s30, 1
      %p174 = por %p172, %p173
      %p175 = scmp.ne.s32.totalorder %s166, %s167
      %p176 = scmp.eq.s32.totalorder %s30, 0
      %p177 = por %p175, %p176
      %p178 = scmp.ne.s32.totalorder %s166, %s167
      %p179 = scmp.eq.s32.totalorder %s31, 1
      %p180 = por %p178, %p179
      %p182 = scmp.ne.s32.totalorder %s167, %s181
      %p183 = scmp.eq.s32.totalorder %s31, 0
      %p184 = por %p182, %p183
      %s186 = sadd.s32 %s185, 1
      %p189 = scmp.eq.s32.totalorder %s25, 1
      %p190 = scmp.ne.s32.totalorder %s185, %s187
      %p191 = scmp.eq.s32.totalorder %s25, 0
      %p192 = por %p190, %p191
      %p193 = scmp.ne.s32.totalorder %s185, %s187
      %p194 = scmp.eq.s32.totalorder %s30, 1
      %p195 = por %p193, %p194
      %p196 = scmp.ne.s32.totalorder %s187, %s188
      %p197 = scmp.eq.s32.totalorder %s30, 0
      %p198 = por %p196, %p197
      %p199 = scmp.ne.s32.totalorder %s187, %s188
      %p200 = scmp.eq.s32.totalorder %s31, 1
      %p201 = por %p199, %p200
      %p203 = scmp.ne.s32.totalorder %s188, %s202
      %p204 = scmp.eq.s32.totalorder %s31, 0
      %p205 = por %p203, %p204
      %s207 = sadd.s32 %s206, 1
      %p210 = scmp.eq.s32.totalorder %s25, 1
      %p211 = scmp.ne.s32.totalorder %s206, %s208
      %p212 = scmp.eq.s32.totalorder %s25, 0
      %p213 = por %p211, %p212
      %p214 = scmp.ne.s32.totalorder %s206, %s208
      %p215 = scmp.eq.s32.totalorder %s30, 1
      %p216 = por %p214, %p215
      %p217 = scmp.ne.s32.totalorder %s208, %s209
      %p218 = scmp.eq.s32.totalorder %s30, 0
      %p219 = por %p217, %p218
      %p220 = scmp.ne.s32.totalorder %s208, %s209
      %p221 = scmp.eq.s32.totalorder %s31, 1
      %p222 = por %p220, %p221
      %p224 = scmp.ne.s32.totalorder %s209, %s223
      %p225 = scmp.eq.s32.totalorder %s31, 0
      %p226 = por %p224, %p225
      %s228 = sadd.s32 %s227, 1
      %p231 = scmp.eq.s32.totalorder %s25, 1
      %p232 = scmp.ne.s32.totalorder %s227, %s229
      %p233 = scmp.eq.s32.totalorder %s25, 0
      %p234 = por %p232, %p233
      %p235 = scmp.ne.s32.totalorder %s227, %s229
      %p236 = scmp.eq.s32.totalorder %s30, 1
      %p237 = por %p235, %p236
      %p238 = scmp.ne.s32.totalorder %s229, %s230
      %p239 = scmp.eq.s32.totalorder %s30, 0
      %p240 = por %p238, %p239
      %p241 = scmp.ne.s32.totalorder %s229, %s230
      %p242 = scmp.eq.s32.totalorder %s31, 1
      %p243 = por %p241, %p242
      %p245 = scmp.ne.s32.totalorder %s230, %s244
      %p246 = scmp.eq.s32.totalorder %s31, 0
      %p247 = por %p245, %p246
      %s249 = sadd.s32 %s248, 1
      %p252 = scmp.eq.s32.totalorder %s25, 1
      %p253 = scmp.ne.s32.totalorder %s248, %s250
      %p254 = scmp.eq.s32.totalorder %s25, 0
      %p255 = por %p253, %p254
      %p256 = scmp.ne.s32.totalorder %s248, %s250
      %p257 = scmp.eq.s32.totalorder %s30, 1
      %p258 = por %p256, %p257
      %p259 = scmp.ne.s32.totalorder %s250, %s251
      %p260 = scmp.eq.s32.totalorder %s30, 0
      %p261 = por %p259, %p260
      %p262 = scmp.ne.s32.totalorder %s250, %s251
      %p263 = scmp.eq.s32.totalorder %s31, 1
      %p264 = por %p262, %p263
      %p266 = scmp.ne.s32.totalorder %s251, %s265
      %p267 = scmp.eq.s32.totalorder %s31, 0
      %p268 = por %p266, %p267
      %s269 = ssub.s32 %s25, %s32
      %p270 = scmp.eq.s32.totalorder %s269, 0
      %s272 = sadd.s32 %s271, 1
      %s273 = scalar_select %p270, %s271, %s272
      %p276 = pneg %p270
      %p277 = scmp.eq.s32.totalorder %s25, 1
      %p278 = por %p276, %p277
      %p279 = scmp.ne.s32.totalorder %s271, %s274
      %p280 = scmp.eq.s32.totalorder %s25, 0
      %p281 = por %p279, %p280
      %p282 = scmp.ne.s32.totalorder %s271, %s274
      %p283 = scmp.eq.s32.totalorder %s30, 1
      %p284 = por %p282, %p283
      %p285 = scmp.ne.s32.totalorder %s274, %s275
      %p286 = scmp.eq.s32.totalorder %s30, 0
      %p287 = por %p285, %p286
      %p288 = scmp.ne.s32.totalorder %s274, %s275
      %p289 = scmp.eq.s32.totalorder %s31, 1
      %p290 = por %p288, %p289
      %p292 = scmp.ne.s32.totalorder %s275, %s291
      %p293 = scmp.eq.s32.totalorder %s31, 0
      %p294 = por %p292, %p293
      %s295 = ssub.s32 %s25, %s32
      %p296 = scmp.eq.s32.totalorder %s295, 0
      %s298 = sadd.s32 %s297, 1
      %s299 = scalar_select %p296, %s297, %s298
      %p302 = pneg %p296
      %p303 = scmp.eq.s32.totalorder %s25, 1
      %p304 = por %p302, %p303
      %p305 = scmp.ne.s32.totalorder %s297, %s300
      %p306 = scmp.eq.s32.totalorder %s25, 0
      %p307 = por %p305, %p306
      %p308 = scmp.ne.s32.totalorder %s297, %s300
      %p309 = scmp.eq.s32.totalorder %s30, 1
      %p310 = por %p308, %p309
      %p311 = scmp.ne.s32.totalorder %s300, %s301
      %p312 = scmp.eq.s32.totalorder %s30, 0
      %p313 = por %p311, %p312
      %p314 = scmp.ne.s32.totalorder %s300, %s301
      %p315 = scmp.eq.s32.totalorder %s31, 1
      %p316 = por %p314, %p315
      %p318 = scmp.ne.s32.totalorder %s301, %s317
      %p319 = scmp.eq.s32.totalorder %s31, 0
      %p320 = por %p318, %p319
      %p321 = scmp.le.s32.totalorder 1, %s25
      %p322 = scmp.lt.s32.totalorder %s25, 3
      %p323 = pnand %p321, %p322
      %p324 = pneg %p323
      // Predicated region
      $region9: #{lenet5_forward.1} parent=5 // pred_check
        _
      $region10: #{lenet5_forward.1} parent=5 // pred_check_branch
        %326 = sbr.rel (%p323) target = $region12
      $region11: #{lenet5_forward.1} parent=5 // pred_region
        %s327 = ssub.s32 %s25, 1
        // Predicated region
        $region13: #{lenet5_forward.1} parent=11 // pred_check
          %p328 = pneg %p72
        $region14: #{lenet5_forward.1} parent=11 // pred_check_branch
          %330 = sbr.rel (%p328) target = $region16
        $region15: #{lenet5_forward.1} parent=11 // pred_region
          _
        $region16: #{lenet5_forward.1} parent=11 // pred_fallthru
          _
        // Predicated region
        $region17: #{lenet5_forward.1} parent=11 // pred_check
          %p331 = pneg %p93
        $region18: #{lenet5_forward.1} parent=11 // pred_check_branch
          %333 = sbr.rel (%p331) target = $region20
        $region19: #{lenet5_forward.1} parent=11 // pred_region
          _
        $region20: #{lenet5_forward.1} parent=11 // pred_fallthru
          _
        // Predicated region
        $region21: #{lenet5_forward.1} parent=11 // pred_check
          %p334 = pneg %p114
        $region22: #{lenet5_forward.1} parent=11 // pred_check_branch
          %336 = sbr.rel (%p334) target = $region24
        $region23: #{lenet5_forward.1} parent=11 // pred_region
          _
        $region24: #{lenet5_forward.1} parent=11 // pred_fallthru
          _
        // Predicated region
        $region25: #{lenet5_forward.1} parent=11 // pred_check
          %p337 = pneg %p135
        $region26: #{lenet5_forward.1} parent=11 // pred_check_branch
          %339 = sbr.rel (%p337) target = $region28
        $region27: #{lenet5_forward.1} parent=11 // pred_region
          _
        $region28: #{lenet5_forward.1} parent=11 // pred_fallthru
          _
        // Predicated region
        $region29: #{lenet5_forward.1} parent=11 // pred_check
          %p340 = pneg %p156
        $region30: #{lenet5_forward.1} parent=11 // pred_check_branch
          %342 = sbr.rel (%p340) target = $region32
        $region31: #{lenet5_forward.1} parent=11 // pred_region
          _
        $region32: #{lenet5_forward.1} parent=11 // pred_fallthru
          _
        // Predicated region
        $region33: #{lenet5_forward.1} parent=11 // pred_check
          %p343 = pneg %p177
        $region34: #{lenet5_forward.1} parent=11 // pred_check_branch
          %345 = sbr.rel (%p343) target = $region36
        $region35: #{lenet5_forward.1} parent=11 // pred_region
          _
        $region36: #{lenet5_forward.1} parent=11 // pred_fallthru
          _
        // Predicated region
        $region37: #{lenet5_forward.1} parent=11 // pred_check
          %p346 = pneg %p198
        $region38: #{lenet5_forward.1} parent=11 // pred_check_branch
          %348 = sbr.rel (%p346) target = $region40
        $region39: #{lenet5_forward.1} parent=11 // pred_region
          _
        $region40: #{lenet5_forward.1} parent=11 // pred_fallthru
          _
        // Predicated region
        $region41: #{lenet5_forward.1} parent=11 // pred_check
          %p349 = pneg %p219
        $region42: #{lenet5_forward.1} parent=11 // pred_check_branch
          %351 = sbr.rel (%p349) target = $region44
        $region43: #{lenet5_forward.1} parent=11 // pred_region
          _
        $region44: #{lenet5_forward.1} parent=11 // pred_fallthru
          _
        // Predicated region
        $region45: #{lenet5_forward.1} parent=11 // pred_check
          %p352 = pneg %p240
        $region46: #{lenet5_forward.1} parent=11 // pred_check_branch
          %354 = sbr.rel (%p352) target = $region48
        $region47: #{lenet5_forward.1} parent=11 // pred_region
          _
        $region48: #{lenet5_forward.1} parent=11 // pred_fallthru
          _
        // Predicated region
        $region49: #{lenet5_forward.1} parent=11 // pred_check
          %p355 = pneg %p261
        $region50: #{lenet5_forward.1} parent=11 // pred_check_branch
          %357 = sbr.rel (%p355) target = $region52
        $region51: #{lenet5_forward.1} parent=11 // pred_region
          _
        $region52: #{lenet5_forward.1} parent=11 // pred_fallthru
          _
      $region12: #{lenet5_forward.1} parent=5 // pred_fallthru
        _
      %p358 = scmp.lt.s32.totalorder %s25, 2
      // Predicated region
      $region53: #{lenet5_forward.1} parent=5 // pred_check
        %p359 = pneg %p358
      $region54: #{lenet5_forward.1} parent=5 // pred_check_branch
        %361 = sbr.rel (%p359) target = $region56
      $region55: #{lenet5_forward.1} parent=5 // pred_region
        // Predicated region
        $region57: #{lenet5_forward.1} parent=55 // pred_check
          %p362 = pneg %p45
        $region58: #{lenet5_forward.1} parent=55 // pred_check_branch
          %364 = sbr.rel (%p362) target = $region60
        $region59: #{lenet5_forward.1} parent=55 // pred_region
          %p365 = scmp.lt.s32.totalorder %s25, 1
          %s366 = scalar_select %p365, %s25, 1
          %s367 = smul.addr %s366, 98
          %s368 = smul.addr %s367, 8
          %s369 = scalar_lea.vmem %s0, %s368
        $region60: #{lenet5_forward.1} parent=55 // pred_fallthru
          _
      $region56: #{lenet5_forward.1} parent=5 // pred_fallthru
        _
      %p370 = scmp.le.s32.totalorder 1, %s25
      %p371 = scmp.lt.s32.totalorder %s25, 3
      %p372 = pnand %p370, %p371
      %p373 = pneg %p372
      // Predicated region
      $region61: #{lenet5_forward.1} parent=5 // pred_check
        _
      $region62: #{lenet5_forward.1} parent=5 // pred_check_branch
        %375 = sbr.rel (%p372) target = $region64
      $region63: #{lenet5_forward.1} parent=5 // pred_region
        %s376 = ssub.s32 %s25, 1
        %p377 = scmp.lt.s32.totalorder %s30, 1
        %s378 = scalar_select %p377, %s30, 1
        %s379 = smul.addr %s378, 98
        %s380 = smul.addr %s379, 8
        %s381 = scalar_lea.vmem %s0, %s380
        %p382 = pneg %p51
        %p383 = pneg %p48
        %p384 = pneg %p72
        %p385 = pneg %p69
        %p386 = pneg %p93
        %p387 = pneg %p90
        %p388 = pneg %p114
        %p389 = pneg %p111
        %p390 = pneg %p135
        %p391 = pneg %p132
        %p392 = pneg %p156
        %p393 = pneg %p153
        %p394 = pneg %p177
        %p395 = pneg %p174
        %p396 = pneg %p198
        %p397 = pneg %p195
        %p398 = pneg %p219
        %p399 = pneg %p216
        %p400 = pneg %p240
        %p401 = pneg %p237
        %p402 = pneg %p261
        %p403 = pneg %p258
        %p404 = pneg %p287
        %p405 = pneg %p284
        %s406 = sand.u32 %s274, 1
        %s407 = scalar_lea.sflag [#allocation5], %s406
        %s408 = sand.u32 %s274, 1
        %s409 = scalar_lea.vmem [#allocation4], %s408
        %p410 = pneg %p313
        %p411 = pneg %p310
        %s412 = sand.u32 %s300, 1
        %s413 = scalar_lea.sflag [#allocation7], %s412
        %s414 = sand.u32 %s300, 1
        %s415 = scalar_lea.vmem [#allocation6], %s414
        %p416 = scmp.lt.s32.totalorder %s30, 1
        %s417 = scalar_select %p416, %s30, 1
        %s418 = smul.addr %s417, 98
        %s419 = smul.addr %s418, 8
        %s420 = scalar_lea.vmem %s0, %s419
        %v421 = vld [vmem:[%s420] sm:$0xff]
        %v422 = vld [vmem:[%s420 + $0x8] sm:$0xff]
        %v423 = vld [vmem:[%s420 + $0x10] sm:$0xff]
        %v424 = vld [vmem:[%s420 + $0x18] sm:$0xff]
        %v425 = vld [vmem:[%s420 + $0x20] sm:$0xff]
        %v426 = vld [vmem:[%s420 + $0x28] sm:$0xff]
        %v427 = vld [vmem:[%s420 + $0x30] sm:$0xff]
        %v428 = vld [vmem:[%s420 + $0x38] sm:$0xff]
        %v429 = vld [vmem:[%s420 + $0x40] sm:$0xff]
        %v430 = vld [vmem:[%s420 + $0x48] sm:$0xff]
        %v431 = vld [vmem:[%s420 + $0x50] sm:$0xff]
        %v432 = vld [vmem:[%s420 + $0x58] sm:$0xff]
        %v433 = vld [vmem:[%s420 + $0x60] sm:$0xff]
        %v434 = vld [vmem:[%s420 + $0x68] sm:$0xff]
        %v435 = vld [vmem:[%s420 + $0x70] sm:$0xff]
        %v436 = vld [vmem:[%s420 + $0x78] sm:$0xff]
        %v437 = vld [vmem:[%s420 + $0x80] sm:$0xff]
        %v438 = vld [vmem:[%s420 + $0x88] sm:$0xff]
        %v439 = vld [vmem:[%s420 + $0x90] sm:$0xff]
        %v440 = vld [vmem:[%s420 + $0x98] sm:$0xff]
        %v441 = vld [vmem:[%s420 + $0xa0] sm:$0xff]
        %v442 = vld [vmem:[%s420 + $0xa8] sm:$0xff]
        %v443 = vld [vmem:[%s420 + $0xb0] sm:$0xff]
        %v444 = vld [vmem:[%s420 + $0xb8] sm:$0xff]
        %v445 = vld [vmem:[%s420 + $0xc0] sm:$0xff]
        %v446 = vld [vmem:[%s420 + $0xc8] sm:$0xff]
        %v447 = vld [vmem:[%s420 + $0xd0] sm:$0xff]
        %v448 = vld [vmem:[%s420 + $0xd8] sm:$0xff]
        %v449 = vld [vmem:[%s420 + $0xe0] sm:$0xff]
        %v450 = vld [vmem:[%s420 + $0xe8] sm:$0xff]
        %v451 = vld [vmem:[%s420 + $0xf0] sm:$0xff]
        %v452 = vld [vmem:[%s420 + $0xf8] sm:$0xff]
        %v453 = vld [vmem:[%s420 + $0x100] sm:$0xff]
        %v454 = vld [vmem:[%s420 + $0x108] sm:$0xff]
        %v455 = vld [vmem:[%s420 + $0x110] sm:$0xff]
        %v456 = vld [vmem:[%s420 + $0x118] sm:$0xff]
        %v457 = vld [vmem:[%s420 + $0x120] sm:$0xff]
        %v458 = vld [vmem:[%s420 + $0x128] sm:$0xff]
        %v459 = vld [vmem:[%s420 + $0x130] sm:$0xff]
        %v460 = vld [vmem:[%s420 + $0x138] sm:$0xff]
        %v461 = vld [vmem:[%s420 + $0x140] sm:$0xff]
        %v462 = vld [vmem:[%s420 + $0x148] sm:$0xff]
        %v463 = vld [vmem:[%s420 + $0x150] sm:$0xff]
        %v464 = vld [vmem:[%s420 + $0x158] sm:$0xff]
        %v465 = vld [vmem:[%s420 + $0x160] sm:$0xff]
        %v466 = vld [vmem:[%s420 + $0x168] sm:$0xff]
        %v467 = vld [vmem:[%s420 + $0x170] sm:$0xff]
        %v468 = vld [vmem:[%s420 + $0x178] sm:$0xff]
        %v469 = vld [vmem:[%s420 + $0x180] sm:$0xff]
        %v470 = vld [vmem:[%s420 + $0x188] sm:$0xff]
        %v471 = vld [vmem:[%s420 + $0x190] sm:$0xff]
        %v472 = vld [vmem:[%s420 + $0x198] sm:$0xff]
        %v473 = vld [vmem:[%s420 + $0x1a0] sm:$0xff]
        %v474 = vld [vmem:[%s420 + $0x1a8] sm:$0xff]
        %v475 = vld [vmem:[%s420 + $0x1b0] sm:$0xff]
        %v476 = vld [vmem:[%s420 + $0x1b8] sm:$0xff]
        %v477 = vld [vmem:[%s420 + $0x1c0] sm:$0xff]
        %v478 = vld [vmem:[%s420 + $0x1c8] sm:$0xff]
        %v479 = vld [vmem:[%s420 + $0x1d0] sm:$0xff]
        %v480 = vld [vmem:[%s420 + $0x1d8] sm:$0xff]
        %v481 = vld [vmem:[%s420 + $0x1e0] sm:$0xff]
        %v482 = vld [vmem:[%s420 + $0x1e8] sm:$0xff]
        %v483 = vld [vmem:[%s420 + $0x1f0] sm:$0xff]
        %v484 = vld [vmem:[%s420 + $0x1f8] sm:$0xff]
        %v485 = vld [vmem:[%s420 + $0x200] sm:$0xff]
        %v486 = vld [vmem:[%s420 + $0x208] sm:$0xff]
        %v487 = vld [vmem:[%s420 + $0x210] sm:$0xff]
        %v488 = vld [vmem:[%s420 + $0x218] sm:$0xff]
        %v489 = vld [vmem:[%s420 + $0x220] sm:$0xff]
        %v490 = vld [vmem:[%s420 + $0x228] sm:$0xff]
        %v491 = vld [vmem:[%s420 + $0x230] sm:$0xff]
        %v492 = vld [vmem:[%s420 + $0x238] sm:$0xff]
        %v493 = vld [vmem:[%s420 + $0x240] sm:$0xff]
        %v494 = vld [vmem:[%s420 + $0x248] sm:$0xff]
        %v495 = vld [vmem:[%s420 + $0x250] sm:$0xff]
        %v496 = vld [vmem:[%s420 + $0x258] sm:$0xff]
        %v497 = vld [vmem:[%s420 + $0x260] sm:$0xff]
        %v498 = vld [vmem:[%s420 + $0x268] sm:$0xff]
        %v499 = vld [vmem:[%s420 + $0x270] sm:$0xff]
        %v500 = vld [vmem:[%s420 + $0x278] sm:$0xff]
        %v501 = vld [vmem:[%s420 + $0x280] sm:$0xff]
        %v502 = vld [vmem:[%s420 + $0x288] sm:$0xff]
        %v503 = vld [vmem:[%s420 + $0x290] sm:$0xff]
        %v504 = vld [vmem:[%s420 + $0x298] sm:$0xff]
        %v505 = vld [vmem:[%s420 + $0x2a0] sm:$0xff]
        %v506 = vld [vmem:[%s420 + $0x2a8] sm:$0xff]
        %v507 = vld [vmem:[%s420 + $0x2b0] sm:$0xff]
        %v508 = vld [vmem:[%s420 + $0x2b8] sm:$0xff]
        %v509 = vld [vmem:[%s420 + $0x2c0] sm:$0xff]
        %v510 = vld [vmem:[%s420 + $0x2c8] sm:$0xff]
        %v511 = vld [vmem:[%s420 + $0x2d0] sm:$0xff]
        %v512 = vld [vmem:[%s420 + $0x2d8] sm:$0xff]
        %v513 = vld [vmem:[%s420 + $0x2e0] sm:$0xff]
        %v514 = vld [vmem:[%s420 + $0x2e8] sm:$0xff]
        %v515 = vld [vmem:[%s420 + $0x2f0] sm:$0xff]
        %v516 = vld [vmem:[%s420 + $0x2f8] sm:$0xff]
        %v517 = vld [vmem:[%s420 + $0x300] sm:$0xff]
        %v518 = vld [vmem:[%s420 + $0x308] sm:$0xff]
        %v519 = vld [vmem:[%s1] sm:$0xff]
        %v520 = vld [vmem:[%s1 + $0x8] sm:$0xff]
        %v521 = vld [vmem:[%s1 + $0x10] sm:$0xff]
        %v522 = vld [vmem:[%s1 + $0x18] sm:$0xff]
        %v523 = vld [vmem:[%s1 + $0x20] sm:$0xff]
        %v524 = vld [vmem:[%s1 + $0x28] sm:$0xff]
        %v525 = vld [vmem:[%s1 + $0x30] sm:$0xff]
        %v526 = vld [vmem:[%s1 + $0x38] sm:$0xff]
        %v527 = vld [vmem:[%s1 + $0x40] sm:$0xff]
        %v528 = vld [vmem:[%s1 + $0x48] sm:$0xff]
        %v529 = vld [vmem:[%s2] sm:$0x1]
        %v531 = vlaneseq
        %v532 = vshrl.u32 %v531, 7
        %v533 = vsub.s32 0, %v532
        %v534 = vrot.slane %v529, %v533
        %vm536 = vcmask 654336
        %v538 = vsel %vm536, %v421, 0
        %v541 = vsel %vm536, %v422, 0
        %v544 = vsel %vm536, %v423, 0
        %v547 = vsel %vm536, %v424, 0
        %v550 = vsel %vm536, %v425, 0
        %v553 = vsel %vm536, %v426, 0
        %v556 = vsel %vm536, %v427, 0
        %v559 = vsel %vm536, %v428, 0
        %v562 = vsel %vm536, %v429, 0
        %v565 = vsel %vm536, %v430, 0
        %v568 = vsel %vm536, %v431, 0
        %v571 = vsel %vm536, %v432, 0
        %v574 = vsel %vm536, %v433, 0
        %v577 = vsel %vm536, %v434, 0
        %v580 = vsel %vm536, %v435, 0
        %v583 = vsel %vm536, %v436, 0
        %v586 = vsel %vm536, %v437, 0
        %v589 = vsel %vm536, %v438, 0
        %v592 = vsel %vm536, %v439, 0
        %v595 = vsel %vm536, %v440, 0
        %v598 = vsel %vm536, %v441, 0
        %v601 = vsel %vm536, %v442, 0
        %v604 = vsel %vm536, %v443, 0
        %v607 = vsel %vm536, %v444, 0
        %v610 = vsel %vm536, %v445, 0
        %v613 = vsel %vm536, %v446, 0
        %v616 = vsel %vm536, %v447, 0
        %v619 = vsel %vm536, %v448, 0
        %v622 = vsel %vm536, %v449, 0
        %v625 = vsel %vm536, %v450, 0
        %v628 = vsel %vm536, %v451, 0
        %v631 = vsel %vm536, %v452, 0
        %v634 = vsel %vm536, %v453, 0
        %v637 = vsel %vm536, %v454, 0
        %v640 = vsel %vm536, %v455, 0
        %v643 = vsel %vm536, %v456, 0
        %v646 = vsel %vm536, %v457, 0
        %v649 = vsel %vm536, %v458, 0
        %v652 = vsel %vm536, %v459, 0
        %v655 = vsel %vm536, %v460, 0
        %v658 = vsel %vm536, %v461, 0
        %v661 = vsel %vm536, %v462, 0
        %v664 = vsel %vm536, %v463, 0
        %v667 = vsel %vm536, %v464, 0
        %v670 = vsel %vm536, %v465, 0
        %v673 = vsel %vm536, %v466, 0
        %v676 = vsel %vm536, %v467, 0
        %v679 = vsel %vm536, %v468, 0
        %v682 = vsel %vm536, %v469, 0
        %v685 = vsel %vm536, %v470, 0
        %v688 = vsel %vm536, %v471, 0
        %v691 = vsel %vm536, %v472, 0
        %v694 = vsel %vm536, %v473, 0
        %v697 = vsel %vm536, %v474, 0
        %v700 = vsel %vm536, %v475, 0
        %v703 = vsel %vm536, %v476, 0
        %v706 = vsel %vm536, %v477, 0
        %v709 = vsel %vm536, %v478, 0
        %v712 = vsel %vm536, %v479, 0
        %v715 = vsel %vm536, %v480, 0
        %v718 = vsel %vm536, %v481, 0
        %v721 = vsel %vm536, %v482, 0
        %v724 = vsel %vm536, %v483, 0
        %v727 = vsel %vm536, %v484, 0
        %v730 = vsel %vm536, %v485, 0
        %v733 = vsel %vm536, %v486, 0
        %v736 = vsel %vm536, %v487, 0
        %v739 = vsel %vm536, %v488, 0
        %v742 = vsel %vm536, %v489, 0
        %v745 = vsel %vm536, %v490, 0
        %v748 = vsel %vm536, %v491, 0
        %v751 = vsel %vm536, %v492, 0
        %v754 = vsel %vm536, %v493, 0
        %v757 = vsel %vm536, %v494, 0
        %v760 = vsel %vm536, %v495, 0
        %v763 = vsel %vm536, %v496, 0
        %v766 = vsel %vm536, %v497, 0
        %v769 = vsel %vm536, %v498, 0
        %v772 = vsel %vm536, %v499, 0
        %v775 = vsel %vm536, %v500, 0
        %v778 = vsel %vm536, %v501, 0
        %v781 = vsel %vm536, %v502, 0
        %v784 = vsel %vm536, %v503, 0
        %v787 = vsel %vm536, %v504, 0
        %v790 = vsel %vm536, %v505, 0
        %v793 = vsel %vm536, %v506, 0
        %v796 = vsel %vm536, %v507, 0
        %v799 = vsel %vm536, %v508, 0
        %v802 = vsel %vm536, %v509, 0
        %v805 = vsel %vm536, %v510, 0
        %v808 = vsel %vm536, %v511, 0
        %v811 = vsel %vm536, %v512, 0
        %v814 = vsel %vm536, %v513, 0
        %v817 = vsel %vm536, %v514, 0
        %v820 = vsel %vm536, %v515, 0
        %v823 = vsel %vm536, %v516, 0
        %v826 = vsel %vm536, %v517, 0
        %v829 = vsel %vm536, %v518, 0
        %831 = vmatprep.subr.mxu0 0.0
        %832 = vmatpush1.msra.mxu0 %v519
        %833 = vmatprep.subr.mxu0 0.0
        %834 = vmatpush1.msra.mxu0 %v520
        %835 = vmatprep.subr.mxu0 0.0
        %836 = vmatpush1.msra.mxu0 %v521
        %837 = vmatprep.subr.mxu0 0.0
        %838 = vmatpush1.msra.mxu0 %v522
        %839 = vmatprep.subr.mxu0 0.0
        %840 = vmatpush1.msra.mxu0 %v523
        %841 = vmatprep.subr.mxu0 0.0
        %842 = vmatpush1.msra.mxu0 %v524
        %843 = vmatprep.subr.mxu0 0.0
        %844 = vmatpush1.msra.mxu0 %v525
        %845 = vmatprep.subr.mxu0 0.0
        %846 = vmatpush1.msra.mxu0 %v526
        %847 = vmatprep.subr.mxu0 0.0
        %848 = vmatpush1.msra.mxu0 %v527
        %849 = vmatprep.subr.mxu0 0.0
        %850 = vmatpush1.msra.mxu0 %v528
        %851 = vmatprep.subr.mxu0 0.0
        %852 = vmatpush1.msra.mxu0 0.0
        %853 = vmatprep.subr.mxu0 0.0
        %854 = vmatpush1.msra.mxu0 0.0
        %855 = vmatprep.subr.mxu0 0.0
        %856 = vmatpush1.msra.mxu0 0.0
        %857 = vmatprep.subr.mxu0 0.0
        %858 = vmatpush1.msra.mxu0 0.0
        %859 = vmatprep.subr.mxu0 0.0
        %860 = vmatpush1.msra.mxu0 0.0
        %861 = vmatprep.subr.mxu0 0.0
        %862 = vmatpush1.msra.mxu0 0.0
        %863 = vmatprep.subr.mxu0 0.0
        %864 = vmatpush1.msra.mxu0 0.0
        %865 = vmatprep.subr.mxu0 0.0
        %866 = vmatpush1.msra.mxu0 0.0
        %867 = vmatprep.subr.mxu0 0.0
        %868 = vmatpush1.msra.mxu0 0.0
        %869 = vmatprep.subr.mxu0 0.0
        %870 = vmatpush1.msra.mxu0 0.0
        %871 = vmatprep.subr.mxu0 0.0
        %872 = vmatpush1.msra.mxu0 0.0
        %873 = vmatprep.subr.mxu0 0.0
        %874 = vmatpush1.msra.mxu0 0.0
        %875 = vmatprep.subr.mxu0 0.0
        %876 = vmatpush1.msra.mxu0 0.0
        %877 = vmatprep.subr.mxu0 0.0
        %878 = vmatpush1.msra.mxu0 0.0
        %879 = vmatprep.subr.mxu0 0.0
        %880 = vmatpush1.msra.mxu0 0.0
        %881 = vmatprep.subr.mxu0 0.0
        %882 = vmatpush1.msra.mxu0 0.0
        %883 = vmatprep.subr.mxu0 0.0
        %884 = vmatpush1.msra.mxu0 0.0
        %885 = vmatprep.subr.mxu0 0.0
        %886 = vmatpush1.msra.mxu0 0.0
        %887 = vmatprep.subr.mxu0 0.0
        %888 = vmatpush1.msra.mxu0 0.0
        %889 = vmatprep.subr.mxu0 0.0
        %890 = vmatpush1.msra.mxu0 0.0
        %891 = vmatprep.subr.mxu0 0.0
        %892 = vmatpush1.msra.mxu0 0.0
        %893 = vmatprep.subr.mxu0 0.0
        %894 = vmatpush1.msra.mxu0 0.0
        %895 = vmatprep.mubr.f32.mxu0 0.0
        %896 = vmatmul.mubr.f32.gmra.mrb[0].mxu0 %v538
        %v897 = vpop.f32.mrb[0].mxu0
        %v898 = vadd.f32 %v534, %v897
        %v899 = vpop.f32.mrb[0].mxu0
        %900 = vmatprep.mubr.f32.mxu0 0.0
        %901 = vmatmul.mubr.f32.gmra.mrb[0].mxu0 %v541
        %v902 = vpop.f32.mrb[0].mxu0
        %v903 = vadd.f32 %v534, %v902
        %v904 = vpop.f32.mrb[0].mxu0
        %905 = vmatprep.mubr.f32.mxu0 0.0
        %906 = vmatmul.mubr.f32.gmra.mrb[0].mxu0 %v544
        %v907 = vpop.f32.mrb[0].mxu0
        %v908 = vadd.f32 %v534, %v907
        %v909 = vpop.f32.mrb[0].mxu0
        %910 = vmatprep.mubr.f32.mxu0 0.0
        %911 = vmatmul.mubr.f32.gmra.mrb[0].mxu0 %v547
        %v912 = vpop.f32.mrb[0].mxu0
        %v913 = vadd.f32 %v534, %v912
        %v914 = vpop.f32.mrb[0].mxu0
        %915 = vmatprep.mubr.f32.mxu0 0.0
        %916 = vmatmul.mubr.f32.gmra.mrb[0].mxu0 %v550
        %v917 = vpop.f32.mrb[0].mxu0
        %v918 = vadd.f32 %v534, %v917
        %v919 = vpop.f32.mrb[0].mxu0
        %920 = vmatprep.mubr.f32.mxu0 0.0
        %921 = vmatmul.mubr.f32.gmra.mrb[0].mxu0 %v553
        %v922 = vpop.f32.mrb[0].mxu0
        %v923 = vadd.f32 %v534, %v922
        %v924 = vpop.f32.mrb[0].mxu0
        %925 = vmatprep.mubr.f32.mxu0 0.0
        %926 = vmatmul.mubr.f32.gmra.mrb[0].mxu0 %v556
        %v927 = vpop.f32.mrb[0].mxu0
        %v928 = vadd.f32 %v534, %v927
        %v929 = vpop.f32.mrb[0].mxu0
        %930 = vmatprep.mubr.f32.mxu0 0.0
        %931 = vmatmul.mubr.f32.gmra.mrb[0].mxu0 %v559
        %v932 = vpop.f32.mrb[0].mxu0
        %v933 = vadd.f32 %v534, %v932
        %v934 = vpop.f32.mrb[0].mxu0
        %935 = vmatprep.mubr.f32.mxu0 0.0
        %936 = vmatmul.mubr.f32.gmra.mrb[0].mxu0 %v562
        %v937 = vpop.f32.mrb[0].mxu0
        %v938 = vadd.f32 %v534, %v937
        %v939 = vpop.f32.mrb[0].mxu0
        %940 = vmatprep.mubr.f32.mxu0 0.0
        %941 = vmatmul.mubr.f32.gmra.mrb[0].mxu0 %v565
        %v942 = vpop.f32.mrb[0].mxu0
        %v943 = vadd.f32 %v534, %v942
        %v944 = vpop.f32.mrb[0].mxu0
        %945 = vmatprep.mubr.f32.mxu0 0.0
        %946 = vmatmul.mubr.f32.gmra.mrb[0].mxu0 %v568
        %v947 = vpop.f32.mrb[0].mxu0
        %v948 = vadd.f32 %v534, %v947
        %v949 = vpop.f32.mrb[0].mxu0
        %950 = vmatprep.mubr.f32.mxu0 0.0
        %951 = vmatmul.mubr.f32.gmra.mrb[0].mxu0 %v571
        %v952 = vpop.f32.mrb[0].mxu0
        %v953 = vadd.f32 %v534, %v952
        %v954 = vpop.f32.mrb[0].mxu0
        %955 = vmatprep.mubr.f32.mxu0 0.0
        %956 = vmatmul.mubr.f32.gmra.mrb[0].mxu0 %v574
        %v957 = vpop.f32.mrb[0].mxu0
        %v958 = vadd.f32 %v534, %v957
        %v959 = vpop.f32.mrb[0].mxu0
        %960 = vmatprep.mubr.f32.mxu0 0.0
        %961 = vmatmul.mubr.f32.gmra.mrb[0].mxu0 %v577
        %v962 = vpop.f32.mrb[0].mxu0
        %v963 = vadd.f32 %v534, %v962
        %v964 = vpop.f32.mrb[0].mxu0
        %965 = vmatprep.mubr.f32.mxu0 0.0
        %966 = vmatmul.mubr.f32.gmra.mrb[0].mxu0 %v580
        %v967 = vpop.f32.mrb[0].mxu0
        %v968 = vadd.f32 %v534, %v967
        %v969 = vpop.f32.mrb[0].mxu0
        %970 = vmatprep.mubr.f32.mxu0 0.0
        %971 = vmatmul.mubr.f32.gmra.mrb[0].mxu0 %v583
        %v972 = vpop.f32.mrb[0].mxu0
        %v973 = vadd.f32 %v534, %v972
        %v974 = vpop.f32.mrb[0].mxu0
        %975 = vmatprep.mubr.f32.mxu0 0.0
        %976 = vmatmul.mubr.f32.gmra.mrb[0].mxu0 %v586
        %v977 = vpop.f32.mrb[0].mxu0
        %v978 = vadd.f32 %v534, %v977
        %v979 = vpop.f32.mrb[0].mxu0
        %980 = vmatprep.mubr.f32.mxu0 0.0
        %981 = vmatmul.mubr.f32.gmra.mrb[0].mxu0 %v589
        %v982 = vpop.f32.mrb[0].mxu0
        %v983 = vadd.f32 %v534, %v982
        %v984 = vpop.f32.mrb[0].mxu0
        %985 = vmatprep.mubr.f32.mxu0 0.0
        %986 = vmatmul.mubr.f32.gmra.mrb[0].mxu0 %v592
        %v987 = vpop.f32.mrb[0].mxu0
        %v988 = vadd.f32 %v534, %v987
        %v989 = vpop.f32.mrb[0].mxu0
        %990 = vmatprep.mubr.f32.mxu0 0.0
        %991 = vmatmul.mubr.f32.gmra.mrb[0].mxu0 %v595
        %v992 = vpop.f32.mrb[0].mxu0
        %v993 = vadd.f32 %v534, %v992
        %v994 = vpop.f32.mrb[0].mxu0
        %995 = vmatprep.mubr.f32.mxu0 0.0
        %996 = vmatmul.mubr.f32.gmra.mrb[0].mxu0 %v598
        %v997 = vpop.f32.mrb[0].mxu0
        %v998 = vadd.f32 %v534, %v997
        %v999 = vpop.f32.mrb[0].mxu0
        %1000 = vmatprep.mubr.f32.mxu0 0.0
        %1001 = vmatmul.mubr.f32.gmra.mrb[0].mxu0 %v601
        %v1002 = vpop.f32.mrb[0].mxu0
        %v1003 = vadd.f32 %v534, %v1002
        %v1004 = vpop.f32.mrb[0].mxu0
        %1005 = vmatprep.mubr.f32.mxu0 0.0
        %1006 = vmatmul.mubr.f32.gmra.mrb[0].mxu0 %v604
        %v1007 = vpop.f32.mrb[0].mxu0
        %v1008 = vadd.f32 %v534, %v1007
        %v1009 = vpop.f32.mrb[0].mxu0
        %1010 = vmatprep.mubr.f32.mxu0 0.0
        %1011 = vmatmul.mubr.f32.gmra.mrb[0].mxu0 %v607
        %v1012 = vpop.f32.mrb[0].mxu0
        %v1013 = vadd.f32 %v534, %v1012
        %v1014 = vpop.f32.mrb[0].mxu0
        %1015 = vmatprep.mubr.f32.mxu0 0.0
        %1016 = vmatmul.mubr.f32.gmra.mrb[0].mxu0 %v610
        %v1017 = vpop.f32.mrb[0].mxu0
        %v1018 = vadd.f32 %v534, %v1017
        %v1019 = vpop.f32.mrb[0].mxu0
        %1020 = vmatprep.mubr.f32.mxu0 0.0
        %1021 = vmatmul.mubr.f32.gmra.mrb[0].mxu0 %v613
        %v1022 = vpop.f32.mrb[0].mxu0
        %v1023 = vadd.f32 %v534, %v1022
        %v1024 = vpop.f32.mrb[0].mxu0
        %1025 = vmatprep.mubr.f32.mxu0 0.0
        %1026 = vmatmul.mubr.f32.gmra.mrb[0].mxu0 %v616
        %v1027 = vpop.f32.mrb[0].mxu0
        %v1028 = vadd.f32 %v534, %v1027
        %v1029 = vpop.f32.mrb[0].mxu0
        %1030 = vmatprep.mubr.f32.mxu0 0.0
        %1031 = vmatmul.mubr.f32.gmra.mrb[0].mxu0 %v619
        %v1032 = vpop.f32.mrb[0].mxu0
        %v1033 = vadd.f32 %v534, %v1032
        %v1034 = vpop.f32.mrb[0].mxu0
        %1035 = vmatprep.mubr.f32.mxu0 0.0
        %1036 = vmatmul.mubr.f32.gmra.mrb[0].mxu0 %v622
        %v1037 = vpop.f32.mrb[0].mxu0
        %v1038 = vadd.f32 %v534, %v1037
        %v1039 = vpop.f32.mrb[0].mxu0
        %1040 = vmatprep.mubr.f32.mxu0 0.0
        %1041 = vmatmul.mubr.f32.gmra.mrb[0].mxu0 %v625
        %v1042 = vpop.f32.mrb[0].mxu0
        %v1043 = vadd.f32 %v534, %v1042
        %v1044 = vpop.f32.mrb[0].mxu0
        %1045 = vmatprep.mubr.f32.mxu0 0.0
        %1046 = vmatmul.mubr.f32.gmra.mrb[0].mxu0 %v628
        %v1047 = vpop.f32.mrb[0].mxu0
        %v1048 = vadd.f32 %v534, %v1047
        %v1049 = vpop.f32.mrb[0].mxu0
        %1050 = vmatprep.mubr.f32.mxu0 0.0
        %1051 = vmatmul.mubr.f32.gmra.mrb[0].mxu0 %v631
        %v1052 = vpop.f32.mrb[0].mxu0
        %v1053 = vadd.f32 %v534, %v1052
        %v1054 = vpop.f32.mrb[0].mxu0
        %1055 = vmatprep.mubr.f32.mxu0 0.0
        %1056 = vmatmul.mubr.f32.gmra.mrb[0].mxu0 %v634
        %v1057 = vpop.f32.mrb[0].mxu0
        %v1058 = vadd.f32 %v534, %v1057
        %v1059 = vpop.f32.mrb[0].mxu0
        %1060 = vmatprep.mubr.f32.mxu0 0.0
        %1061 = vmatmul.mubr.f32.gmra.mrb[0].mxu0 %v637
        %v1062 = vpop.f32.mrb[0].mxu0
        %v1063 = vadd.f32 %v534, %v1062
        %v1064 = vpop.f32.mrb[0].mxu0
        %1065 = vmatprep.mubr.f32.mxu0 0.0
        %1066 = vmatmul.mubr.f32.gmra.mrb[0].mxu0 %v640
        %v1067 = vpop.f32.mrb[0].mxu0
        %v1068 = vadd.f32 %v534, %v1067
        %v1069 = vpop.f32.mrb[0].mxu0
        %1070 = vmatprep.mubr.f32.mxu0 0.0
        %1071 = vmatmul.mubr.f32.gmra.mrb[0].mxu0 %v643
        %v1072 = vpop.f32.mrb[0].mxu0
        %v1073 = vadd.f32 %v534, %v1072
        %v1074 = vpop.f32.mrb[0].mxu0
        %1075 = vmatprep.mubr.f32.mxu0 0.0
        %1076 = vmatmul.mubr.f32.gmra.mrb[0].mxu0 %v646
        %v1077 = vpop.f32.mrb[0].mxu0
        %v1078 = vadd.f32 %v534, %v1077
        %v1079 = vpop.f32.mrb[0].mxu0
        %1080 = vmatprep.mubr.f32.mxu0 0.0
        %1081 = vmatmul.mubr.f32.gmra.mrb[0].mxu0 %v649
        %v1082 = vpop.f32.mrb[0].mxu0
        %v1083 = vadd.f32 %v534, %v1082
        %v1084 = vpop.f32.mrb[0].mxu0
        %1085 = vmatprep.mubr.f32.mxu0 0.0
        %1086 = vmatmul.mubr.f32.gmra.mrb[0].mxu0 %v652
        %v1087 = vpop.f32.mrb[0].mxu0
        %v1088 = vadd.f32 %v534, %v1087
        %v1089 = vpop.f32.mrb[0].mxu0
        %1090 = vmatprep.mubr.f32.mxu0 0.0
        %1091 = vmatmul.mubr.f32.gmra.mrb[0].mxu0 %v655
        %v1092 = vpop.f32.mrb[0].mxu0
        %v1093 = vadd.f32 %v534, %v1092
        %v1094 = vpop.f32.mrb[0].mxu0
        %1095 = vmatprep.mubr.f32.mxu0 0.0
        %1096 = vmatmul.mubr.f32.gmra.mrb[0].mxu0 %v658
        %v1097 = vpop.f32.mrb[0].mxu0
        %v1098 = vadd.f32 %v534, %v1097
        %v1099 = vpop.f32.mrb[0].mxu0
        %1100 = vmatprep.mubr.f32.mxu0 0.0
        %1101 = vmatmul.mubr.f32.gmra.mrb[0].mxu0 %v661
        %v1102 = vpop.f32.mrb[0].mxu0
        %v1103 = vadd.f32 %v534, %v1102
        %v1104 = vpop.f32.mrb[0].mxu0
        %1105 = vmatprep.mubr.f32.mxu0 0.0
        %1106 = vmatmul.mubr.f32.gmra.mrb[0].mxu0 %v664
        %v1107 = vpop.f32.mrb[0].mxu0
        %v1108 = vadd.f32 %v534, %v1107
        %v1109 = vpop.f32.mrb[0].mxu0
        %1110 = vmatprep.mubr.f32.mxu0 0.0
        %1111 = vmatmul.mubr.f32.gmra.mrb[0].mxu0 %v667
        %v1112 = vpop.f32.mrb[0].mxu0
        %v1113 = vadd.f32 %v534, %v1112
        %v1114 = vpop.f32.mrb[0].mxu0
        %1115 = vmatprep.mubr.f32.mxu0 0.0
        %1116 = vmatmul.mubr.f32.gmra.mrb[0].mxu0 %v670
        %v1117 = vpop.f32.mrb[0].mxu0
        %v1118 = vadd.f32 %v534, %v1117
        %v1119 = vpop.f32.mrb[0].mxu0
        %1120 = vmatprep.mubr.f32.mxu0 0.0
        %1121 = vmatmul.mubr.f32.gmra.mrb[0].mxu0 %v673
        %v1122 = vpop.f32.mrb[0].mxu0
        %v1123 = vadd.f32 %v534, %v1122
        %v1124 = vpop.f32.mrb[0].mxu0
        %1125 = vmatprep.mubr.f32.mxu0 0.0
        %1126 = vmatmul.mubr.f32.gmra.mrb[0].mxu0 %v676
        %v1127 = vpop.f32.mrb[0].mxu0
        %v1128 = vadd.f32 %v534, %v1127
        %v1129 = vpop.f32.mrb[0].mxu0
        %1130 = vmatprep.mubr.f32.mxu0 0.0
        %1131 = vmatmul.mubr.f32.gmra.mrb[0].mxu0 %v679
        %v1132 = vpop.f32.mrb[0].mxu0
        %v1133 = vadd.f32 %v534, %v1132
        %v1134 = vpop.f32.mrb[0].mxu0
        %1135 = vmatprep.mubr.f32.mxu0 0.0
        %1136 = vmatmul.mubr.f32.gmra.mrb[0].mxu0 %v682
        %v1137 = vpop.f32.mrb[0].mxu0
        %v1138 = vadd.f32 %v534, %v1137
        %v1139 = vpop.f32.mrb[0].mxu0
        %1140 = vmatprep.mubr.f32.mxu0 0.0
        %1141 = vmatmul.mubr.f32.gmra.mrb[0].mxu0 %v685
        %v1142 = vpop.f32.mrb[0].mxu0
        %v1143 = vadd.f32 %v534, %v1142
        %v1144 = vpop.f32.mrb[0].mxu0
        %1145 = vmatprep.mubr.f32.mxu0 0.0
        %1146 = vmatmul.mubr.f32.gmra.mrb[0].mxu0 %v688
        %v1147 = vpop.f32.mrb[0].mxu0
        %v1148 = vadd.f32 %v534, %v1147
        %v1149 = vpop.f32.mrb[0].mxu0
        %1150 = vmatprep.mubr.f32.mxu0 0.0
        %1151 = vmatmul.mubr.f32.gmra.mrb[0].mxu0 %v691
        %v1152 = vpop.f32.mrb[0].mxu0
        %v1153 = vadd.f32 %v534, %v1152
        %v1154 = vpop.f32.mrb[0].mxu0
        %1155 = vmatprep.mubr.f32.mxu0 0.0
        %1156 = vmatmul.mubr.f32.gmra.mrb[0].mxu0 %v694
        %v1157 = vpop.f32.mrb[0].mxu0
        %v1158 = vadd.f32 %v534, %v1157
        %v1159 = vpop.f32.mrb[0].mxu0
        %1160 = vmatprep.mubr.f32.mxu0 0.0
        %1161 = vmatmul.mubr.f32.gmra.mrb[0].mxu0 %v697
        %v1162 = vpop.f32.mrb[0].mxu0
        %v1163 = vadd.f32 %v534, %v1162
        %v1164 = vpop.f32.mrb[0].mxu0
        %1165 = vmatprep.mubr.f32.mxu0 0.0
        %1166 = vmatmul.mubr.f32.gmra.mrb[0].mxu0 %v700
        %v1167 = vpop.f32.mrb[0].mxu0
        %v1168 = vadd.f32 %v534, %v1167
        %v1169 = vpop.f32.mrb[0].mxu0
        %1170 = vmatprep.mubr.f32.mxu0 0.0
        %1171 = vmatmul.mubr.f32.gmra.mrb[0].mxu0 %v703
        %v1172 = vpop.f32.mrb[0].mxu0
        %v1173 = vadd.f32 %v534, %v1172
        %v1174 = vpop.f32.mrb[0].mxu0
        %1175 = vmatprep.mubr.f32.mxu0 0.0
        %1176 = vmatmul.mubr.f32.gmra.mrb[0].mxu0 %v706
        %v1177 = vpop.f32.mrb[0].mxu0
        %v1178 = vadd.f32 %v534, %v1177
        %v1179 = vpop.f32.mrb[0].mxu0
        %1180 = vmatprep.mubr.f32.mxu0 0.0
        %1181 = vmatmul.mubr.f32.gmra.mrb[0].mxu0 %v709
        %v1182 = vpop.f32.mrb[0].mxu0
        %v1183 = vadd.f32 %v534, %v1182
        %v1184 = vpop.f32.mrb[0].mxu0
        %1185 = vmatprep.mubr.f32.mxu0 0.0
        %1186 = vmatmul.mubr.f32.gmra.mrb[0].mxu0 %v712
        %v1187 = vpop.f32.mrb[0].mxu0
        %v1188 = vadd.f32 %v534, %v1187
        %v1189 = vpop.f32.mrb[0].mxu0
        %1190 = vmatprep.mubr.f32.mxu0 0.0
        %1191 = vmatmul.mubr.f32.gmra.mrb[0].mxu0 %v715
        %v1192 = vpop.f32.mrb[0].mxu0
        %v1193 = vadd.f32 %v534, %v1192
        %v1194 = vpop.f32.mrb[0].mxu0
        %1195 = vmatprep.mubr.f32.mxu0 0.0
        %1196 = vmatmul.mubr.f32.gmra.mrb[0].mxu0 %v718
        %v1197 = vpop.f32.mrb[0].mxu0
        %v1198 = vadd.f32 %v534, %v1197
        %v1199 = vpop.f32.mrb[0].mxu0
        %1200 = vmatprep.mubr.f32.mxu0 0.0
        %1201 = vmatmul.mubr.f32.gmra.mrb[0].mxu0 %v721
        %v1202 = vpop.f32.mrb[0].mxu0
        %v1203 = vadd.f32 %v534, %v1202
        %v1204 = vpop.f32.mrb[0].mxu0
        %1205 = vmatprep.mubr.f32.mxu0 0.0
        %1206 = vmatmul.mubr.f32.gmra.mrb[0].mxu0 %v724
        %v1207 = vpop.f32.mrb[0].mxu0
        %v1208 = vadd.f32 %v534, %v1207
        %v1209 = vpop.f32.mrb[0].mxu0
        %1210 = vmatprep.mubr.f32.mxu0 0.0
        %1211 = vmatmul.mubr.f32.gmra.mrb[0].mxu0 %v727
        %v1212 = vpop.f32.mrb[0].mxu0
        %v1213 = vadd.f32 %v534, %v1212
        %v1214 = vpop.f32.mrb[0].mxu0
        %1215 = vmatprep.mubr.f32.mxu0 0.0
        %1216 = vmatmul.mubr.f32.gmra.mrb[0].mxu0 %v730
        %v1217 = vpop.f32.mrb[0].mxu0
        %v1218 = vadd.f32 %v534, %v1217
        %v1219 = vpop.f32.mrb[0].mxu0
        %1220 = vmatprep.mubr.f32.mxu0 0.0
        %1221 = vmatmul.mubr.f32.gmra.mrb[0].mxu0 %v733
        %v1222 = vpop.f32.mrb[0].mxu0
        %v1223 = vadd.f32 %v534, %v1222
        %v1224 = vpop.f32.mrb[0].mxu0
        %1225 = vmatprep.mubr.f32.mxu0 0.0
        %1226 = vmatmul.mubr.f32.gmra.mrb[0].mxu0 %v736
        %v1227 = vpop.f32.mrb[0].mxu0
        %v1228 = vadd.f32 %v534, %v1227
        %v1229 = vpop.f32.mrb[0].mxu0
        %1230 = vmatprep.mubr.f32.mxu0 0.0
        %1231 = vmatmul.mubr.f32.gmra.mrb[0].mxu0 %v739
        %v1232 = vpop.f32.mrb[0].mxu0
        %v1233 = vadd.f32 %v534, %v1232
        %v1234 = vpop.f32.mrb[0].mxu0
        %1235 = vmatprep.mubr.f32.mxu0 0.0
        %1236 = vmatmul.mubr.f32.gmra.mrb[0].mxu0 %v742
        %v1237 = vpop.f32.mrb[0].mxu0
        %v1238 = vadd.f32 %v534, %v1237
        %v1239 = vpop.f32.mrb[0].mxu0
        %1240 = vmatprep.mubr.f32.mxu0 0.0
        %1241 = vmatmul.mubr.f32.gmra.mrb[0].mxu0 %v745
        %v1242 = vpop.f32.mrb[0].mxu0
        %v1243 = vadd.f32 %v534, %v1242
        %v1244 = vpop.f32.mrb[0].mxu0
        %1245 = vmatprep.mubr.f32.mxu0 0.0
        %1246 = vmatmul.mubr.f32.gmra.mrb[0].mxu0 %v748
        %v1247 = vpop.f32.mrb[0].mxu0
        %v1248 = vadd.f32 %v534, %v1247
        %v1249 = vpop.f32.mrb[0].mxu0
        %1250 = vmatprep.mubr.f32.mxu0 0.0
        %1251 = vmatmul.mubr.f32.gmra.mrb[0].mxu0 %v751
        %v1252 = vpop.f32.mrb[0].mxu0
        %v1253 = vadd.f32 %v534, %v1252
        %v1254 = vpop.f32.mrb[0].mxu0
        %1255 = vmatprep.mubr.f32.mxu0 0.0
        %1256 = vmatmul.mubr.f32.gmra.mrb[0].mxu0 %v754
        %v1257 = vpop.f32.mrb[0].mxu0
        %v1258 = vadd.f32 %v534, %v1257
        %v1259 = vpop.f32.mrb[0].mxu0
        %1260 = vmatprep.mubr.f32.mxu0 0.0
        %1261 = vmatmul.mubr.f32.gmra.mrb[0].mxu0 %v757
        %v1262 = vpop.f32.mrb[0].mxu0
        %v1263 = vadd.f32 %v534, %v1262
        %v1264 = vpop.f32.mrb[0].mxu0
        %1265 = vmatprep.mubr.f32.mxu0 0.0
        %1266 = vmatmul.mubr.f32.gmra.mrb[0].mxu0 %v760
        %v1267 = vpop.f32.mrb[0].mxu0
        %v1268 = vadd.f32 %v534, %v1267
        %v1269 = vpop.f32.mrb[0].mxu0
        %1270 = vmatprep.mubr.f32.mxu0 0.0
        %1271 = vmatmul.mubr.f32.gmra.mrb[0].mxu0 %v763
        %v1272 = vpop.f32.mrb[0].mxu0
        %v1273 = vadd.f32 %v534, %v1272
        %v1274 = vpop.f32.mrb[0].mxu0
        %1275 = vmatprep.mubr.f32.mxu0 0.0
        %1276 = vmatmul.mubr.f32.gmra.mrb[0].mxu0 %v766
        %v1277 = vpop.f32.mrb[0].mxu0
        %v1278 = vadd.f32 %v534, %v1277
        %v1279 = vpop.f32.mrb[0].mxu0
        %1280 = vmatprep.mubr.f32.mxu0 0.0
        %1281 = vmatmul.mubr.f32.gmra.mrb[0].mxu0 %v769
        %v1282 = vpop.f32.mrb[0].mxu0
        %v1283 = vadd.f32 %v534, %v1282
        %v1284 = vpop.f32.mrb[0].mxu0
        %1285 = vmatprep.mubr.f32.mxu0 0.0
        %1286 = vmatmul.mubr.f32.gmra.mrb[0].mxu0 %v772
        %v1287 = vpop.f32.mrb[0].mxu0
        %v1288 = vadd.f32 %v534, %v1287
        %v1289 = vpop.f32.mrb[0].mxu0
        %1290 = vmatprep.mubr.f32.mxu0 0.0
        %1291 = vmatmul.mubr.f32.gmra.mrb[0].mxu0 %v775
        %v1292 = vpop.f32.mrb[0].mxu0
        %v1293 = vadd.f32 %v534, %v1292
        %v1294 = vpop.f32.mrb[0].mxu0
        %1295 = vmatprep.mubr.f32.mxu0 0.0
        %1296 = vmatmul.mubr.f32.gmra.mrb[0].mxu0 %v778
        %v1297 = vpop.f32.mrb[0].mxu0
        %v1298 = vadd.f32 %v534, %v1297
        %v1299 = vpop.f32.mrb[0].mxu0
        %1300 = vmatprep.mubr.f32.mxu0 0.0
        %1301 = vmatmul.mubr.f32.gmra.mrb[0].mxu0 %v781
        %v1302 = vpop.f32.mrb[0].mxu0
        %v1303 = vadd.f32 %v534, %v1302
        %v1304 = vpop.f32.mrb[0].mxu0
        %1305 = vmatprep.mubr.f32.mxu0 0.0
        %1306 = vmatmul.mubr.f32.gmra.mrb[0].mxu0 %v784
        %v1307 = vpop.f32.mrb[0].mxu0
        %v1308 = vadd.f32 %v534, %v1307
        %v1309 = vpop.f32.mrb[0].mxu0
        %1310 = vmatprep.mubr.f32.mxu0 0.0
        %1311 = vmatmul.mubr.f32.gmra.mrb[0].mxu0 %v787
        %v1312 = vpop.f32.mrb[0].mxu0
        %v1313 = vadd.f32 %v534, %v1312
        %v1314 = vpop.f32.mrb[0].mxu0
        %1315 = vmatprep.mubr.f32.mxu0 0.0
        %1316 = vmatmul.mubr.f32.gmra.mrb[0].mxu0 %v790
        %v1317 = vpop.f32.mrb[0].mxu0
        %v1318 = vadd.f32 %v534, %v1317
        %v1319 = vpop.f32.mrb[0].mxu0
        %1320 = vmatprep.mubr.f32.mxu0 0.0
        %1321 = vmatmul.mubr.f32.gmra.mrb[0].mxu0 %v793
        %v1322 = vpop.f32.mrb[0].mxu0
        %v1323 = vadd.f32 %v534, %v1322
        %v1324 = vpop.f32.mrb[0].mxu0
        %1325 = vmatprep.mubr.f32.mxu0 0.0
        %1326 = vmatmul.mubr.f32.gmra.mrb[0].mxu0 %v796
        %v1327 = vpop.f32.mrb[0].mxu0
        %v1328 = vadd.f32 %v534, %v1327
        %v1329 = vpop.f32.mrb[0].mxu0
        %1330 = vmatprep.mubr.f32.mxu0 0.0
        %1331 = vmatmul.mubr.f32.gmra.mrb[0].mxu0 %v799
        %v1332 = vpop.f32.mrb[0].mxu0
        %v1333 = vadd.f32 %v534, %v1332
        %v1334 = vpop.f32.mrb[0].mxu0
        %1335 = vmatprep.mubr.f32.mxu0 0.0
        %1336 = vmatmul.mubr.f32.gmra.mrb[0].mxu0 %v802
        %v1337 = vpop.f32.mrb[0].mxu0
        %v1338 = vadd.f32 %v534, %v1337
        %v1339 = vpop.f32.mrb[0].mxu0
        %1340 = vmatprep.mubr.f32.mxu0 0.0
        %1341 = vmatmul.mubr.f32.gmra.mrb[0].mxu0 %v805
        %v1342 = vpop.f32.mrb[0].mxu0
        %v1343 = vadd.f32 %v534, %v1342
        %v1344 = vpop.f32.mrb[0].mxu0
        %1345 = vmatprep.mubr.f32.mxu0 0.0
        %1346 = vmatmul.mubr.f32.gmra.mrb[0].mxu0 %v808
        %v1347 = vpop.f32.mrb[0].mxu0
        %v1348 = vadd.f32 %v534, %v1347
        %v1349 = vpop.f32.mrb[0].mxu0
        %1350 = vmatprep.mubr.f32.mxu0 0.0
        %1351 = vmatmul.mubr.f32.gmra.mrb[0].mxu0 %v811
        %v1352 = vpop.f32.mrb[0].mxu0
        %v1353 = vadd.f32 %v534, %v1352
        %v1354 = vpop.f32.mrb[0].mxu0
        %1355 = vmatprep.mubr.f32.mxu0 0.0
        %1356 = vmatmul.mubr.f32.gmra.mrb[0].mxu0 %v814
        %v1357 = vpop.f32.mrb[0].mxu0
        %v1358 = vadd.f32 %v534, %v1357
        %v1359 = vpop.f32.mrb[0].mxu0
        %1360 = vmatprep.mubr.f32.mxu0 0.0
        %1361 = vmatmul.mubr.f32.gmra.mrb[0].mxu0 %v817
        %v1362 = vpop.f32.mrb[0].mxu0
        %v1363 = vadd.f32 %v534, %v1362
        %v1364 = vpop.f32.mrb[0].mxu0
        %1365 = vmatprep.mubr.f32.mxu0 0.0
        %1366 = vmatmul.mubr.f32.gmra.mrb[0].mxu0 %v820
        %v1367 = vpop.f32.mrb[0].mxu0
        %v1368 = vadd.f32 %v534, %v1367
        %v1369 = vpop.f32.mrb[0].mxu0
        %1370 = vmatprep.mubr.f32.mxu0 0.0
        %1371 = vmatmul.mubr.f32.gmra.mrb[0].mxu0 %v823
        %v1372 = vpop.f32.mrb[0].mxu0
        %v1373 = vadd.f32 %v534, %v1372
        %v1374 = vpop.f32.mrb[0].mxu0
        %1375 = vmatprep.mubr.f32.mxu0 0.0
        %1376 = vmatmul.mubr.f32.gmra.mrb[0].mxu0 %v826
        %v1377 = vpop.f32.mrb[0].mxu0
        %v1378 = vadd.f32 %v534, %v1377
        %v1379 = vpop.f32.mrb[0].mxu0
        %1380 = vmatprep.mubr.f32.mxu0 0.0
        %1381 = vmatmul.mubr.f32.gmra.mrb[0].mxu0 %v829
        %v1382 = vpop.f32.mrb[0].mxu0
        %v1383 = vadd.f32 %v534, %v1382
        %v1384 = vpop.f32.mrb[0].mxu0
        %1385 = vdwg.mxu0
        %v1386 = vmax.f32 %v898, 0.0
        %v1387 = vmax.f32 %v903, 0.0
        %v1388 = vmax.f32 %v908, 0.0
        %v1389 = vmax.f32 %v913, 0.0
        %v1390 = vmax.f32 %v918, 0.0
        %v1391 = vmax.f32 %v923, 0.0
        %v1392 = vmax.f32 %v928, 0.0
        %v1393 = vmax.f32 %v933, 0.0
        %v1394 = vmax.f32 %v938, 0.0
        %v1395 = vmax.f32 %v943, 0.0
        %v1396 = vmax.f32 %v948, 0.0
        %v1397 = vmax.f32 %v953, 0.0
        %v1398 = vmax.f32 %v958, 0.0
        %v1399 = vmax.f32 %v963, 0.0
        %v1400 = vmax.f32 %v968, 0.0
        %v1401 = vmax.f32 %v973, 0.0
        %v1402 = vmax.f32 %v978, 0.0
        %v1403 = vmax.f32 %v983, 0.0
        %v1404 = vmax.f32 %v988, 0.0
        %v1405 = vmax.f32 %v993, 0.0
        %v1406 = vmax.f32 %v998, 0.0
        %v1407 = vmax.f32 %v1003, 0.0
        %v1408 = vmax.f32 %v1008, 0.0
        %v1409 = vmax.f32 %v1013, 0.0
        %v1410 = vmax.f32 %v1018, 0.0
        %v1411 = vmax.f32 %v1023, 0.0
        %v1412 = vmax.f32 %v1028, 0.0
        %v1413 = vmax.f32 %v1033, 0.0
        %v1414 = vmax.f32 %v1038, 0.0
        %v1415 = vmax.f32 %v1043, 0.0
        %v1416 = vmax.f32 %v1048, 0.0
        %v1417 = vmax.f32 %v1053, 0.0
        %v1418 = vmax.f32 %v1058, 0.0
        %v1419 = vmax.f32 %v1063, 0.0
        %v1420 = vmax.f32 %v1068, 0.0
        %v1421 = vmax.f32 %v1073, 0.0
        %v1422 = vmax.f32 %v1078, 0.0
        %v1423 = vmax.f32 %v1083, 0.0
        %v1424 = vmax.f32 %v1088, 0.0
        %v1425 = vmax.f32 %v1093, 0.0
        %v1426 = vmax.f32 %v1098, 0.0
        %v1427 = vmax.f32 %v1103, 0.0
        %v1428 = vmax.f32 %v1108, 0.0
        %v1429 = vmax.f32 %v1113, 0.0
        %v1430 = vmax.f32 %v1118, 0.0
        %v1431 = vmax.f32 %v1123, 0.0
        %v1432 = vmax.f32 %v1128, 0.0
        %v1433 = vmax.f32 %v1133, 0.0
        %v1434 = vmax.f32 %v1138, 0.0
        %v1435 = vmax.f32 %v1143, 0.0
        %v1436 = vmax.f32 %v1148, 0.0
        %v1437 = vmax.f32 %v1153, 0.0
        %v1438 = vmax.f32 %v1158, 0.0
        %v1439 = vmax.f32 %v1163, 0.0
        %v1440 = vmax.f32 %v1168, 0.0
        %v1441 = vmax.f32 %v1173, 0.0
        %v1442 = vmax.f32 %v1178, 0.0
        %v1443 = vmax.f32 %v1183, 0.0
        %v1444 = vmax.f32 %v1188, 0.0
        %v1445 = vmax.f32 %v1193, 0.0
        %v1446 = vmax.f32 %v1198, 0.0
        %v1447 = vmax.f32 %v1203, 0.0
        %v1448 = vmax.f32 %v1208, 0.0
        %v1449 = vmax.f32 %v1213, 0.0
        %v1450 = vmax.f32 %v1218, 0.0
        %v1451 = vmax.f32 %v1223, 0.0
        %v1452 = vmax.f32 %v1228, 0.0
        %v1453 = vmax.f32 %v1233, 0.0
        %v1454 = vmax.f32 %v1238, 0.0
        %v1455 = vmax.f32 %v1243, 0.0
        %v1456 = vmax.f32 %v1248, 0.0
        %v1457 = vmax.f32 %v1253, 0.0
        %v1458 = vmax.f32 %v1258, 0.0
        %v1459 = vmax.f32 %v1263, 0.0
        %v1460 = vmax.f32 %v1268, 0.0
        %v1461 = vmax.f32 %v1273, 0.0
        %v1462 = vmax.f32 %v1278, 0.0
        %v1463 = vmax.f32 %v1283, 0.0
        %v1464 = vmax.f32 %v1288, 0.0
        %v1465 = vmax.f32 %v1293, 0.0
        %v1466 = vmax.f32 %v1298, 0.0
        %v1467 = vmax.f32 %v1303, 0.0
        %v1468 = vmax.f32 %v1308, 0.0
        %v1469 = vmax.f32 %v1313, 0.0
        %v1470 = vmax.f32 %v1318, 0.0
        %v1471 = vmax.f32 %v1323, 0.0
        %v1472 = vmax.f32 %v1328, 0.0
        %v1473 = vmax.f32 %v1333, 0.0
        %v1474 = vmax.f32 %v1338, 0.0
        %v1475 = vmax.f32 %v1343, 0.0
        %v1476 = vmax.f32 %v1348, 0.0
        %v1477 = vmax.f32 %v1353, 0.0
        %v1478 = vmax.f32 %v1358, 0.0
        %v1479 = vmax.f32 %v1363, 0.0
        %v1480 = vmax.f32 %v1368, 0.0
        %v1481 = vmax.f32 %v1373, 0.0
        %v1482 = vmax.f32 %v1378, 0.0
        %v1483 = vmax.f32 %v1383, 0.0
        %vm1509 = vcmask 1043456
        %v1510 = vrot.slane %v1410, 4
        %v1511 = vrot.slane %v1411, 4
        %v1512 = vsel %vm1509, %v1510, %v1511
        %v1513 = vrot.slane %v1412, 4
        %v1514 = vsel %vm1509, %v1511, %v1513
        %v1515 = vrot.slane %v1413, 4
        %v1516 = vsel %vm1509, %v1513, %v1515
        %v1517 = vrot.slane %v1414, 4
        %v1518 = vsel %vm1509, %v1515, %v1517
        %v1519 = vrot.slane %v1415, 4
        %v1520 = vsel %vm1509, %v1517, %v1519
        %v1521 = vrot.slane %v1416, 4
        %v1522 = vsel %vm1509, %v1519, %v1521
        %v1523 = vrot.slane %v1417, 4
        %v1524 = vsel %vm1509, %v1521, %v1523
        %v1525 = vrot.slane %v1418, 4
        %v1526 = vsel %vm1509, %v1523, %v1525
        %v1527 = vrot.slane %v1419, 4
        %v1528 = vsel %vm1509, %v1525, %v1527
        %v1529 = vrot.slane %v1420, 4
        %v1530 = vsel %vm1509, %v1527, %v1529
        %v1531 = vrot.slane %v1421, 4
        %v1532 = vsel %vm1509, %v1529, %v1531
        %v1533 = vrot.slane %v1422, 4
        %v1534 = vsel %vm1509, %v1531, %v1533
        %v1535 = vrot.slane %v1423, 4
        %v1536 = vsel %vm1509, %v1533, %v1535
        %v1537 = vrot.slane %v1424, 4
        %v1538 = vsel %vm1509, %v1535, %v1537
        %v1539 = vrot.slane %v1425, 4
        %v1540 = vsel %vm1509, %v1537, %v1539
        %v1541 = vrot.slane %v1426, 4
        %v1542 = vsel %vm1509, %v1539, %v1541
        %v1543 = vrot.slane %v1427, 4
        %v1544 = vsel %vm1509, %v1541, %v1543
        %v1545 = vrot.slane %v1428, 4
        %v1546 = vsel %vm1509, %v1543, %v1545
        %v1547 = vrot.slane %v1429, 4
        %v1548 = vsel %vm1509, %v1545, %v1547
        %v1549 = vrot.slane %v1430, 4
        %v1550 = vsel %vm1509, %v1547, %v1549
        %v1551 = vrot.slane %v1431, 4
        %v1552 = vsel %vm1509, %v1549, %v1551
        %v1553 = vrot.slane %v1432, 4
        %v1554 = vsel %vm1509, %v1551, %v1553
        %v1555 = vrot.slane %v1433, 4
        %v1556 = vsel %vm1509, %v1553, %v1555
        %v1557 = vrot.slane %v1434, 4
        %v1558 = vsel %vm1509, %v1555, %v1557
        %v1584 = vmax.f32 %v1386, %v1512
        %v1585 = vmax.f32 %v1387, %v1514
        %v1586 = vmax.f32 %v1388, %v1516
        %v1587 = vmax.f32 %v1389, %v1518
        %v1588 = vmax.f32 %v1390, %v1520
        %v1589 = vmax.f32 %v1391, %v1522
        %v1590 = vmax.f32 %v1392, %v1524
        %v1591 = vmax.f32 %v1393, %v1526
        %v1592 = vmax.f32 %v1394, %v1528
        %v1593 = vmax.f32 %v1395, %v1530
        %v1594 = vmax.f32 %v1396, %v1532
        %v1595 = vmax.f32 %v1397, %v1534
        %v1596 = vmax.f32 %v1398, %v1536
        %v1597 = vmax.f32 %v1399, %v1538
        %v1598 = vmax.f32 %v1400, %v1540
        %v1599 = vmax.f32 %v1401, %v1542
        %v1600 = vmax.f32 %v1402, %v1544
        %v1601 = vmax.f32 %v1403, %v1546
        %v1602 = vmax.f32 %v1404, %v1548
        %v1603 = vmax.f32 %v1405, %v1550
        %v1604 = vmax.f32 %v1406, %v1552
        %v1605 = vmax.f32 %v1407, %v1554
        %v1606 = vmax.f32 %v1408, %v1556
        %v1607 = vmax.f32 %v1409, %v1558
        %v1608 = vmax.f32 %v1410, %v1557
        %v1634 = vrot.slane %v1459, 4
        %v1635 = vrot.slane %v1460, 4
        %v1636 = vsel %vm1509, %v1634, %v1635
        %v1637 = vrot.slane %v1461, 4
        %v1638 = vsel %vm1509, %v1635, %v1637
        %v1639 = vrot.slane %v1462, 4
        %v1640 = vsel %vm1509, %v1637, %v1639
        %v1641 = vrot.slane %v1463, 4
        %v1642 = vsel %vm1509, %v1639, %v1641
        %v1643 = vrot.slane %v1464, 4
        %v1644 = vsel %vm1509, %v1641, %v1643
        %v1645 = vrot.slane %v1465, 4
        %v1646 = vsel %vm1509, %v1643, %v1645
        %v1647 = vrot.slane %v1466, 4
        %v1648 = vsel %vm1509, %v1645, %v1647
        %v1649 = vrot.slane %v1467, 4
        %v1650 = vsel %vm1509, %v1647, %v1649
        %v1651 = vrot.slane %v1468, 4
        %v1652 = vsel %vm1509, %v1649, %v1651
        %v1653 = vrot.slane %v1469, 4
        %v1654 = vsel %vm1509, %v1651, %v1653
        %v1655 = vrot.slane %v1470, 4
        %v1656 = vsel %vm1509, %v1653, %v1655
        %v1657 = vrot.slane %v1471, 4
        %v1658 = vsel %vm1509, %v1655, %v1657
        %v1659 = vrot.slane %v1472, 4
        %v1660 = vsel %vm1509, %v1657, %v1659
        %v1661 = vrot.slane %v1473, 4
        %v1662 = vsel %vm1509, %v1659, %v1661
        %v1663 = vrot.slane %v1474, 4
        %v1664 = vsel %vm1509, %v1661, %v1663
        %v1665 = vrot.slane %v1475, 4
        %v1666 = vsel %vm1509, %v1663, %v1665
        %v1667 = vrot.slane %v1476, 4
        %v1668 = vsel %vm1509, %v1665, %v1667
        %v1669 = vrot.slane %v1477, 4
        %v1670 = vsel %vm1509, %v1667, %v1669
        %v1671 = vrot.slane %v1478, 4
        %v1672 = vsel %vm1509, %v1669, %v1671
        %v1673 = vrot.slane %v1479, 4
        %v1674 = vsel %vm1509, %v1671, %v1673
        %v1675 = vrot.slane %v1480, 4
        %v1676 = vsel %vm1509, %v1673, %v1675
        %v1677 = vrot.slane %v1481, 4
        %v1678 = vsel %vm1509, %v1675, %v1677
        %v1679 = vrot.slane %v1482, 4
        %v1680 = vsel %vm1509, %v1677, %v1679
        %v1681 = vrot.slane %v1483, 4
        %v1682 = vsel %vm1509, %v1679, %v1681
        %v1708 = vmax.f32 %v1435, %v1636
        %v1709 = vmax.f32 %v1436, %v1638
        %v1710 = vmax.f32 %v1437, %v1640
        %v1711 = vmax.f32 %v1438, %v1642
        %v1712 = vmax.f32 %v1439, %v1644
        %v1713 = vmax.f32 %v1440, %v1646
        %v1714 = vmax.f32 %v1441, %v1648
        %v1715 = vmax.f32 %v1442, %v1650
        %v1716 = vmax.f32 %v1443, %v1652
        %v1717 = vmax.f32 %v1444, %v1654
        %v1718 = vmax.f32 %v1445, %v1656
        %v1719 = vmax.f32 %v1446, %v1658
        %v1720 = vmax.f32 %v1447, %v1660
        %v1721 = vmax.f32 %v1448, %v1662
        %v1722 = vmax.f32 %v1449, %v1664
        %v1723 = vmax.f32 %v1450, %v1666
        %v1724 = vmax.f32 %v1451, %v1668
        %v1725 = vmax.f32 %v1452, %v1670
        %v1726 = vmax.f32 %v1453, %v1672
        %v1727 = vmax.f32 %v1454, %v1674
        %v1728 = vmax.f32 %v1455, %v1676
        %v1729 = vmax.f32 %v1456, %v1678
        %v1730 = vmax.f32 %v1457, %v1680
        %v1731 = vmax.f32 %v1458, %v1682
        %v1732 = vmax.f32 %v1459, %v1681
        %v1733 = vmax.f32 %v1584, %v1708
        %v1734 = vmax.f32 %v1585, %v1709
        %v1735 = vmax.f32 %v1586, %v1710
        %v1736 = vmax.f32 %v1587, %v1711
        %v1737 = vmax.f32 %v1588, %v1712
        %v1738 = vmax.f32 %v1589, %v1713
        %v1739 = vmax.f32 %v1590, %v1714
        %v1740 = vmax.f32 %v1591, %v1715
        %v1741 = vmax.f32 %v1592, %v1716
        %v1742 = vmax.f32 %v1593, %v1717
        %v1743 = vmax.f32 %v1594, %v1718
        %v1744 = vmax.f32 %v1595, %v1719
        %v1745 = vmax.f32 %v1596, %v1720
        %v1746 = vmax.f32 %v1597, %v1721
        %v1747 = vmax.f32 %v1598, %v1722
        %v1748 = vmax.f32 %v1599, %v1723
        %v1749 = vmax.f32 %v1600, %v1724
        %v1750 = vmax.f32 %v1601, %v1725
        %v1751 = vmax.f32 %v1602, %v1726
        %v1752 = vmax.f32 %v1603, %v1727
        %v1753 = vmax.f32 %v1604, %v1728
        %v1754 = vmax.f32 %v1605, %v1729
        %v1755 = vmax.f32 %v1606, %v1730
        %v1756 = vmax.f32 %v1607, %v1731
        %v1757 = vmax.f32 %v1608, %v1732
        %vm1758 = vcmask 64512
        %1759 = vst.msk [vmem:[#allocation2] sm:$0xff] %vm1758, %v1733
        %1760 = vst.msk [vmem:[#allocation2 + $0x10] sm:$0xff] %vm1758, %v1734
        %1761 = vst.msk [vmem:[#allocation2 + $0x20] sm:$0xff] %vm1758, %v1735
        %1762 = vst.msk [vmem:[#allocation2 + $0x30] sm:$0xff] %vm1758, %v1736
        %1763 = vst.msk [vmem:[#allocation2 + $0x40] sm:$0xff] %vm1758, %v1737
        %1764 = vst.msk [vmem:[#allocation2 + $0x50] sm:$0xff] %vm1758, %v1738
        %1765 = vst.msk [vmem:[#allocation2 + $0x60] sm:$0xff] %vm1758, %v1739
        %1766 = vst.msk [vmem:[#allocation2 + $0x70] sm:$0xff] %vm1758, %v1740
        %1767 = vst.msk [vmem:[#allocation2 + $0x80] sm:$0xff] %vm1758, %v1741
        %1768 = vst.msk [vmem:[#allocation2 + $0x90] sm:$0xff] %vm1758, %v1742
        %1769 = vst.msk [vmem:[#allocation2 + $0xa0] sm:$0xff] %vm1758, %v1743
        %1770 = vst.msk [vmem:[#allocation2 + $0xb0] sm:$0xff] %vm1758, %v1744
        %1771 = vst.msk [vmem:[#allocation2 + $0xc0] sm:$0xff] %vm1758, %v1745
        %1772 = vst.msk [vmem:[#allocation2 + $0xd0] sm:$0xff] %vm1758, %v1746
        %1773 = vst.msk [vmem:[#allocation2 + $0xe0] sm:$0xff] %vm1758, %v1747
        %1774 = vst.msk [vmem:[#allocation2 + $0xf0] sm:$0xff] %vm1758, %v1748
        %1775 = vst.msk [vmem:[#allocation2 + $0x100] sm:$0xff] %vm1758, %v1749
        %vm1794 = vcmask 1046528
        %v1795 = vrot.slane %v1733, 1
        %v1796 = vrot.slane %v1734, 1
        %v1797 = vsel %vm1794, %v1795, %v1796
        %v1798 = vrot.slane %v1735, 1
        %v1799 = vsel %vm1794, %v1796, %v1798
        %v1800 = vrot.slane %v1736, 1
        %v1801 = vsel %vm1794, %v1798, %v1800
        %v1802 = vrot.slane %v1737, 1
        %v1803 = vsel %vm1794, %v1800, %v1802
        %v1804 = vrot.slane %v1738, 1
        %v1805 = vsel %vm1794, %v1802, %v1804
        %v1806 = vrot.slane %v1739, 1
        %v1807 = vsel %vm1794, %v1804, %v1806
        %v1808 = vrot.slane %v1740, 1
        %v1809 = vsel %vm1794, %v1806, %v1808
        %v1810 = vrot.slane %v1741, 1
        %v1811 = vsel %vm1794, %v1808, %v1810
        %v1812 = vrot.slane %v1742, 1
        %v1813 = vsel %vm1794, %v1810, %v1812
        %v1814 = vrot.slane %v1743, 1
        %v1815 = vsel %vm1794, %v1812, %v1814
        %v1816 = vrot.slane %v1744, 1
        %v1817 = vsel %vm1794, %v1814, %v1816
        %v1818 = vrot.slane %v1745, 1
        %v1819 = vsel %vm1794, %v1816, %v1818
        %v1820 = vrot.slane %v1746, 1
        %v1821 = vsel %vm1794, %v1818, %v1820
        %v1822 = vrot.slane %v1747, 1
        %v1823 = vsel %vm1794, %v1820, %v1822
        %v1824 = vrot.slane %v1748, 1
        %v1825 = vsel %vm1794, %v1822, %v1824
        %v1826 = vrot.slane %v1749, 1
        %v1827 = vsel %vm1794, %v1824, %v1826
        %v1828 = vrot.slane %v1750, 1
        %v1829 = vsel %vm1794, %v1826, %v1828
        %1830 = vrot.lane.b32.xlu0 %v1797, 8
        %v1831 = vpop.permute.xlu0 %1830
        %1832 = vrot.lane.b32.xlu0 %v1799, 8
        %v1833 = vpop.permute.xlu0 %1832
        %1834 = vrot.lane.b32.xlu0 %v1801, 8
        %v1835 = vpop.permute.xlu0 %1834
        %1836 = vrot.lane.b32.xlu0 %v1803, 8
        %v1837 = vpop.permute.xlu0 %1836
        %1838 = vrot.lane.b32.xlu0 %v1805, 8
        %v1839 = vpop.permute.xlu0 %1838
        %1840 = vrot.lane.b32.xlu0 %v1807, 8
        %v1841 = vpop.permute.xlu0 %1840
        %1842 = vrot.lane.b32.xlu0 %v1809, 8
        %v1843 = vpop.permute.xlu0 %1842
        %1844 = vrot.lane.b32.xlu0 %v1811, 8
        %v1845 = vpop.permute.xlu0 %1844
        %1846 = vrot.lane.b32.xlu0 %v1813, 8
        %v1847 = vpop.permute.xlu0 %1846
        %1848 = vrot.lane.b32.xlu0 %v1815, 8
        %v1849 = vpop.permute.xlu0 %1848
        %1850 = vrot.lane.b32.xlu0 %v1817, 8
        %v1851 = vpop.permute.xlu0 %1850
        %1852 = vrot.lane.b32.xlu0 %v1819, 8
        %v1853 = vpop.permute.xlu0 %1852
        %1854 = vrot.lane.b32.xlu0 %v1821, 8
        %v1855 = vpop.permute.xlu0 %1854
        %1856 = vrot.lane.b32.xlu0 %v1823, 8
        %v1857 = vpop.permute.xlu0 %1856
        %1858 = vrot.lane.b32.xlu0 %v1825, 8
        %v1859 = vpop.permute.xlu0 %1858
        %1860 = vrot.lane.b32.xlu0 %v1827, 8
        %v1861 = vpop.permute.xlu0 %1860
        %1862 = vrot.lane.b32.xlu0 %v1829, 8
        %v1863 = vpop.permute.xlu0 %1862
        %vm1881 = vcmask 130112
        %1882 = vst.msk [vmem:[#allocation2] sm:$0xff] %vm1881, %v1831
        %1883 = vst.msk [vmem:[#allocation2 + $0x10] sm:$0xff] %vm1881, %v1833
        %1884 = vst.msk [vmem:[#allocation2 + $0x20] sm:$0xff] %vm1881, %v1835
        %1885 = vst.msk [vmem:[#allocation2 + $0x30] sm:$0xff] %vm1881, %v1837
        %1886 = vst.msk [vmem:[#allocation2 + $0x40] sm:$0xff] %vm1881, %v1839
        %1887 = vst.msk [vmem:[#allocation2 + $0x50] sm:$0xff] %vm1881, %v1841
        %1888 = vst.msk [vmem:[#allocation2 + $0x60] sm:$0xff] %vm1881, %v1843
        %1889 = vst.msk [vmem:[#allocation2 + $0x70] sm:$0xff] %vm1881, %v1845
        %1890 = vst.msk [vmem:[#allocation2 + $0x80] sm:$0xff] %vm1881, %v1847
        %1891 = vst.msk [vmem:[#allocation2 + $0x90] sm:$0xff] %vm1881, %v1849
        %1892 = vst.msk [vmem:[#allocation2 + $0xa0] sm:$0xff] %vm1881, %v1851
        %1893 = vst.msk [vmem:[#allocation2 + $0xb0] sm:$0xff] %vm1881, %v1853
        %1894 = vst.msk [vmem:[#allocation2 + $0xc0] sm:$0xff] %vm1881, %v1855
        %1895 = vst.msk [vmem:[#allocation2 + $0xd0] sm:$0xff] %vm1881, %v1857
        %1896 = vst.msk [vmem:[#allocation2 + $0xe0] sm:$0xff] %vm1881, %v1859
        %1897 = vst.msk [vmem:[#allocation2 + $0xf0] sm:$0xff] %vm1881, %v1861
        %1898 = vst.msk [vmem:[#allocation2 + $0x100] sm:$0xff] %vm1881, %v1863
        %vm1899 = vcmask 1045504
        %v1900 = vrot.slane %v1733, 2
        %v1901 = vrot.slane %v1734, 2
        %v1902 = vsel %vm1899, %v1900, %v1901
        %v1903 = vrot.slane %v1735, 2
        %v1904 = vsel %vm1899, %v1901, %v1903
        %v1905 = vrot.slane %v1736, 2
        %v1906 = vsel %vm1899, %v1903, %v1905
        %v1907 = vrot.slane %v1737, 2
        %v1908 = vsel %vm1899, %v1905, %v1907
        %v1909 = vrot.slane %v1738, 2
        %v1910 = vsel %vm1899, %v1907, %v1909
        %v1911 = vrot.slane %v1739, 2
        %v1912 = vsel %vm1899, %v1909, %v1911
        %v1913 = vrot.slane %v1740, 2
        %v1914 = vsel %vm1899, %v1911, %v1913
        %v1915 = vrot.slane %v1741, 2
        %v1916 = vsel %vm1899, %v1913, %v1915
        %v1917 = vrot.slane %v1742, 2
        %v1918 = vsel %vm1899, %v1915, %v1917
        %v1919 = vrot.slane %v1743, 2
        %v1920 = vsel %vm1899, %v1917, %v1919
        %v1921 = vrot.slane %v1744, 2
        %v1922 = vsel %vm1899, %v1919, %v1921
        %v1923 = vrot.slane %v1745, 2
        %v1924 = vsel %vm1899, %v1921, %v1923
        %v1925 = vrot.slane %v1746, 2
        %v1926 = vsel %vm1899, %v1923, %v1925
        %v1927 = vrot.slane %v1747, 2
        %v1928 = vsel %vm1899, %v1925, %v1927
        %v1929 = vrot.slane %v1748, 2
        %v1930 = vsel %vm1899, %v1927, %v1929
        %v1931 = vrot.slane %v1749, 2
        %v1932 = vsel %vm1899, %v1929, %v1931
        %v1933 = vrot.slane %v1750, 2
        %v1934 = vsel %vm1899, %v1931, %v1933
        %1935 = vrot.lane.b32.xlu0 %v1902, 16
        %v1936 = vpop.permute.xlu0 %1935
        %1937 = vrot.lane.b32.xlu0 %v1904, 16
        %v1938 = vpop.permute.xlu0 %1937
        %1939 = vrot.lane.b32.xlu0 %v1906, 16
        %v1940 = vpop.permute.xlu0 %1939
        %1941 = vrot.lane.b32.xlu0 %v1908, 16
        %v1942 = vpop.permute.xlu0 %1941
        %1943 = vrot.lane.b32.xlu0 %v1910, 16
        %v1944 = vpop.permute.xlu0 %1943
        %1945 = vrot.lane.b32.xlu0 %v1912, 16
        %v1946 = vpop.permute.xlu0 %1945
        %1947 = vrot.lane.b32.xlu0 %v1914, 16
        %v1948 = vpop.permute.xlu0 %1947
        %1949 = vrot.lane.b32.xlu0 %v1916, 16
        %v1950 = vpop.permute.xlu0 %1949
        %1951 = vrot.lane.b32.xlu0 %v1918, 16
        %v1952 = vpop.permute.xlu0 %1951
        %1953 = vrot.lane.b32.xlu0 %v1920, 16
        %v1954 = vpop.permute.xlu0 %1953
        %1955 = vrot.lane.b32.xlu0 %v1922, 16
        %v1956 = vpop.permute.xlu0 %1955
        %1957 = vrot.lane.b32.xlu0 %v1924, 16
        %v1958 = vpop.permute.xlu0 %1957
        %1959 = vrot.lane.b32.xlu0 %v1926, 16
        %v1960 = vpop.permute.xlu0 %1959
        %1961 = vrot.lane.b32.xlu0 %v1928, 16
        %v1962 = vpop.permute.xlu0 %1961
        %1963 = vrot.lane.b32.xlu0 %v1930, 16
        %v1964 = vpop.permute.xlu0 %1963
        %1965 = vrot.lane.b32.xlu0 %v1932, 16
        %v1966 = vpop.permute.xlu0 %1965
        %1967 = vrot.lane.b32.xlu0 %v1934, 16
        %v1968 = vpop.permute.xlu0 %1967
        %vm1986 = vcmask 195712
        %1987 = vst.msk [vmem:[#allocation2] sm:$0xff] %vm1986, %v1936
        %1988 = vst.msk [vmem:[#allocation2 + $0x10] sm:$0xff] %vm1986, %v1938
        %1989 = vst.msk [vmem:[#allocation2 + $0x20] sm:$0xff] %vm1986, %v1940
        %1990 = vst.msk [vmem:[#allocation2 + $0x30] sm:$0xff] %vm1986, %v1942
        %1991 = vst.msk [vmem:[#allocation2 + $0x40] sm:$0xff] %vm1986, %v1944
        %1992 = vst.msk [vmem:[#allocation2 + $0x50] sm:$0xff] %vm1986, %v1946
        %1993 = vst.msk [vmem:[#allocation2 + $0x60] sm:$0xff] %vm1986, %v1948
        %1994 = vst.msk [vmem:[#allocation2 + $0x70] sm:$0xff] %vm1986, %v1950
        %1995 = vst.msk [vmem:[#allocation2 + $0x80] sm:$0xff] %vm1986, %v1952
        %1996 = vst.msk [vmem:[#allocation2 + $0x90] sm:$0xff] %vm1986, %v1954
        %1997 = vst.msk [vmem:[#allocation2 + $0xa0] sm:$0xff] %vm1986, %v1956
        %1998 = vst.msk [vmem:[#allocation2 + $0xb0] sm:$0xff] %vm1986, %v1958
        %1999 = vst.msk [vmem:[#allocation2 + $0xc0] sm:$0xff] %vm1986, %v1960
        %2000 = vst.msk [vmem:[#allocation2 + $0xd0] sm:$0xff] %vm1986, %v1962
        %2001 = vst.msk [vmem:[#allocation2 + $0xe0] sm:$0xff] %vm1986, %v1964
        %2002 = vst.msk [vmem:[#allocation2 + $0xf0] sm:$0xff] %vm1986, %v1966
        %2003 = vst.msk [vmem:[#allocation2 + $0x100] sm:$0xff] %vm1986, %v1968
        %vm2004 = vcmask 1044480
        %v2005 = vrot.slane %v1733, 3
        %v2006 = vrot.slane %v1734, 3
        %v2007 = vsel %vm2004, %v2005, %v2006
        %v2008 = vrot.slane %v1735, 3
        %v2009 = vsel %vm2004, %v2006, %v2008
        %v2010 = vrot.slane %v1736, 3
        %v2011 = vsel %vm2004, %v2008, %v2010
        %v2012 = vrot.slane %v1737, 3
        %v2013 = vsel %vm2004, %v2010, %v2012
        %v2014 = vrot.slane %v1738, 3
        %v2015 = vsel %vm2004, %v2012, %v2014
        %v2016 = vrot.slane %v1739, 3
        %v2017 = vsel %vm2004, %v2014, %v2016
        %v2018 = vrot.slane %v1740, 3
        %v2019 = vsel %vm2004, %v2016, %v2018
        %v2020 = vrot.slane %v1741, 3
        %v2021 = vsel %vm2004, %v2018, %v2020
        %v2022 = vrot.slane %v1742, 3
        %v2023 = vsel %vm2004, %v2020, %v2022
        %v2024 = vrot.slane %v1743, 3
        %v2025 = vsel %vm2004, %v2022, %v2024
        %v2026 = vrot.slane %v1744, 3
        %v2027 = vsel %vm2004, %v2024, %v2026
        %v2028 = vrot.slane %v1745, 3
        %v2029 = vsel %vm2004, %v2026, %v2028
        %v2030 = vrot.slane %v1746, 3
        %v2031 = vsel %vm2004, %v2028, %v2030
        %v2032 = vrot.slane %v1747, 3
        %v2033 = vsel %vm2004, %v2030, %v2032
        %v2034 = vrot.slane %v1748, 3
        %v2035 = vsel %vm2004, %v2032, %v2034
        %v2036 = vrot.slane %v1749, 3
        %v2037 = vsel %vm2004, %v2034, %v2036
        %v2038 = vrot.slane %v1750, 3
        %v2039 = vsel %vm2004, %v2036, %v2038
        %2040 = vrot.lane.b32.xlu0 %v2007, 24
        %v2041 = vpop.permute.xlu0 %2040
        %2042 = vrot.lane.b32.xlu0 %v2009, 24
        %v2043 = vpop.permute.xlu0 %2042
        %2044 = vrot.lane.b32.xlu0 %v2011, 24
        %v2045 = vpop.permute.xlu0 %2044
        %2046 = vrot.lane.b32.xlu0 %v2013, 24
        %v2047 = vpop.permute.xlu0 %2046
        %2048 = vrot.lane.b32.xlu0 %v2015, 24
        %v2049 = vpop.permute.xlu0 %2048
        %2050 = vrot.lane.b32.xlu0 %v2017, 24
        %v2051 = vpop.permute.xlu0 %2050
        %2052 = vrot.lane.b32.xlu0 %v2019, 24
        %v2053 = vpop.permute.xlu0 %2052
        %2054 = vrot.lane.b32.xlu0 %v2021, 24
        %v2055 = vpop.permute.xlu0 %2054
        %2056 = vrot.lane.b32.xlu0 %v2023, 24
        %v2057 = vpop.permute.xlu0 %2056
        %2058 = vrot.lane.b32.xlu0 %v2025, 24
        %v2059 = vpop.permute.xlu0 %2058
        %2060 = vrot.lane.b32.xlu0 %v2027, 24
        %v2061 = vpop.permute.xlu0 %2060
        %2062 = vrot.lane.b32.xlu0 %v2029, 24
        %v2063 = vpop.permute.xlu0 %2062
        %2064 = vrot.lane.b32.xlu0 %v2031, 24
        %v2065 = vpop.permute.xlu0 %2064
        %2066 = vrot.lane.b32.xlu0 %v2033, 24
        %v2067 = vpop.permute.xlu0 %2066
        %2068 = vrot.lane.b32.xlu0 %v2035, 24
        %v2069 = vpop.permute.xlu0 %2068
        %2070 = vrot.lane.b32.xlu0 %v2037, 24
        %v2071 = vpop.permute.xlu0 %2070
        %2072 = vrot.lane.b32.xlu0 %v2039, 24
        %v2073 = vpop.permute.xlu0 %2072
        %vm2091 = vcmask 261312
        %2092 = vst.msk [vmem:[#allocation2] sm:$0xff] %vm2091, %v2041
        %2093 = vst.msk [vmem:[#allocation2 + $0x10] sm:$0xff] %vm2091, %v2043
        %2094 = vst.msk [vmem:[#allocation2 + $0x20] sm:$0xff] %vm2091, %v2045
        %2095 = vst.msk [vmem:[#allocation2 + $0x30] sm:$0xff] %vm2091, %v2047
        %2096 = vst.msk [vmem:[#allocation2 + $0x40] sm:$0xff] %vm2091, %v2049
        %2097 = vst.msk [vmem:[#allocation2 + $0x50] sm:$0xff] %vm2091, %v2051
        %2098 = vst.msk [vmem:[#allocation2 + $0x60] sm:$0xff] %vm2091, %v2053
        %2099 = vst.msk [vmem:[#allocation2 + $0x70] sm:$0xff] %vm2091, %v2055
        %2100 = vst.msk [vmem:[#allocation2 + $0x80] sm:$0xff] %vm2091, %v2057
        %2101 = vst.msk [vmem:[#allocation2 + $0x90] sm:$0xff] %vm2091, %v2059
        %2102 = vst.msk [vmem:[#allocation2 + $0xa0] sm:$0xff] %vm2091, %v2061
        %2103 = vst.msk [vmem:[#allocation2 + $0xb0] sm:$0xff] %vm2091, %v2063
        %2104 = vst.msk [vmem:[#allocation2 + $0xc0] sm:$0xff] %vm2091, %v2065
        %2105 = vst.msk [vmem:[#allocation2 + $0xd0] sm:$0xff] %vm2091, %v2067
        %2106 = vst.msk [vmem:[#allocation2 + $0xe0] sm:$0xff] %vm2091, %v2069
        %2107 = vst.msk [vmem:[#allocation2 + $0xf0] sm:$0xff] %vm2091, %v2071
        %2108 = vst.msk [vmem:[#allocation2 + $0x100] sm:$0xff] %vm2091, %v2073
        %v2109 = vrot.slane %v1733, 4
        %v2110 = vrot.slane %v1734, 4
        %v2111 = vsel %vm1509, %v2109, %v2110
        %v2112 = vrot.slane %v1735, 4
        %v2113 = vsel %vm1509, %v2110, %v2112
        %v2114 = vrot.slane %v1736, 4
        %v2115 = vsel %vm1509, %v2112, %v2114
        %v2116 = vrot.slane %v1737, 4
        %v2117 = vsel %vm1509, %v2114, %v2116
        %v2118 = vrot.slane %v1738, 4
        %v2119 = vsel %vm1509, %v2116, %v2118
        %v2120 = vrot.slane %v1739, 4
        %v2121 = vsel %vm1509, %v2118, %v2120
        %v2122 = vrot.slane %v1740, 4
        %v2123 = vsel %vm1509, %v2120, %v2122
        %v2124 = vrot.slane %v1741, 4
        %v2125 = vsel %vm1509, %v2122, %v2124
        %v2126 = vrot.slane %v1742, 4
        %v2127 = vsel %vm1509, %v2124, %v2126
        %v2128 = vrot.slane %v1743, 4
        %v2129 = vsel %vm1509, %v2126, %v2128
        %v2130 = vrot.slane %v1744, 4
        %v2131 = vsel %vm1509, %v2128, %v2130
        %v2132 = vrot.slane %v1745, 4
        %v2133 = vsel %vm1509, %v2130, %v2132
        %v2134 = vrot.slane %v1746, 4
        %v2135 = vsel %vm1509, %v2132, %v2134
        %v2136 = vrot.slane %v1747, 4
        %v2137 = vsel %vm1509, %v2134, %v2136
        %v2138 = vrot.slane %v1748, 4
        %v2139 = vsel %vm1509, %v2136, %v2138
        %v2140 = vrot.slane %v1749, 4
        %v2141 = vsel %vm1509, %v2138, %v2140
        %v2142 = vrot.slane %v1750, 4
        %v2143 = vsel %vm1509, %v2140, %v2142
        %2144 = vrot.lane.b32.xlu0 %v2111, 32
        %v2145 = vpop.permute.xlu0 %2144
        %2146 = vrot.lane.b32.xlu0 %v2113, 32
        %v2147 = vpop.permute.xlu0 %2146
        %2148 = vrot.lane.b32.xlu0 %v2115, 32
        %v2149 = vpop.permute.xlu0 %2148
        %2150 = vrot.lane.b32.xlu0 %v2117, 32
        %v2151 = vpop.permute.xlu0 %2150
        %2152 = vrot.lane.b32.xlu0 %v2119, 32
        %v2153 = vpop.permute.xlu0 %2152
        %2154 = vrot.lane.b32.xlu0 %v2121, 32
        %v2155 = vpop.permute.xlu0 %2154
        %2156 = vrot.lane.b32.xlu0 %v2123, 32
        %v2157 = vpop.permute.xlu0 %2156
        %2158 = vrot.lane.b32.xlu0 %v2125, 32
        %v2159 = vpop.permute.xlu0 %2158
        %2160 = vrot.lane.b32.xlu0 %v2127, 32
        %v2161 = vpop.permute.xlu0 %2160
        %2162 = vrot.lane.b32.xlu0 %v2129, 32
        %v2163 = vpop.permute.xlu0 %2162
        %2164 = vrot.lane.b32.xlu0 %v2131, 32
        %v2165 = vpop.permute.xlu0 %2164
        %2166 = vrot.lane.b32.xlu0 %v2133, 32
        %v2167 = vpop.permute.xlu0 %2166
        %2168 = vrot.lane.b32.xlu0 %v2135, 32
        %v2169 = vpop.permute.xlu0 %2168
        %2170 = vrot.lane.b32.xlu0 %v2137, 32
        %v2171 = vpop.permute.xlu0 %2170
        %2172 = vrot.lane.b32.xlu0 %v2139, 32
        %v2173 = vpop.permute.xlu0 %2172
        %2174 = vrot.lane.b32.xlu0 %v2141, 32
        %v2175 = vpop.permute.xlu0 %2174
        %2176 = vrot.lane.b32.xlu0 %v2143, 32
        %v2177 = vpop.permute.xlu0 %2176
        %vm2195 = vcmask 326912
        %2196 = vst.msk [vmem:[#allocation2] sm:$0xff] %vm2195, %v2145
        %2197 = vst.msk [vmem:[#allocation2 + $0x10] sm:$0xff] %vm2195, %v2147
        %2198 = vst.msk [vmem:[#allocation2 + $0x20] sm:$0xff] %vm2195, %v2149
        %2199 = vst.msk [vmem:[#allocation2 + $0x30] sm:$0xff] %vm2195, %v2151
        %2200 = vst.msk [vmem:[#allocation2 + $0x40] sm:$0xff] %vm2195, %v2153
        %2201 = vst.msk [vmem:[#allocation2 + $0x50] sm:$0xff] %vm2195, %v2155
        %2202 = vst.msk [vmem:[#allocation2 + $0x60] sm:$0xff] %vm2195, %v2157
        %2203 = vst.msk [vmem:[#allocation2 + $0x70] sm:$0xff] %vm2195, %v2159
        %2204 = vst.msk [vmem:[#allocation2 + $0x80] sm:$0xff] %vm2195, %v2161
        %2205 = vst.msk [vmem:[#allocation2 + $0x90] sm:$0xff] %vm2195, %v2163
        %2206 = vst.msk [vmem:[#allocation2 + $0xa0] sm:$0xff] %vm2195, %v2165
        %2207 = vst.msk [vmem:[#allocation2 + $0xb0] sm:$0xff] %vm2195, %v2167
        %2208 = vst.msk [vmem:[#allocation2 + $0xc0] sm:$0xff] %vm2195, %v2169
        %2209 = vst.msk [vmem:[#allocation2 + $0xd0] sm:$0xff] %vm2195, %v2171
        %2210 = vst.msk [vmem:[#allocation2 + $0xe0] sm:$0xff] %vm2195, %v2173
        %2211 = vst.msk [vmem:[#allocation2 + $0xf0] sm:$0xff] %vm2195, %v2175
        %2212 = vst.msk [vmem:[#allocation2 + $0x100] sm:$0xff] %vm2195, %v2177
        %vm2214 = vcmask 1041408
        %v2215 = vrot.slane %v1734, 6
        %v2216 = vrot.slane %v1735, 6
        %v2217 = vsel %vm2214, %v2215, %v2216
        %v2218 = vrot.slane %v1736, 6
        %v2219 = vsel %vm2214, %v2216, %v2218
        %v2220 = vrot.slane %v1737, 6
        %v2221 = vsel %vm2214, %v2218, %v2220
        %v2222 = vrot.slane %v1738, 6
        %v2223 = vsel %vm2214, %v2220, %v2222
        %v2224 = vrot.slane %v1739, 6
        %v2225 = vsel %vm2214, %v2222, %v2224
        %v2226 = vrot.slane %v1740, 6
        %v2227 = vsel %vm2214, %v2224, %v2226
        %v2228 = vrot.slane %v1741, 6
        %v2229 = vsel %vm2214, %v2226, %v2228
        %v2230 = vrot.slane %v1742, 6
        %v2231 = vsel %vm2214, %v2228, %v2230
        %v2232 = vrot.slane %v1743, 6
        %v2233 = vsel %vm2214, %v2230, %v2232
        %v2234 = vrot.slane %v1744, 6
        %v2235 = vsel %vm2214, %v2232, %v2234
        %v2236 = vrot.slane %v1745, 6
        %v2237 = vsel %vm2214, %v2234, %v2236
        %v2238 = vrot.slane %v1746, 6
        %v2239 = vsel %vm2214, %v2236, %v2238
        %v2240 = vrot.slane %v1747, 6
        %v2241 = vsel %vm2214, %v2238, %v2240
        %v2242 = vrot.slane %v1748, 6
        %v2243 = vsel %vm2214, %v2240, %v2242
        %v2244 = vrot.slane %v1749, 6
        %v2245 = vsel %vm2214, %v2242, %v2244
        %v2246 = vrot.slane %v1750, 6
        %v2247 = vsel %vm2214, %v2244, %v2246
        %v2248 = vrot.slane %v1751, 6
        %v2249 = vsel %vm2214, %v2246, %v2248
        %2250 = vrot.lane.b32.xlu0 %v2217, 40
        %v2251 = vpop.permute.xlu0 %2250
        %2252 = vrot.lane.b32.xlu0 %v2219, 40
        %v2253 = vpop.permute.xlu0 %2252
        %2254 = vrot.lane.b32.xlu0 %v2221, 40
        %v2255 = vpop.permute.xlu0 %2254
        %2256 = vrot.lane.b32.xlu0 %v2223, 40
        %v2257 = vpop.permute.xlu0 %2256
        %2258 = vrot.lane.b32.xlu0 %v2225, 40
        %v2259 = vpop.permute.xlu0 %2258
        %2260 = vrot.lane.b32.xlu0 %v2227, 40
        %v2261 = vpop.permute.xlu0 %2260
        %2262 = vrot.lane.b32.xlu0 %v2229, 40
        %v2263 = vpop.permute.xlu0 %2262
        %2264 = vrot.lane.b32.xlu0 %v2231, 40
        %v2265 = vpop.permute.xlu0 %2264
        %2266 = vrot.lane.b32.xlu0 %v2233, 40
        %v2267 = vpop.permute.xlu0 %2266
        %2268 = vrot.lane.b32.xlu0 %v2235, 40
        %v2269 = vpop.permute.xlu0 %2268
        %2270 = vrot.lane.b32.xlu0 %v2237, 40
        %v2271 = vpop.permute.xlu0 %2270
        %2272 = vrot.lane.b32.xlu0 %v2239, 40
        %v2273 = vpop.permute.xlu0 %2272
        %2274 = vrot.lane.b32.xlu0 %v2241, 40
        %v2275 = vpop.permute.xlu0 %2274
        %2276 = vrot.lane.b32.xlu0 %v2243, 40
        %v2277 = vpop.permute.xlu0 %2276
        %2278 = vrot.lane.b32.xlu0 %v2245, 40
        %v2279 = vpop.permute.xlu0 %2278
        %2280 = vrot.lane.b32.xlu0 %v2247, 40
        %v2281 = vpop.permute.xlu0 %2280
        %2282 = vrot.lane.b32.xlu0 %v2249, 40
        %v2283 = vpop.permute.xlu0 %2282
        %vm2301 = vcmask 392512
        %2302 = vst.msk [vmem:[#allocation2] sm:$0xff] %vm2301, %v2251
        %2303 = vst.msk [vmem:[#allocation2 + $0x10] sm:$0xff] %vm2301, %v2253
        %2304 = vst.msk [vmem:[#allocation2 + $0x20] sm:$0xff] %vm2301, %v2255
        %2305 = vst.msk [vmem:[#allocation2 + $0x30] sm:$0xff] %vm2301, %v2257
        %2306 = vst.msk [vmem:[#allocation2 + $0x40] sm:$0xff] %vm2301, %v2259
        %2307 = vst.msk [vmem:[#allocation2 + $0x50] sm:$0xff] %vm2301, %v2261
        %2308 = vst.msk [vmem:[#allocation2 + $0x60] sm:$0xff] %vm2301, %v2263
        %2309 = vst.msk [vmem:[#allocation2 + $0x70] sm:$0xff] %vm2301, %v2265
        %2310 = vst.msk [vmem:[#allocation2 + $0x80] sm:$0xff] %vm2301, %v2267
        %2311 = vst.msk [vmem:[#allocation2 + $0x90] sm:$0xff] %vm2301, %v2269
        %2312 = vst.msk [vmem:[#allocation2 + $0xa0] sm:$0xff] %vm2301, %v2271
        %2313 = vst.msk [vmem:[#allocation2 + $0xb0] sm:$0xff] %vm2301, %v2273
        %2314 = vst.msk [vmem:[#allocation2 + $0xc0] sm:$0xff] %vm2301, %v2275
        %2315 = vst.msk [vmem:[#allocation2 + $0xd0] sm:$0xff] %vm2301, %v2277
        %2316 = vst.msk [vmem:[#allocation2 + $0xe0] sm:$0xff] %vm2301, %v2279
        %2317 = vst.msk [vmem:[#allocation2 + $0xf0] sm:$0xff] %vm2301, %v2281
        %2318 = vst.msk [vmem:[#allocation2 + $0x100] sm:$0xff] %vm2301, %v2283
        %vm2319 = vcmask 1040384
        %v2320 = vrot.slane %v1734, 7
        %v2321 = vrot.slane %v1735, 7
        %v2322 = vsel %vm2319, %v2320, %v2321
        %v2323 = vrot.slane %v1736, 7
        %v2324 = vsel %vm2319, %v2321, %v2323
        %v2325 = vrot.slane %v1737, 7
        %v2326 = vsel %vm2319, %v2323, %v2325
        %v2327 = vrot.slane %v1738, 7
        %v2328 = vsel %vm2319, %v2325, %v2327
        %v2329 = vrot.slane %v1739, 7
        %v2330 = vsel %vm2319, %v2327, %v2329
        %v2331 = vrot.slane %v1740, 7
        %v2332 = vsel %vm2319, %v2329, %v2331
        %v2333 = vrot.slane %v1741, 7
        %v2334 = vsel %vm2319, %v2331, %v2333
        %v2335 = vrot.slane %v1742, 7
        %v2336 = vsel %vm2319, %v2333, %v2335
        %v2337 = vrot.slane %v1743, 7
        %v2338 = vsel %vm2319, %v2335, %v2337
        %v2339 = vrot.slane %v1744, 7
        %v2340 = vsel %vm2319, %v2337, %v2339
        %v2341 = vrot.slane %v1745, 7
        %v2342 = vsel %vm2319, %v2339, %v2341
        %v2343 = vrot.slane %v1746, 7
        %v2344 = vsel %vm2319, %v2341, %v2343
        %v2345 = vrot.slane %v1747, 7
        %v2346 = vsel %vm2319, %v2343, %v2345
        %v2347 = vrot.slane %v1748, 7
        %v2348 = vsel %vm2319, %v2345, %v2347
        %v2349 = vrot.slane %v1749, 7
        %v2350 = vsel %vm2319, %v2347, %v2349
        %v2351 = vrot.slane %v1750, 7
        %v2352 = vsel %vm2319, %v2349, %v2351
        %v2353 = vrot.slane %v1751, 7
        %v2354 = vsel %vm2319, %v2351, %v2353
        %2355 = vrot.lane.b32.xlu0 %v2322, 48
        %v2356 = vpop.permute.xlu0 %2355
        %2357 = vrot.lane.b32.xlu0 %v2324, 48
        %v2358 = vpop.permute.xlu0 %2357
        %2359 = vrot.lane.b32.xlu0 %v2326, 48
        %v2360 = vpop.permute.xlu0 %2359
        %2361 = vrot.lane.b32.xlu0 %v2328, 48
        %v2362 = vpop.permute.xlu0 %2361
        %2363 = vrot.lane.b32.xlu0 %v2330, 48
        %v2364 = vpop.permute.xlu0 %2363
        %2365 = vrot.lane.b32.xlu0 %v2332, 48
        %v2366 = vpop.permute.xlu0 %2365
        %2367 = vrot.lane.b32.xlu0 %v2334, 48
        %v2368 = vpop.permute.xlu0 %2367
        %2369 = vrot.lane.b32.xlu0 %v2336, 48
        %v2370 = vpop.permute.xlu0 %2369
        %2371 = vrot.lane.b32.xlu0 %v2338, 48
        %v2372 = vpop.permute.xlu0 %2371
        %2373 = vrot.lane.b32.xlu0 %v2340, 48
        %v2374 = vpop.permute.xlu0 %2373
        %2375 = vrot.lane.b32.xlu0 %v2342, 48
        %v2376 = vpop.permute.xlu0 %2375
        %2377 = vrot.lane.b32.xlu0 %v2344, 48
        %v2378 = vpop.permute.xlu0 %2377
        %2379 = vrot.lane.b32.xlu0 %v2346, 48
        %v2380 = vpop.permute.xlu0 %2379
        %2381 = vrot.lane.b32.xlu0 %v2348, 48
        %v2382 = vpop.permute.xlu0 %2381
        %2383 = vrot.lane.b32.xlu0 %v2350, 48
        %v2384 = vpop.permute.xlu0 %2383
        %2385 = vrot.lane.b32.xlu0 %v2352, 48
        %v2386 = vpop.permute.xlu0 %2385
        %2387 = vrot.lane.b32.xlu0 %v2354, 48
        %v2388 = vpop.permute.xlu0 %2387
        %vm2406 = vcmask 458112
        %2407 = vst.msk [vmem:[#allocation2] sm:$0xff] %vm2406, %v2356
        %2408 = vst.msk [vmem:[#allocation2 + $0x10] sm:$0xff] %vm2406, %v2358
        %2409 = vst.msk [vmem:[#allocation2 + $0x20] sm:$0xff] %vm2406, %v2360
        %2410 = vst.msk [vmem:[#allocation2 + $0x30] sm:$0xff] %vm2406, %v2362
        %2411 = vst.msk [vmem:[#allocation2 + $0x40] sm:$0xff] %vm2406, %v2364
        %2412 = vst.msk [vmem:[#allocation2 + $0x50] sm:$0xff] %vm2406, %v2366
        %2413 = vst.msk [vmem:[#allocation2 + $0x60] sm:$0xff] %vm2406, %v2368
        %2414 = vst.msk [vmem:[#allocation2 + $0x70] sm:$0xff] %vm2406, %v2370
        %2415 = vst.msk [vmem:[#allocation2 + $0x80] sm:$0xff] %vm2406, %v2372
        %2416 = vst.msk [vmem:[#allocation2 + $0x90] sm:$0xff] %vm2406, %v2374
        %2417 = vst.msk [vmem:[#allocation2 + $0xa0] sm:$0xff] %vm2406, %v2376
        %2418 = vst.msk [vmem:[#allocation2 + $0xb0] sm:$0xff] %vm2406, %v2378
        %2419 = vst.msk [vmem:[#allocation2 + $0xc0] sm:$0xff] %vm2406, %v2380
        %2420 = vst.msk [vmem:[#allocation2 + $0xd0] sm:$0xff] %vm2406, %v2382
        %2421 = vst.msk [vmem:[#allocation2 + $0xe0] sm:$0xff] %vm2406, %v2384
        %2422 = vst.msk [vmem:[#allocation2 + $0xf0] sm:$0xff] %vm2406, %v2386
        %2423 = vst.msk [vmem:[#allocation2 + $0x100] sm:$0xff] %vm2406, %v2388
        %2424 = vrot.lane.b32.xlu0 %v1735, 56
        %v2425 = vpop.permute.xlu0 %2424
        %2426 = vrot.lane.b32.xlu0 %v1736, 56
        %v2427 = vpop.permute.xlu0 %2426
        %2428 = vrot.lane.b32.xlu0 %v1737, 56
        %v2429 = vpop.permute.xlu0 %2428
        %2430 = vrot.lane.b32.xlu0 %v1738, 56
        %v2431 = vpop.permute.xlu0 %2430
        %2432 = vrot.lane.b32.xlu0 %v1739, 56
        %v2433 = vpop.permute.xlu0 %2432
        %2434 = vrot.lane.b32.xlu0 %v1740, 56
        %v2435 = vpop.permute.xlu0 %2434
        %2436 = vrot.lane.b32.xlu0 %v1741, 56
        %v2437 = vpop.permute.xlu0 %2436
        %2438 = vrot.lane.b32.xlu0 %v1742, 56
        %v2439 = vpop.permute.xlu0 %2438
        %2440 = vrot.lane.b32.xlu0 %v1743, 56
        %v2441 = vpop.permute.xlu0 %2440
        %2442 = vrot.lane.b32.xlu0 %v1744, 56
        %v2443 = vpop.permute.xlu0 %2442
        %2444 = vrot.lane.b32.xlu0 %v1745, 56
        %v2445 = vpop.permute.xlu0 %2444
        %2446 = vrot.lane.b32.xlu0 %v1746, 56
        %v2447 = vpop.permute.xlu0 %2446
        %2448 = vrot.lane.b32.xlu0 %v1747, 56
        %v2449 = vpop.permute.xlu0 %2448
        %2450 = vrot.lane.b32.xlu0 %v1748, 56
        %v2451 = vpop.permute.xlu0 %2450
        %2452 = vrot.lane.b32.xlu0 %v1749, 56
        %v2453 = vpop.permute.xlu0 %2452
        %2454 = vrot.lane.b32.xlu0 %v1750, 56
        %v2455 = vpop.permute.xlu0 %2454
        %2456 = vrot.lane.b32.xlu0 %v1751, 56
        %v2457 = vpop.permute.xlu0 %2456
        %vm2475 = vcmask 523712
        %2476 = vst.msk [vmem:[#allocation2] sm:$0xff] %vm2475, %v2425
        %2477 = vst.msk [vmem:[#allocation2 + $0x10] sm:$0xff] %vm2475, %v2427
        %2478 = vst.msk [vmem:[#allocation2 + $0x20] sm:$0xff] %vm2475, %v2429
        %2479 = vst.msk [vmem:[#allocation2 + $0x30] sm:$0xff] %vm2475, %v2431
        %2480 = vst.msk [vmem:[#allocation2 + $0x40] sm:$0xff] %vm2475, %v2433
        %2481 = vst.msk [vmem:[#allocation2 + $0x50] sm:$0xff] %vm2475, %v2435
        %2482 = vst.msk [vmem:[#allocation2 + $0x60] sm:$0xff] %vm2475, %v2437
        %2483 = vst.msk [vmem:[#allocation2 + $0x70] sm:$0xff] %vm2475, %v2439
        %2484 = vst.msk [vmem:[#allocation2 + $0x80] sm:$0xff] %vm2475, %v2441
        %2485 = vst.msk [vmem:[#allocation2 + $0x90] sm:$0xff] %vm2475, %v2443
        %2486 = vst.msk [vmem:[#allocation2 + $0xa0] sm:$0xff] %vm2475, %v2445
        %2487 = vst.msk [vmem:[#allocation2 + $0xb0] sm:$0xff] %vm2475, %v2447
        %2488 = vst.msk [vmem:[#allocation2 + $0xc0] sm:$0xff] %vm2475, %v2449
        %2489 = vst.msk [vmem:[#allocation2 + $0xd0] sm:$0xff] %vm2475, %v2451
        %2490 = vst.msk [vmem:[#allocation2 + $0xe0] sm:$0xff] %vm2475, %v2453
        %2491 = vst.msk [vmem:[#allocation2 + $0xf0] sm:$0xff] %vm2475, %v2455
        %2492 = vst.msk [vmem:[#allocation2 + $0x100] sm:$0xff] %vm2475, %v2457
        %v2494 = vrot.slane %v1751, 1
        %v2495 = vsel %vm1794, %v1828, %v2494
        %v2496 = vrot.slane %v1752, 1
        %v2497 = vsel %vm1794, %v2494, %v2496
        %2498 = vrot.lane.b32.xlu0 %v1801, 64
        %v2499 = vpop.permute.xlu0 %2498
        %2500 = vrot.lane.b32.xlu0 %v1803, 64
        %v2501 = vpop.permute.xlu0 %2500
        %2502 = vrot.lane.b32.xlu0 %v1805, 64
        %v2503 = vpop.permute.xlu0 %2502
        %2504 = vrot.lane.b32.xlu0 %v1807, 64
        %v2505 = vpop.permute.xlu0 %2504
        %2506 = vrot.lane.b32.xlu0 %v1809, 64
        %v2507 = vpop.permute.xlu0 %2506
        %2508 = vrot.lane.b32.xlu0 %v1811, 64
        %v2509 = vpop.permute.xlu0 %2508
        %2510 = vrot.lane.b32.xlu0 %v1813, 64
        %v2511 = vpop.permute.xlu0 %2510
        %2512 = vrot.lane.b32.xlu0 %v1815, 64
        %v2513 = vpop.permute.xlu0 %2512
        %2514 = vrot.lane.b32.xlu0 %v1817, 64
        %v2515 = vpop.permute.xlu0 %2514
        %2516 = vrot.lane.b32.xlu0 %v1819, 64
        %v2517 = vpop.permute.xlu0 %2516
        %2518 = vrot.lane.b32.xlu0 %v1821, 64
        %v2519 = vpop.permute.xlu0 %2518
        %2520 = vrot.lane.b32.xlu0 %v1823, 64
        %v2521 = vpop.permute.xlu0 %2520
        %2522 = vrot.lane.b32.xlu0 %v1825, 64
        %v2523 = vpop.permute.xlu0 %2522
        %2524 = vrot.lane.b32.xlu0 %v1827, 64
        %v2525 = vpop.permute.xlu0 %2524
        %2526 = vrot.lane.b32.xlu0 %v1829, 64
        %v2527 = vpop.permute.xlu0 %2526
        %2528 = vrot.lane.b32.xlu0 %v2495, 64
        %v2529 = vpop.permute.xlu0 %2528
        %2530 = vrot.lane.b32.xlu0 %v2497, 64
        %v2531 = vpop.permute.xlu0 %2530
        %vm2549 = vcmask 589312
        %2550 = vst.msk [vmem:[#allocation2] sm:$0xff] %vm2549, %v2499
        %2551 = vst.msk [vmem:[#allocation2 + $0x10] sm:$0xff] %vm2549, %v2501
        %2552 = vst.msk [vmem:[#allocation2 + $0x20] sm:$0xff] %vm2549, %v2503
        %2553 = vst.msk [vmem:[#allocation2 + $0x30] sm:$0xff] %vm2549, %v2505
        %2554 = vst.msk [vmem:[#allocation2 + $0x40] sm:$0xff] %vm2549, %v2507
        %2555 = vst.msk [vmem:[#allocation2 + $0x50] sm:$0xff] %vm2549, %v2509
        %2556 = vst.msk [vmem:[#allocation2 + $0x60] sm:$0xff] %vm2549, %v2511
        %2557 = vst.msk [vmem:[#allocation2 + $0x70] sm:$0xff] %vm2549, %v2513
        %2558 = vst.msk [vmem:[#allocation2 + $0x80] sm:$0xff] %vm2549, %v2515
        %2559 = vst.msk [vmem:[#allocation2 + $0x90] sm:$0xff] %vm2549, %v2517
        %2560 = vst.msk [vmem:[#allocation2 + $0xa0] sm:$0xff] %vm2549, %v2519
        %2561 = vst.msk [vmem:[#allocation2 + $0xb0] sm:$0xff] %vm2549, %v2521
        %2562 = vst.msk [vmem:[#allocation2 + $0xc0] sm:$0xff] %vm2549, %v2523
        %2563 = vst.msk [vmem:[#allocation2 + $0xd0] sm:$0xff] %vm2549, %v2525
        %2564 = vst.msk [vmem:[#allocation2 + $0xe0] sm:$0xff] %vm2549, %v2527
        %2565 = vst.msk [vmem:[#allocation2 + $0xf0] sm:$0xff] %vm2549, %v2529
        %2566 = vst.msk [vmem:[#allocation2 + $0x100] sm:$0xff] %vm2549, %v2531
        %v2567 = vrot.slane %v1751, 2
        %v2568 = vsel %vm1899, %v1933, %v2567
        %v2569 = vrot.slane %v1752, 2
        %v2570 = vsel %vm1899, %v2567, %v2569
        %2571 = vrot.lane.b32.xlu0 %v1906, 72
        %v2572 = vpop.permute.xlu0 %2571
        %2573 = vrot.lane.b32.xlu0 %v1908, 72
        %v2574 = vpop.permute.xlu0 %2573
        %2575 = vrot.lane.b32.xlu0 %v1910, 72
        %v2576 = vpop.permute.xlu0 %2575
        %2577 = vrot.lane.b32.xlu0 %v1912, 72
        %v2578 = vpop.permute.xlu0 %2577
        %2579 = vrot.lane.b32.xlu0 %v1914, 72
        %v2580 = vpop.permute.xlu0 %2579
        %2581 = vrot.lane.b32.xlu0 %v1916, 72
        %v2582 = vpop.permute.xlu0 %2581
        %2583 = vrot.lane.b32.xlu0 %v1918, 72
        %v2584 = vpop.permute.xlu0 %2583
        %2585 = vrot.lane.b32.xlu0 %v1920, 72
        %v2586 = vpop.permute.xlu0 %2585
        %2587 = vrot.lane.b32.xlu0 %v1922, 72
        %v2588 = vpop.permute.xlu0 %2587
        %2589 = vrot.lane.b32.xlu0 %v1924, 72
        %v2590 = vpop.permute.xlu0 %2589
        %2591 = vrot.lane.b32.xlu0 %v1926, 72
        %v2592 = vpop.permute.xlu0 %2591
        %2593 = vrot.lane.b32.xlu0 %v1928, 72
        %v2594 = vpop.permute.xlu0 %2593
        %2595 = vrot.lane.b32.xlu0 %v1930, 72
        %v2596 = vpop.permute.xlu0 %2595
        %2597 = vrot.lane.b32.xlu0 %v1932, 72
        %v2598 = vpop.permute.xlu0 %2597
        %2599 = vrot.lane.b32.xlu0 %v1934, 72
        %v2600 = vpop.permute.xlu0 %2599
        %2601 = vrot.lane.b32.xlu0 %v2568, 72
        %v2602 = vpop.permute.xlu0 %2601
        %2603 = vrot.lane.b32.xlu0 %v2570, 72
        %v2604 = vpop.permute.xlu0 %2603
        %vm2622 = vcmask 654912
        %2623 = vst.msk [vmem:[#allocation2] sm:$0xff] %vm2622, %v2572
        %2624 = vst.msk [vmem:[#allocation2 + $0x10] sm:$0xff] %vm2622, %v2574
        %2625 = vst.msk [vmem:[#allocation2 + $0x20] sm:$0xff] %vm2622, %v2576
        %2626 = vst.msk [vmem:[#allocation2 + $0x30] sm:$0xff] %vm2622, %v2578
        %2627 = vst.msk [vmem:[#allocation2 + $0x40] sm:$0xff] %vm2622, %v2580
        %2628 = vst.msk [vmem:[#allocation2 + $0x50] sm:$0xff] %vm2622, %v2582
        %2629 = vst.msk [vmem:[#allocation2 + $0x60] sm:$0xff] %vm2622, %v2584
        %2630 = vst.msk [vmem:[#allocation2 + $0x70] sm:$0xff] %vm2622, %v2586
        %2631 = vst.msk [vmem:[#allocation2 + $0x80] sm:$0xff] %vm2622, %v2588
        %2632 = vst.msk [vmem:[#allocation2 + $0x90] sm:$0xff] %vm2622, %v2590
        %2633 = vst.msk [vmem:[#allocation2 + $0xa0] sm:$0xff] %vm2622, %v2592
        %2634 = vst.msk [vmem:[#allocation2 + $0xb0] sm:$0xff] %vm2622, %v2594
        %2635 = vst.msk [vmem:[#allocation2 + $0xc0] sm:$0xff] %vm2622, %v2596
        %2636 = vst.msk [vmem:[#allocation2 + $0xd0] sm:$0xff] %vm2622, %v2598
        %2637 = vst.msk [vmem:[#allocation2 + $0xe0] sm:$0xff] %vm2622, %v2600
        %2638 = vst.msk [vmem:[#allocation2 + $0xf0] sm:$0xff] %vm2622, %v2602
        %2639 = vst.msk [vmem:[#allocation2 + $0x100] sm:$0xff] %vm2622, %v2604
        %v2641 = vrot.slane %v1751, 4
        %v2642 = vsel %vm1509, %v2142, %v2641
        %v2643 = vrot.slane %v1752, 4
        %v2644 = vsel %vm1509, %v2641, %v2643
        %v2645 = vrot.slane %v1753, 4
        %v2646 = vsel %vm1509, %v2643, %v2645
        %2647 = vrot.lane.b32.xlu0 %v2117, 80
        %v2648 = vpop.permute.xlu0 %2647
        %2649 = vrot.lane.b32.xlu0 %v2119, 80
        %v2650 = vpop.permute.xlu0 %2649
        %2651 = vrot.lane.b32.xlu0 %v2121, 80
        %v2652 = vpop.permute.xlu0 %2651
        %2653 = vrot.lane.b32.xlu0 %v2123, 80
        %v2654 = vpop.permute.xlu0 %2653
        %2655 = vrot.lane.b32.xlu0 %v2125, 80
        %v2656 = vpop.permute.xlu0 %2655
        %2657 = vrot.lane.b32.xlu0 %v2127, 80
        %v2658 = vpop.permute.xlu0 %2657
        %2659 = vrot.lane.b32.xlu0 %v2129, 80
        %v2660 = vpop.permute.xlu0 %2659
        %2661 = vrot.lane.b32.xlu0 %v2131, 80
        %v2662 = vpop.permute.xlu0 %2661
        %2663 = vrot.lane.b32.xlu0 %v2133, 80
        %v2664 = vpop.permute.xlu0 %2663
        %2665 = vrot.lane.b32.xlu0 %v2135, 80
        %v2666 = vpop.permute.xlu0 %2665
        %2667 = vrot.lane.b32.xlu0 %v2137, 80
        %v2668 = vpop.permute.xlu0 %2667
        %2669 = vrot.lane.b32.xlu0 %v2139, 80
        %v2670 = vpop.permute.xlu0 %2669
        %2671 = vrot.lane.b32.xlu0 %v2141, 80
        %v2672 = vpop.permute.xlu0 %2671
        %2673 = vrot.lane.b32.xlu0 %v2143, 80
        %v2674 = vpop.permute.xlu0 %2673
        %2675 = vrot.lane.b32.xlu0 %v2642, 80
        %v2676 = vpop.permute.xlu0 %2675
        %2677 = vrot.lane.b32.xlu0 %v2644, 80
        %v2678 = vpop.permute.xlu0 %2677
        %2679 = vrot.lane.b32.xlu0 %v2646, 80
        %v2680 = vpop.permute.xlu0 %2679
        %vm2698 = vcmask 720512
        %2699 = vst.msk [vmem:[#allocation2] sm:$0xff] %vm2698, %v2648
        %2700 = vst.msk [vmem:[#allocation2 + $0x10] sm:$0xff] %vm2698, %v2650
        %2701 = vst.msk [vmem:[#allocation2 + $0x20] sm:$0xff] %vm2698, %v2652
        %2702 = vst.msk [vmem:[#allocation2 + $0x30] sm:$0xff] %vm2698, %v2654
        %2703 = vst.msk [vmem:[#allocation2 + $0x40] sm:$0xff] %vm2698, %v2656
        %2704 = vst.msk [vmem:[#allocation2 + $0x50] sm:$0xff] %vm2698, %v2658
        %2705 = vst.msk [vmem:[#allocation2 + $0x60] sm:$0xff] %vm2698, %v2660
        %2706 = vst.msk [vmem:[#allocation2 + $0x70] sm:$0xff] %vm2698, %v2662
        %2707 = vst.msk [vmem:[#allocation2 + $0x80] sm:$0xff] %vm2698, %v2664
        %2708 = vst.msk [vmem:[#allocation2 + $0x90] sm:$0xff] %vm2698, %v2666
        %2709 = vst.msk [vmem:[#allocation2 + $0xa0] sm:$0xff] %vm2698, %v2668
        %2710 = vst.msk [vmem:[#allocation2 + $0xb0] sm:$0xff] %vm2698, %v2670
        %2711 = vst.msk [vmem:[#allocation2 + $0xc0] sm:$0xff] %vm2698, %v2672
        %2712 = vst.msk [vmem:[#allocation2 + $0xd0] sm:$0xff] %vm2698, %v2674
        %2713 = vst.msk [vmem:[#allocation2 + $0xe0] sm:$0xff] %vm2698, %v2676
        %2714 = vst.msk [vmem:[#allocation2 + $0xf0] sm:$0xff] %vm2698, %v2678
        %2715 = vst.msk [vmem:[#allocation2 + $0x100] sm:$0xff] %vm2698, %v2680
        %vm2716 = vcmask 1042432
        %v2717 = vrot.slane %v1736, 5
        %v2718 = vrot.slane %v1737, 5
        %v2719 = vsel %vm2716, %v2717, %v2718
        %v2720 = vrot.slane %v1738, 5
        %v2721 = vsel %vm2716, %v2718, %v2720
        %v2722 = vrot.slane %v1739, 5
        %v2723 = vsel %vm2716, %v2720, %v2722
        %v2724 = vrot.slane %v1740, 5
        %v2725 = vsel %vm2716, %v2722, %v2724
        %v2726 = vrot.slane %v1741, 5
        %v2727 = vsel %vm2716, %v2724, %v2726
        %v2728 = vrot.slane %v1742, 5
        %v2729 = vsel %vm2716, %v2726, %v2728
        %v2730 = vrot.slane %v1743, 5
        %v2731 = vsel %vm2716, %v2728, %v2730
        %v2732 = vrot.slane %v1744, 5
        %v2733 = vsel %vm2716, %v2730, %v2732
        %v2734 = vrot.slane %v1745, 5
        %v2735 = vsel %vm2716, %v2732, %v2734
        %v2736 = vrot.slane %v1746, 5
        %v2737 = vsel %vm2716, %v2734, %v2736
        %v2738 = vrot.slane %v1747, 5
        %v2739 = vsel %vm2716, %v2736, %v2738
        %v2740 = vrot.slane %v1748, 5
        %v2741 = vsel %vm2716, %v2738, %v2740
        %v2742 = vrot.slane %v1749, 5
        %v2743 = vsel %vm2716, %v2740, %v2742
        %v2744 = vrot.slane %v1750, 5
        %v2745 = vsel %vm2716, %v2742, %v2744
        %v2746 = vrot.slane %v1751, 5
        %v2747 = vsel %vm2716, %v2744, %v2746
        %v2748 = vrot.slane %v1752, 5
        %v2749 = vsel %vm2716, %v2746, %v2748
        %v2750 = vrot.slane %v1753, 5
        %v2751 = vsel %vm2716, %v2748, %v2750
        %2752 = vrot.lane.b32.xlu0 %v2719, 88
        %v2753 = vpop.permute.xlu0 %2752
        %2754 = vrot.lane.b32.xlu0 %v2721, 88
        %v2755 = vpop.permute.xlu0 %2754
        %2756 = vrot.lane.b32.xlu0 %v2723, 88
        %v2757 = vpop.permute.xlu0 %2756
        %2758 = vrot.lane.b32.xlu0 %v2725, 88
        %v2759 = vpop.permute.xlu0 %2758
        %2760 = vrot.lane.b32.xlu0 %v2727, 88
        %v2761 = vpop.permute.xlu0 %2760
        %2762 = vrot.lane.b32.xlu0 %v2729, 88
        %v2763 = vpop.permute.xlu0 %2762
        %2764 = vrot.lane.b32.xlu0 %v2731, 88
        %v2765 = vpop.permute.xlu0 %2764
        %2766 = vrot.lane.b32.xlu0 %v2733, 88
        %v2767 = vpop.permute.xlu0 %2766
        %2768 = vrot.lane.b32.xlu0 %v2735, 88
        %v2769 = vpop.permute.xlu0 %2768
        %2770 = vrot.lane.b32.xlu0 %v2737, 88
        %v2771 = vpop.permute.xlu0 %2770
        %2772 = vrot.lane.b32.xlu0 %v2739, 88
        %v2773 = vpop.permute.xlu0 %2772
        %2774 = vrot.lane.b32.xlu0 %v2741, 88
        %v2775 = vpop.permute.xlu0 %2774
        %2776 = vrot.lane.b32.xlu0 %v2743, 88
        %v2777 = vpop.permute.xlu0 %2776
        %2778 = vrot.lane.b32.xlu0 %v2745, 88
        %v2779 = vpop.permute.xlu0 %2778
        %2780 = vrot.lane.b32.xlu0 %v2747, 88
        %v2781 = vpop.permute.xlu0 %2780
        %2782 = vrot.lane.b32.xlu0 %v2749, 88
        %v2783 = vpop.permute.xlu0 %2782
        %2784 = vrot.lane.b32.xlu0 %v2751, 88
        %v2785 = vpop.permute.xlu0 %2784
        %vm2803 = vcmask 786112
        %2804 = vst.msk [vmem:[#allocation2] sm:$0xff] %vm2803, %v2753
        %2805 = vst.msk [vmem:[#allocation2 + $0x10] sm:$0xff] %vm2803, %v2755
        %2806 = vst.msk [vmem:[#allocation2 + $0x20] sm:$0xff] %vm2803, %v2757
        %2807 = vst.msk [vmem:[#allocation2 + $0x30] sm:$0xff] %vm2803, %v2759
        %2808 = vst.msk [vmem:[#allocation2 + $0x40] sm:$0xff] %vm2803, %v2761
        %2809 = vst.msk [vmem:[#allocation2 + $0x50] sm:$0xff] %vm2803, %v2763
        %2810 = vst.msk [vmem:[#allocation2 + $0x60] sm:$0xff] %vm2803, %v2765
        %2811 = vst.msk [vmem:[#allocation2 + $0x70] sm:$0xff] %vm2803, %v2767
        %2812 = vst.msk [vmem:[#allocation2 + $0x80] sm:$0xff] %vm2803, %v2769
        %2813 = vst.msk [vmem:[#allocation2 + $0x90] sm:$0xff] %vm2803, %v2771
        %2814 = vst.msk [vmem:[#allocation2 + $0xa0] sm:$0xff] %vm2803, %v2773
        %2815 = vst.msk [vmem:[#allocation2 + $0xb0] sm:$0xff] %vm2803, %v2775
        %2816 = vst.msk [vmem:[#allocation2 + $0xc0] sm:$0xff] %vm2803, %v2777
        %2817 = vst.msk [vmem:[#allocation2 + $0xd0] sm:$0xff] %vm2803, %v2779
        %2818 = vst.msk [vmem:[#allocation2 + $0xe0] sm:$0xff] %vm2803, %v2781
        %2819 = vst.msk [vmem:[#allocation2 + $0xf0] sm:$0xff] %vm2803, %v2783
        %2820 = vst.msk [vmem:[#allocation2 + $0x100] sm:$0xff] %vm2803, %v2785
        %v2821 = vrot.slane %v1752, 6
        %v2822 = vsel %vm2214, %v2248, %v2821
        %v2823 = vrot.slane %v1753, 6
        %v2824 = vsel %vm2214, %v2821, %v2823
        %2825 = vrot.lane.b32.xlu0 %v2221, 96
        %v2826 = vpop.permute.xlu0 %2825
        %2827 = vrot.lane.b32.xlu0 %v2223, 96
        %v2828 = vpop.permute.xlu0 %2827
        %2829 = vrot.lane.b32.xlu0 %v2225, 96
        %v2830 = vpop.permute.xlu0 %2829
        %2831 = vrot.lane.b32.xlu0 %v2227, 96
        %v2832 = vpop.permute.xlu0 %2831
        %2833 = vrot.lane.b32.xlu0 %v2229, 96
        %v2834 = vpop.permute.xlu0 %2833
        %2835 = vrot.lane.b32.xlu0 %v2231, 96
        %v2836 = vpop.permute.xlu0 %2835
        %2837 = vrot.lane.b32.xlu0 %v2233, 96
        %v2838 = vpop.permute.xlu0 %2837
        %2839 = vrot.lane.b32.xlu0 %v2235, 96
        %v2840 = vpop.permute.xlu0 %2839
        %2841 = vrot.lane.b32.xlu0 %v2237, 96
        %v2842 = vpop.permute.xlu0 %2841
        %2843 = vrot.lane.b32.xlu0 %v2239, 96
        %v2844 = vpop.permute.xlu0 %2843
        %2845 = vrot.lane.b32.xlu0 %v2241, 96
        %v2846 = vpop.permute.xlu0 %2845
        %2847 = vrot.lane.b32.xlu0 %v2243, 96
        %v2848 = vpop.permute.xlu0 %2847
        %2849 = vrot.lane.b32.xlu0 %v2245, 96
        %v2850 = vpop.permute.xlu0 %2849
        %2851 = vrot.lane.b32.xlu0 %v2247, 96
        %v2852 = vpop.permute.xlu0 %2851
        %2853 = vrot.lane.b32.xlu0 %v2249, 96
        %v2854 = vpop.permute.xlu0 %2853
        %2855 = vrot.lane.b32.xlu0 %v2822, 96
        %v2856 = vpop.permute.xlu0 %2855
        %2857 = vrot.lane.b32.xlu0 %v2824, 96
        %v2858 = vpop.permute.xlu0 %2857
        %vm2876 = vcmask 851712
        %2877 = vst.msk [vmem:[#allocation2] sm:$0xff] %vm2876, %v2826
        %2878 = vst.msk [vmem:[#allocation2 + $0x10] sm:$0xff] %vm2876, %v2828
        %2879 = vst.msk [vmem:[#allocation2 + $0x20] sm:$0xff] %vm2876, %v2830
        %2880 = vst.msk [vmem:[#allocation2 + $0x30] sm:$0xff] %vm2876, %v2832
        %2881 = vst.msk [vmem:[#allocation2 + $0x40] sm:$0xff] %vm2876, %v2834
        %2882 = vst.msk [vmem:[#allocation2 + $0x50] sm:$0xff] %vm2876, %v2836
        %2883 = vst.msk [vmem:[#allocation2 + $0x60] sm:$0xff] %vm2876, %v2838
        %2884 = vst.msk [vmem:[#allocation2 + $0x70] sm:$0xff] %vm2876, %v2840
        %2885 = vst.msk [vmem:[#allocation2 + $0x80] sm:$0xff] %vm2876, %v2842
        %2886 = vst.msk [vmem:[#allocation2 + $0x90] sm:$0xff] %vm2876, %v2844
        %2887 = vst.msk [vmem:[#allocation2 + $0xa0] sm:$0xff] %vm2876, %v2846
        %2888 = vst.msk [vmem:[#allocation2 + $0xb0] sm:$0xff] %vm2876, %v2848
        %2889 = vst.msk [vmem:[#allocation2 + $0xc0] sm:$0xff] %vm2876, %v2850
        %2890 = vst.msk [vmem:[#allocation2 + $0xd0] sm:$0xff] %vm2876, %v2852
        %2891 = vst.msk [vmem:[#allocation2 + $0xe0] sm:$0xff] %vm2876, %v2854
        %2892 = vst.msk [vmem:[#allocation2 + $0xf0] sm:$0xff] %vm2876, %v2856
        %2893 = vst.msk [vmem:[#allocation2 + $0x100] sm:$0xff] %vm2876, %v2858
        %v2894 = vrot.slane %v1752, 7
        %v2895 = vsel %vm2319, %v2353, %v2894
        %v2896 = vrot.slane %v1753, 7
        %v2897 = vsel %vm2319, %v2894, %v2896
        %2898 = vrot.lane.b32.xlu0 %v2326, 104
        %v2899 = vpop.permute.xlu0 %2898
        %2900 = vrot.lane.b32.xlu0 %v2328, 104
        %v2901 = vpop.permute.xlu0 %2900
        %2902 = vrot.lane.b32.xlu0 %v2330, 104
        %v2903 = vpop.permute.xlu0 %2902
        %2904 = vrot.lane.b32.xlu0 %v2332, 104
        %v2905 = vpop.permute.xlu0 %2904
        %2906 = vrot.lane.b32.xlu0 %v2334, 104
        %v2907 = vpop.permute.xlu0 %2906
        %2908 = vrot.lane.b32.xlu0 %v2336, 104
        %v2909 = vpop.permute.xlu0 %2908
        %2910 = vrot.lane.b32.xlu0 %v2338, 104
        %v2911 = vpop.permute.xlu0 %2910
        %2912 = vrot.lane.b32.xlu0 %v2340, 104
        %v2913 = vpop.permute.xlu0 %2912
        %2914 = vrot.lane.b32.xlu0 %v2342, 104
        %v2915 = vpop.permute.xlu0 %2914
        %2916 = vrot.lane.b32.xlu0 %v2344, 104
        %v2917 = vpop.permute.xlu0 %2916
        %2918 = vrot.lane.b32.xlu0 %v2346, 104
        %v2919 = vpop.permute.xlu0 %2918
        %2920 = vrot.lane.b32.xlu0 %v2348, 104
        %v2921 = vpop.permute.xlu0 %2920
        %2922 = vrot.lane.b32.xlu0 %v2350, 104
        %v2923 = vpop.permute.xlu0 %2922
        %2924 = vrot.lane.b32.xlu0 %v2352, 104
        %v2925 = vpop.permute.xlu0 %2924
        %2926 = vrot.lane.b32.xlu0 %v2354, 104
        %v2927 = vpop.permute.xlu0 %2926
        %2928 = vrot.lane.b32.xlu0 %v2895, 104
        %v2929 = vpop.permute.xlu0 %2928
        %2930 = vrot.lane.b32.xlu0 %v2897, 104
        %v2931 = vpop.permute.xlu0 %2930
        %vm2949 = vcmask 917312
        %2950 = vst.msk [vmem:[#allocation2] sm:$0xff] %vm2949, %v2899
        %2951 = vst.msk [vmem:[#allocation2 + $0x10] sm:$0xff] %vm2949, %v2901
        %2952 = vst.msk [vmem:[#allocation2 + $0x20] sm:$0xff] %vm2949, %v2903
        %2953 = vst.msk [vmem:[#allocation2 + $0x30] sm:$0xff] %vm2949, %v2905
        %2954 = vst.msk [vmem:[#allocation2 + $0x40] sm:$0xff] %vm2949, %v2907
        %2955 = vst.msk [vmem:[#allocation2 + $0x50] sm:$0xff] %vm2949, %v2909
        %2956 = vst.msk [vmem:[#allocation2 + $0x60] sm:$0xff] %vm2949, %v2911
        %2957 = vst.msk [vmem:[#allocation2 + $0x70] sm:$0xff] %vm2949, %v2913
        %2958 = vst.msk [vmem:[#allocation2 + $0x80] sm:$0xff] %vm2949, %v2915
        %2959 = vst.msk [vmem:[#allocation2 + $0x90] sm:$0xff] %vm2949, %v2917
        %2960 = vst.msk [vmem:[#allocation2 + $0xa0] sm:$0xff] %vm2949, %v2919
        %2961 = vst.msk [vmem:[#allocation2 + $0xb0] sm:$0xff] %vm2949, %v2921
        %2962 = vst.msk [vmem:[#allocation2 + $0xc0] sm:$0xff] %vm2949, %v2923
        %2963 = vst.msk [vmem:[#allocation2 + $0xd0] sm:$0xff] %vm2949, %v2925
        %2964 = vst.msk [vmem:[#allocation2 + $0xe0] sm:$0xff] %vm2949, %v2927
        %2965 = vst.msk [vmem:[#allocation2 + $0xf0] sm:$0xff] %vm2949, %v2929
        %2966 = vst.msk [vmem:[#allocation2 + $0x100] sm:$0xff] %vm2949, %v2931
        %2967 = vrot.lane.b32.xlu0 %v1737, 112
        %v2968 = vpop.permute.xlu0 %2967
        %2969 = vrot.lane.b32.xlu0 %v1738, 112
        %v2970 = vpop.permute.xlu0 %2969
        %2971 = vrot.lane.b32.xlu0 %v1739, 112
        %v2972 = vpop.permute.xlu0 %2971
        %2973 = vrot.lane.b32.xlu0 %v1740, 112
        %v2974 = vpop.permute.xlu0 %2973
        %2975 = vrot.lane.b32.xlu0 %v1741, 112
        %v2976 = vpop.permute.xlu0 %2975
        %2977 = vrot.lane.b32.xlu0 %v1742, 112
        %v2978 = vpop.permute.xlu0 %2977
        %2979 = vrot.lane.b32.xlu0 %v1743, 112
        %v2980 = vpop.permute.xlu0 %2979
        %2981 = vrot.lane.b32.xlu0 %v1744, 112
        %v2982 = vpop.permute.xlu0 %2981
        %2983 = vrot.lane.b32.xlu0 %v1745, 112
        %v2984 = vpop.permute.xlu0 %2983
        %2985 = vrot.lane.b32.xlu0 %v1746, 112
        %v2986 = vpop.permute.xlu0 %2985
        %2987 = vrot.lane.b32.xlu0 %v1747, 112
        %v2988 = vpop.permute.xlu0 %2987
        %2989 = vrot.lane.b32.xlu0 %v1748, 112
        %v2990 = vpop.permute.xlu0 %2989
        %2991 = vrot.lane.b32.xlu0 %v1749, 112
        %v2992 = vpop.permute.xlu0 %2991
        %2993 = vrot.lane.b32.xlu0 %v1750, 112
        %v2994 = vpop.permute.xlu0 %2993
        %2995 = vrot.lane.b32.xlu0 %v1751, 112
        %v2996 = vpop.permute.xlu0 %2995
        %2997 = vrot.lane.b32.xlu0 %v1752, 112
        %v2998 = vpop.permute.xlu0 %2997
        %2999 = vrot.lane.b32.xlu0 %v1753, 112
        %v3000 = vpop.permute.xlu0 %2999
        %vm3018 = vcmask 982912
        %3019 = vst.msk [vmem:[#allocation2] sm:$0xff] %vm3018, %v2968
        %3020 = vst.msk [vmem:[#allocation2 + $0x10] sm:$0xff] %vm3018, %v2970
        %3021 = vst.msk [vmem:[#allocation2 + $0x20] sm:$0xff] %vm3018, %v2972
        %3022 = vst.msk [vmem:[#allocation2 + $0x30] sm:$0xff] %vm3018, %v2974
        %3023 = vst.msk [vmem:[#allocation2 + $0x40] sm:$0xff] %vm3018, %v2976
        %3024 = vst.msk [vmem:[#allocation2 + $0x50] sm:$0xff] %vm3018, %v2978
        %3025 = vst.msk [vmem:[#allocation2 + $0x60] sm:$0xff] %vm3018, %v2980
        %3026 = vst.msk [vmem:[#allocation2 + $0x70] sm:$0xff] %vm3018, %v2982
        %3027 = vst.msk [vmem:[#allocation2 + $0x80] sm:$0xff] %vm3018, %v2984
        %3028 = vst.msk [vmem:[#allocation2 + $0x90] sm:$0xff] %vm3018, %v2986
        %3029 = vst.msk [vmem:[#allocation2 + $0xa0] sm:$0xff] %vm3018, %v2988
        %3030 = vst.msk [vmem:[#allocation2 + $0xb0] sm:$0xff] %vm3018, %v2990
        %3031 = vst.msk [vmem:[#allocation2 + $0xc0] sm:$0xff] %vm3018, %v2992
        %3032 = vst.msk [vmem:[#allocation2 + $0xd0] sm:$0xff] %vm3018, %v2994
        %3033 = vst.msk [vmem:[#allocation2 + $0xe0] sm:$0xff] %vm3018, %v2996
        %3034 = vst.msk [vmem:[#allocation2 + $0xf0] sm:$0xff] %vm3018, %v2998
        %3035 = vst.msk [vmem:[#allocation2 + $0x100] sm:$0xff] %vm3018, %v3000
        %v3038 = vrot.slane %v1753, 2
        %v3039 = vsel %vm1899, %v2569, %v3038
        %v3040 = vrot.slane %v1754, 2
        %v3041 = vsel %vm1899, %v3038, %v3040
        %v3042 = vrot.slane %v1755, 2
        %v3043 = vsel %vm1899, %v3040, %v3042
        %3044 = vrot.lane.b32.xlu0 %v1912, 120
        %v3045 = vpop.permute.xlu0 %3044
        %3046 = vrot.lane.b32.xlu0 %v1914, 120
        %v3047 = vpop.permute.xlu0 %3046
        %3048 = vrot.lane.b32.xlu0 %v1916, 120
        %v3049 = vpop.permute.xlu0 %3048
        %3050 = vrot.lane.b32.xlu0 %v1918, 120
        %v3051 = vpop.permute.xlu0 %3050
        %3052 = vrot.lane.b32.xlu0 %v1920, 120
        %v3053 = vpop.permute.xlu0 %3052
        %3054 = vrot.lane.b32.xlu0 %v1922, 120
        %v3055 = vpop.permute.xlu0 %3054
        %3056 = vrot.lane.b32.xlu0 %v1924, 120
        %v3057 = vpop.permute.xlu0 %3056
        %3058 = vrot.lane.b32.xlu0 %v1926, 120
        %v3059 = vpop.permute.xlu0 %3058
        %3060 = vrot.lane.b32.xlu0 %v1928, 120
        %v3061 = vpop.permute.xlu0 %3060
        %3062 = vrot.lane.b32.xlu0 %v1930, 120
        %v3063 = vpop.permute.xlu0 %3062
        %3064 = vrot.lane.b32.xlu0 %v1932, 120
        %v3065 = vpop.permute.xlu0 %3064
        %3066 = vrot.lane.b32.xlu0 %v1934, 120
        %v3067 = vpop.permute.xlu0 %3066
        %3068 = vrot.lane.b32.xlu0 %v2568, 120
        %v3069 = vpop.permute.xlu0 %3068
        %3070 = vrot.lane.b32.xlu0 %v2570, 120
        %v3071 = vpop.permute.xlu0 %3070
        %3072 = vrot.lane.b32.xlu0 %v3039, 120
        %v3073 = vpop.permute.xlu0 %3072
        %3074 = vrot.lane.b32.xlu0 %v3041, 120
        %v3075 = vpop.permute.xlu0 %3074
        %3076 = vrot.lane.b32.xlu0 %v3043, 120
        %v3077 = vpop.permute.xlu0 %3076
        %vm3095 = vcmask 1048512
        %3096 = vst.msk [vmem:[#allocation2] sm:$0xff] %vm3095, %v3045
        %3097 = vst.msk [vmem:[#allocation2 + $0x10] sm:$0xff] %vm3095, %v3047
        %3098 = vst.msk [vmem:[#allocation2 + $0x20] sm:$0xff] %vm3095, %v3049
        %3099 = vst.msk [vmem:[#allocation2 + $0x30] sm:$0xff] %vm3095, %v3051
        %3100 = vst.msk [vmem:[#allocation2 + $0x40] sm:$0xff] %vm3095, %v3053
        %3101 = vst.msk [vmem:[#allocation2 + $0x50] sm:$0xff] %vm3095, %v3055
        %3102 = vst.msk [vmem:[#allocation2 + $0x60] sm:$0xff] %vm3095, %v3057
        %3103 = vst.msk [vmem:[#allocation2 + $0x70] sm:$0xff] %vm3095, %v3059
        %3104 = vst.msk [vmem:[#allocation2 + $0x80] sm:$0xff] %vm3095, %v3061
        %3105 = vst.msk [vmem:[#allocation2 + $0x90] sm:$0xff] %vm3095, %v3063
        %3106 = vst.msk [vmem:[#allocation2 + $0xa0] sm:$0xff] %vm3095, %v3065
        %3107 = vst.msk [vmem:[#allocation2 + $0xb0] sm:$0xff] %vm3095, %v3067
        %3108 = vst.msk [vmem:[#allocation2 + $0xc0] sm:$0xff] %vm3095, %v3069
        %3109 = vst.msk [vmem:[#allocation2 + $0xd0] sm:$0xff] %vm3095, %v3071
        %3110 = vst.msk [vmem:[#allocation2 + $0xe0] sm:$0xff] %vm3095, %v3073
        %3111 = vst.msk [vmem:[#allocation2 + $0xf0] sm:$0xff] %vm3095, %v3075
        %3112 = vst.msk [vmem:[#allocation2 + $0x100] sm:$0xff] %vm3095, %v3077
        %v3113 = vrot.slane %v1751, 3
        %v3114 = vsel %vm2004, %v2038, %v3113
        %v3115 = vrot.slane %v1752, 3
        %v3116 = vsel %vm2004, %v3113, %v3115
        %v3117 = vrot.slane %v1753, 3
        %v3118 = vsel %vm2004, %v3115, %v3117
        %v3119 = vrot.slane %v1754, 3
        %v3120 = vsel %vm2004, %v3117, %v3119
        %v3121 = vrot.slane %v1755, 3
        %v3122 = vsel %vm2004, %v3119, %v3121
        %3140 = vst.msk [vmem:[#allocation2 + $0x8] sm:$0xff] %vm1758, %v2017
        %3141 = vst.msk [vmem:[#allocation2 + $0x18] sm:$0xff] %vm1758, %v2019
        %3142 = vst.msk [vmem:[#allocation2 + $0x28] sm:$0xff] %vm1758, %v2021
        %3143 = vst.msk [vmem:[#allocation2 + $0x38] sm:$0xff] %vm1758, %v2023
        %3144 = vst.msk [vmem:[#allocation2 + $0x48] sm:$0xff] %vm1758, %v2025
        %3145 = vst.msk [vmem:[#allocation2 + $0x58] sm:$0xff] %vm1758, %v2027
        %3146 = vst.msk [vmem:[#allocation2 + $0x68] sm:$0xff] %vm1758, %v2029
        %3147 = vst.msk [vmem:[#allocation2 + $0x78] sm:$0xff] %vm1758, %v2031
        %3148 = vst.msk [vmem:[#allocation2 + $0x88] sm:$0xff] %vm1758, %v2033
        %3149 = vst.msk [vmem:[#allocation2 + $0x98] sm:$0xff] %vm1758, %v2035
        %3150 = vst.msk [vmem:[#allocation2 + $0xa8] sm:$0xff] %vm1758, %v2037
        %3151 = vst.msk [vmem:[#allocation2 + $0xb8] sm:$0xff] %vm1758, %v2039
        %3152 = vst.msk [vmem:[#allocation2 + $0xc8] sm:$0xff] %vm1758, %v3114
        %3153 = vst.msk [vmem:[#allocation2 + $0xd8] sm:$0xff] %vm1758, %v3116
        %3154 = vst.msk [vmem:[#allocation2 + $0xe8] sm:$0xff] %vm1758, %v3118
        %3155 = vst.msk [vmem:[#allocation2 + $0xf8] sm:$0xff] %vm1758, %v3120
        %3156 = vst.msk [vmem:[#allocation2 + $0x108] sm:$0xff] %vm1758, %v3122
        %v3157 = vrot.slane %v1754, 4
        %v3158 = vsel %vm1509, %v2645, %v3157
        %v3159 = vrot.slane %v1755, 4
        %v3160 = vsel %vm1509, %v3157, %v3159
        %3161 = vrot.lane.b32.xlu0 %v2121, 8
        %v3162 = vpop.permute.xlu0 %3161
        %3163 = vrot.lane.b32.xlu0 %v2123, 8
        %v3164 = vpop.permute.xlu0 %3163
        %3165 = vrot.lane.b32.xlu0 %v2125, 8
        %v3166 = vpop.permute.xlu0 %3165
        %3167 = vrot.lane.b32.xlu0 %v2127, 8
        %v3168 = vpop.permute.xlu0 %3167
        %3169 = vrot.lane.b32.xlu0 %v2129, 8
        %v3170 = vpop.permute.xlu0 %3169
        %3171 = vrot.lane.b32.xlu0 %v2131, 8
        %v3172 = vpop.permute.xlu0 %3171
        %3173 = vrot.lane.b32.xlu0 %v2133, 8
        %v3174 = vpop.permute.xlu0 %3173
        %3175 = vrot.lane.b32.xlu0 %v2135, 8
        %v3176 = vpop.permute.xlu0 %3175
        %3177 = vrot.lane.b32.xlu0 %v2137, 8
        %v3178 = vpop.permute.xlu0 %3177
        %3179 = vrot.lane.b32.xlu0 %v2139, 8
        %v3180 = vpop.permute.xlu0 %3179
        %3181 = vrot.lane.b32.xlu0 %v2141, 8
        %v3182 = vpop.permute.xlu0 %3181
        %3183 = vrot.lane.b32.xlu0 %v2143, 8
        %v3184 = vpop.permute.xlu0 %3183
        %3185 = vrot.lane.b32.xlu0 %v2642, 8
        %v3186 = vpop.permute.xlu0 %3185
        %3187 = vrot.lane.b32.xlu0 %v2644, 8
        %v3188 = vpop.permute.xlu0 %3187
        %3189 = vrot.lane.b32.xlu0 %v2646, 8
        %v3190 = vpop.permute.xlu0 %3189
        %3191 = vrot.lane.b32.xlu0 %v3158, 8
        %v3192 = vpop.permute.xlu0 %3191
        %3193 = vrot.lane.b32.xlu0 %v3160, 8
        %v3194 = vpop.permute.xlu0 %3193
        %3212 = vst.msk [vmem:[#allocation2 + $0x8] sm:$0xff] %vm1881, %v3162
        %3213 = vst.msk [vmem:[#allocation2 + $0x18] sm:$0xff] %vm1881, %v3164
        %3214 = vst.msk [vmem:[#allocation2 + $0x28] sm:$0xff] %vm1881, %v3166
        %3215 = vst.msk [vmem:[#allocation2 + $0x38] sm:$0xff] %vm1881, %v3168
        %3216 = vst.msk [vmem:[#allocation2 + $0x48] sm:$0xff] %vm1881, %v3170
        %3217 = vst.msk [vmem:[#allocation2 + $0x58] sm:$0xff] %vm1881, %v3172
        %3218 = vst.msk [vmem:[#allocation2 + $0x68] sm:$0xff] %vm1881, %v3174
        %3219 = vst.msk [vmem:[#allocation2 + $0x78] sm:$0xff] %vm1881, %v3176
        %3220 = vst.msk [vmem:[#allocation2 + $0x88] sm:$0xff] %vm1881, %v3178
        %3221 = vst.msk [vmem:[#allocation2 + $0x98] sm:$0xff] %vm1881, %v3180
        %3222 = vst.msk [vmem:[#allocation2 + $0xa8] sm:$0xff] %vm1881, %v3182
        %3223 = vst.msk [vmem:[#allocation2 + $0xb8] sm:$0xff] %vm1881, %v3184
        %3224 = vst.msk [vmem:[#allocation2 + $0xc8] sm:$0xff] %vm1881, %v3186
        %3225 = vst.msk [vmem:[#allocation2 + $0xd8] sm:$0xff] %vm1881, %v3188
        %3226 = vst.msk [vmem:[#allocation2 + $0xe8] sm:$0xff] %vm1881, %v3190
        %3227 = vst.msk [vmem:[#allocation2 + $0xf8] sm:$0xff] %vm1881, %v3192
        %3228 = vst.msk [vmem:[#allocation2 + $0x108] sm:$0xff] %vm1881, %v3194
        %v3229 = vrot.slane %v1754, 5
        %v3230 = vsel %vm2716, %v2750, %v3229
        %v3231 = vrot.slane %v1755, 5
        %v3232 = vsel %vm2716, %v3229, %v3231
        %3233 = vrot.lane.b32.xlu0 %v2723, 16
        %v3234 = vpop.permute.xlu0 %3233
        %3235 = vrot.lane.b32.xlu0 %v2725, 16
        %v3236 = vpop.permute.xlu0 %3235
        %3237 = vrot.lane.b32.xlu0 %v2727, 16
        %v3238 = vpop.permute.xlu0 %3237
        %3239 = vrot.lane.b32.xlu0 %v2729, 16
        %v3240 = vpop.permute.xlu0 %3239
        %3241 = vrot.lane.b32.xlu0 %v2731, 16
        %v3242 = vpop.permute.xlu0 %3241
        %3243 = vrot.lane.b32.xlu0 %v2733, 16
        %v3244 = vpop.permute.xlu0 %3243
        %3245 = vrot.lane.b32.xlu0 %v2735, 16
        %v3246 = vpop.permute.xlu0 %3245
        %3247 = vrot.lane.b32.xlu0 %v2737, 16
        %v3248 = vpop.permute.xlu0 %3247
        %3249 = vrot.lane.b32.xlu0 %v2739, 16
        %v3250 = vpop.permute.xlu0 %3249
        %3251 = vrot.lane.b32.xlu0 %v2741, 16
        %v3252 = vpop.permute.xlu0 %3251
        %3253 = vrot.lane.b32.xlu0 %v2743, 16
        %v3254 = vpop.permute.xlu0 %3253
        %3255 = vrot.lane.b32.xlu0 %v2745, 16
        %v3256 = vpop.permute.xlu0 %3255
        %3257 = vrot.lane.b32.xlu0 %v2747, 16
        %v3258 = vpop.permute.xlu0 %3257
        %3259 = vrot.lane.b32.xlu0 %v2749, 16
        %v3260 = vpop.permute.xlu0 %3259
        %3261 = vrot.lane.b32.xlu0 %v2751, 16
        %v3262 = vpop.permute.xlu0 %3261
        %3263 = vrot.lane.b32.xlu0 %v3230, 16
        %v3264 = vpop.permute.xlu0 %3263
        %3265 = vrot.lane.b32.xlu0 %v3232, 16
        %v3266 = vpop.permute.xlu0 %3265
        %3284 = vst.msk [vmem:[#allocation2 + $0x8] sm:$0xff] %vm1986, %v3234
        %3285 = vst.msk [vmem:[#allocation2 + $0x18] sm:$0xff] %vm1986, %v3236
        %3286 = vst.msk [vmem:[#allocation2 + $0x28] sm:$0xff] %vm1986, %v3238
        %3287 = vst.msk [vmem:[#allocation2 + $0x38] sm:$0xff] %vm1986, %v3240
        %3288 = vst.msk [vmem:[#allocation2 + $0x48] sm:$0xff] %vm1986, %v3242
        %3289 = vst.msk [vmem:[#allocation2 + $0x58] sm:$0xff] %vm1986, %v3244
        %3290 = vst.msk [vmem:[#allocation2 + $0x68] sm:$0xff] %vm1986, %v3246
        %3291 = vst.msk [vmem:[#allocation2 + $0x78] sm:$0xff] %vm1986, %v3248
        %3292 = vst.msk [vmem:[#allocation2 + $0x88] sm:$0xff] %vm1986, %v3250
        %3293 = vst.msk [vmem:[#allocation2 + $0x98] sm:$0xff] %vm1986, %v3252
        %3294 = vst.msk [vmem:[#allocation2 + $0xa8] sm:$0xff] %vm1986, %v3254
        %3295 = vst.msk [vmem:[#allocation2 + $0xb8] sm:$0xff] %vm1986, %v3256
        %3296 = vst.msk [vmem:[#allocation2 + $0xc8] sm:$0xff] %vm1986, %v3258
        %3297 = vst.msk [vmem:[#allocation2 + $0xd8] sm:$0xff] %vm1986, %v3260
        %3298 = vst.msk [vmem:[#allocation2 + $0xe8] sm:$0xff] %vm1986, %v3262
        %3299 = vst.msk [vmem:[#allocation2 + $0xf8] sm:$0xff] %vm1986, %v3264
        %3300 = vst.msk [vmem:[#allocation2 + $0x108] sm:$0xff] %vm1986, %v3266
        %v3301 = vrot.slane %v1754, 6
        %v3302 = vsel %vm2214, %v2823, %v3301
        %v3303 = vrot.slane %v1755, 6
        %v3304 = vsel %vm2214, %v3301, %v3303
        %3305 = vrot.lane.b32.xlu0 %v2225, 24
        %v3306 = vpop.permute.xlu0 %3305
        %3307 = vrot.lane.b32.xlu0 %v2227, 24
        %v3308 = vpop.permute.xlu0 %3307
        %3309 = vrot.lane.b32.xlu0 %v2229, 24
        %v3310 = vpop.permute.xlu0 %3309
        %3311 = vrot.lane.b32.xlu0 %v2231, 24
        %v3312 = vpop.permute.xlu0 %3311
        %3313 = vrot.lane.b32.xlu0 %v2233, 24
        %v3314 = vpop.permute.xlu0 %3313
        %3315 = vrot.lane.b32.xlu0 %v2235, 24
        %v3316 = vpop.permute.xlu0 %3315
        %3317 = vrot.lane.b32.xlu0 %v2237, 24
        %v3318 = vpop.permute.xlu0 %3317
        %3319 = vrot.lane.b32.xlu0 %v2239, 24
        %v3320 = vpop.permute.xlu0 %3319
        %3321 = vrot.lane.b32.xlu0 %v2241, 24
        %v3322 = vpop.permute.xlu0 %3321
        %3323 = vrot.lane.b32.xlu0 %v2243, 24
        %v3324 = vpop.permute.xlu0 %3323
        %3325 = vrot.lane.b32.xlu0 %v2245, 24
        %v3326 = vpop.permute.xlu0 %3325
        %3327 = vrot.lane.b32.xlu0 %v2247, 24
        %v3328 = vpop.permute.xlu0 %3327
        %3329 = vrot.lane.b32.xlu0 %v2249, 24
        %v3330 = vpop.permute.xlu0 %3329
        %3331 = vrot.lane.b32.xlu0 %v2822, 24
        %v3332 = vpop.permute.xlu0 %3331
        %3333 = vrot.lane.b32.xlu0 %v2824, 24
        %v3334 = vpop.permute.xlu0 %3333
        %3335 = vrot.lane.b32.xlu0 %v3302, 24
        %v3336 = vpop.permute.xlu0 %3335
        %3337 = vrot.lane.b32.xlu0 %v3304, 24
        %v3338 = vpop.permute.xlu0 %3337
        %3356 = vst.msk [vmem:[#allocation2 + $0x8] sm:$0xff] %vm2091, %v3306
        %3357 = vst.msk [vmem:[#allocation2 + $0x18] sm:$0xff] %vm2091, %v3308
        %3358 = vst.msk [vmem:[#allocation2 + $0x28] sm:$0xff] %vm2091, %v3310
        %3359 = vst.msk [vmem:[#allocation2 + $0x38] sm:$0xff] %vm2091, %v3312
        %3360 = vst.msk [vmem:[#allocation2 + $0x48] sm:$0xff] %vm2091, %v3314
        %3361 = vst.msk [vmem:[#allocation2 + $0x58] sm:$0xff] %vm2091, %v3316
        %3362 = vst.msk [vmem:[#allocation2 + $0x68] sm:$0xff] %vm2091, %v3318
        %3363 = vst.msk [vmem:[#allocation2 + $0x78] sm:$0xff] %vm2091, %v3320
        %3364 = vst.msk [vmem:[#allocation2 + $0x88] sm:$0xff] %vm2091, %v3322
        %3365 = vst.msk [vmem:[#allocation2 + $0x98] sm:$0xff] %vm2091, %v3324
        %3366 = vst.msk [vmem:[#allocation2 + $0xa8] sm:$0xff] %vm2091, %v3326
        %3367 = vst.msk [vmem:[#allocation2 + $0xb8] sm:$0xff] %vm2091, %v3328
        %3368 = vst.msk [vmem:[#allocation2 + $0xc8] sm:$0xff] %vm2091, %v3330
        %3369 = vst.msk [vmem:[#allocation2 + $0xd8] sm:$0xff] %vm2091, %v3332
        %3370 = vst.msk [vmem:[#allocation2 + $0xe8] sm:$0xff] %vm2091, %v3334
        %3371 = vst.msk [vmem:[#allocation2 + $0xf8] sm:$0xff] %vm2091, %v3336
        %3372 = vst.msk [vmem:[#allocation2 + $0x108] sm:$0xff] %vm2091, %v3338
        %3374 = vrot.lane.b32.xlu0 %v1740, 32
        %v3375 = vpop.permute.xlu0 %3374
        %3376 = vrot.lane.b32.xlu0 %v1741, 32
        %v3377 = vpop.permute.xlu0 %3376
        %3378 = vrot.lane.b32.xlu0 %v1742, 32
        %v3379 = vpop.permute.xlu0 %3378
        %3380 = vrot.lane.b32.xlu0 %v1743, 32
        %v3381 = vpop.permute.xlu0 %3380
        %3382 = vrot.lane.b32.xlu0 %v1744, 32
        %v3383 = vpop.permute.xlu0 %3382
        %3384 = vrot.lane.b32.xlu0 %v1745, 32
        %v3385 = vpop.permute.xlu0 %3384
        %3386 = vrot.lane.b32.xlu0 %v1746, 32
        %v3387 = vpop.permute.xlu0 %3386
        %3388 = vrot.lane.b32.xlu0 %v1747, 32
        %v3389 = vpop.permute.xlu0 %3388
        %3390 = vrot.lane.b32.xlu0 %v1748, 32
        %v3391 = vpop.permute.xlu0 %3390
        %3392 = vrot.lane.b32.xlu0 %v1749, 32
        %v3393 = vpop.permute.xlu0 %3392
        %3394 = vrot.lane.b32.xlu0 %v1750, 32
        %v3395 = vpop.permute.xlu0 %3394
        %3396 = vrot.lane.b32.xlu0 %v1751, 32
        %v3397 = vpop.permute.xlu0 %3396
        %3398 = vrot.lane.b32.xlu0 %v1752, 32
        %v3399 = vpop.permute.xlu0 %3398
        %3400 = vrot.lane.b32.xlu0 %v1753, 32
        %v3401 = vpop.permute.xlu0 %3400
        %3402 = vrot.lane.b32.xlu0 %v1754, 32
        %v3403 = vpop.permute.xlu0 %3402
        %3404 = vrot.lane.b32.xlu0 %v1755, 32
        %v3405 = vpop.permute.xlu0 %3404
        %3406 = vrot.lane.b32.xlu0 %v1756, 32
        %v3407 = vpop.permute.xlu0 %3406
        %3425 = vst.msk [vmem:[#allocation2 + $0x8] sm:$0xff] %vm2195, %v3375
        %3426 = vst.msk [vmem:[#allocation2 + $0x18] sm:$0xff] %vm2195, %v3377
        %3427 = vst.msk [vmem:[#allocation2 + $0x28] sm:$0xff] %vm2195, %v3379
        %3428 = vst.msk [vmem:[#allocation2 + $0x38] sm:$0xff] %vm2195, %v3381
        %3429 = vst.msk [vmem:[#allocation2 + $0x48] sm:$0xff] %vm2195, %v3383
        %3430 = vst.msk [vmem:[#allocation2 + $0x58] sm:$0xff] %vm2195, %v3385
        %3431 = vst.msk [vmem:[#allocation2 + $0x68] sm:$0xff] %vm2195, %v3387
        %3432 = vst.msk [vmem:[#allocation2 + $0x78] sm:$0xff] %vm2195, %v3389
        %3433 = vst.msk [vmem:[#allocation2 + $0x88] sm:$0xff] %vm2195, %v3391
        %3434 = vst.msk [vmem:[#allocation2 + $0x98] sm:$0xff] %vm2195, %v3393
        %3435 = vst.msk [vmem:[#allocation2 + $0xa8] sm:$0xff] %vm2195, %v3395
        %3436 = vst.msk [vmem:[#allocation2 + $0xb8] sm:$0xff] %vm2195, %v3397
        %3437 = vst.msk [vmem:[#allocation2 + $0xc8] sm:$0xff] %vm2195, %v3399
        %3438 = vst.msk [vmem:[#allocation2 + $0xd8] sm:$0xff] %vm2195, %v3401
        %3439 = vst.msk [vmem:[#allocation2 + $0xe8] sm:$0xff] %vm2195, %v3403
        %3440 = vst.msk [vmem:[#allocation2 + $0xf8] sm:$0xff] %vm2195, %v3405
        %3441 = vst.msk [vmem:[#allocation2 + $0x108] sm:$0xff] %vm2195, %v3407
        %v3443 = vrot.slane %v1753, 1
        %v3444 = vsel %vm1794, %v2496, %v3443
        %v3445 = vrot.slane %v1754, 1
        %v3446 = vsel %vm1794, %v3443, %v3445
        %v3447 = vrot.slane %v1755, 1
        %v3448 = vsel %vm1794, %v3445, %v3447
        %v3449 = vrot.slane %v1756, 1
        %v3450 = vsel %vm1794, %v3447, %v3449
        %v3451 = vrot.slane %v1757, 1
        %v3452 = vsel %vm1794, %v3449, %v3451
        %3453 = vrot.lane.b32.xlu0 %v1811, 40
        %v3454 = vpop.permute.xlu0 %3453
        %3455 = vrot.lane.b32.xlu0 %v1813, 40
        %v3456 = vpop.permute.xlu0 %3455
        %3457 = vrot.lane.b32.xlu0 %v1815, 40
        %v3458 = vpop.permute.xlu0 %3457
        %3459 = vrot.lane.b32.xlu0 %v1817, 40
        %v3460 = vpop.permute.xlu0 %3459
        %3461 = vrot.lane.b32.xlu0 %v1819, 40
        %v3462 = vpop.permute.xlu0 %3461
        %3463 = vrot.lane.b32.xlu0 %v1821, 40
        %v3464 = vpop.permute.xlu0 %3463
        %3465 = vrot.lane.b32.xlu0 %v1823, 40
        %v3466 = vpop.permute.xlu0 %3465
        %3467 = vrot.lane.b32.xlu0 %v1825, 40
        %v3468 = vpop.permute.xlu0 %3467
        %3469 = vrot.lane.b32.xlu0 %v1827, 40
        %v3470 = vpop.permute.xlu0 %3469
        %3471 = vrot.lane.b32.xlu0 %v1829, 40
        %v3472 = vpop.permute.xlu0 %3471
        %3473 = vrot.lane.b32.xlu0 %v2495, 40
        %v3474 = vpop.permute.xlu0 %3473
        %3475 = vrot.lane.b32.xlu0 %v2497, 40
        %v3476 = vpop.permute.xlu0 %3475
        %3477 = vrot.lane.b32.xlu0 %v3444, 40
        %v3478 = vpop.permute.xlu0 %3477
        %3479 = vrot.lane.b32.xlu0 %v3446, 40
        %v3480 = vpop.permute.xlu0 %3479
        %3481 = vrot.lane.b32.xlu0 %v3448, 40
        %v3482 = vpop.permute.xlu0 %3481
        %3483 = vrot.lane.b32.xlu0 %v3450, 40
        %v3484 = vpop.permute.xlu0 %3483
        %3485 = vrot.lane.b32.xlu0 %v3452, 40
        %v3486 = vpop.permute.xlu0 %3485
        %3504 = vst.msk [vmem:[#allocation2 + $0x8] sm:$0xff] %vm2301, %v3454
        %3505 = vst.msk [vmem:[#allocation2 + $0x18] sm:$0xff] %vm2301, %v3456
        %3506 = vst.msk [vmem:[#allocation2 + $0x28] sm:$0xff] %vm2301, %v3458
        %3507 = vst.msk [vmem:[#allocation2 + $0x38] sm:$0xff] %vm2301, %v3460
        %3508 = vst.msk [vmem:[#allocation2 + $0x48] sm:$0xff] %vm2301, %v3462
        %3509 = vst.msk [vmem:[#allocation2 + $0x58] sm:$0xff] %vm2301, %v3464
        %3510 = vst.msk [vmem:[#allocation2 + $0x68] sm:$0xff] %vm2301, %v3466
        %3511 = vst.msk [vmem:[#allocation2 + $0x78] sm:$0xff] %vm2301, %v3468
        %3512 = vst.msk [vmem:[#allocation2 + $0x88] sm:$0xff] %vm2301, %v3470
        %3513 = vst.msk [vmem:[#allocation2 + $0x98] sm:$0xff] %vm2301, %v3472
        %3514 = vst.msk [vmem:[#allocation2 + $0xa8] sm:$0xff] %vm2301, %v3474
        %3515 = vst.msk [vmem:[#allocation2 + $0xb8] sm:$0xff] %vm2301, %v3476
        %3516 = vst.msk [vmem:[#allocation2 + $0xc8] sm:$0xff] %vm2301, %v3478
        %3517 = vst.msk [vmem:[#allocation2 + $0xd8] sm:$0xff] %vm2301, %v3480
        %3518 = vst.msk [vmem:[#allocation2 + $0xe8] sm:$0xff] %vm2301, %v3482
        %3519 = vst.msk [vmem:[#allocation2 + $0xf8] sm:$0xff] %vm2301, %v3484
        %3520 = vst.msk [vmem:[#allocation2 + $0x108] sm:$0xff] %vm2301, %v3486
        %v3521 = vrot.slane %v1756, 2
        %v3522 = vsel %vm1899, %v3042, %v3521
        %v3523 = vrot.slane %v1757, 2
        %v3524 = vsel %vm1899, %v3521, %v3523
        %3525 = vrot.lane.b32.xlu0 %v1916, 48
        %v3526 = vpop.permute.xlu0 %3525
        %3527 = vrot.lane.b32.xlu0 %v1918, 48
        %v3528 = vpop.permute.xlu0 %3527
        %3529 = vrot.lane.b32.xlu0 %v1920, 48
        %v3530 = vpop.permute.xlu0 %3529
        %3531 = vrot.lane.b32.xlu0 %v1922, 48
        %v3532 = vpop.permute.xlu0 %3531
        %3533 = vrot.lane.b32.xlu0 %v1924, 48
        %v3534 = vpop.permute.xlu0 %3533
        %3535 = vrot.lane.b32.xlu0 %v1926, 48
        %v3536 = vpop.permute.xlu0 %3535
        %3537 = vrot.lane.b32.xlu0 %v1928, 48
        %v3538 = vpop.permute.xlu0 %3537
        %3539 = vrot.lane.b32.xlu0 %v1930, 48
        %v3540 = vpop.permute.xlu0 %3539
        %3541 = vrot.lane.b32.xlu0 %v1932, 48
        %v3542 = vpop.permute.xlu0 %3541
        %3543 = vrot.lane.b32.xlu0 %v1934, 48
        %v3544 = vpop.permute.xlu0 %3543
        %3545 = vrot.lane.b32.xlu0 %v2568, 48
        %v3546 = vpop.permute.xlu0 %3545
        %3547 = vrot.lane.b32.xlu0 %v2570, 48
        %v3548 = vpop.permute.xlu0 %3547
        %3549 = vrot.lane.b32.xlu0 %v3039, 48
        %v3550 = vpop.permute.xlu0 %3549
        %3551 = vrot.lane.b32.xlu0 %v3041, 48
        %v3552 = vpop.permute.xlu0 %3551
        %3553 = vrot.lane.b32.xlu0 %v3043, 48
        %v3554 = vpop.permute.xlu0 %3553
        %3555 = vrot.lane.b32.xlu0 %v3522, 48
        %v3556 = vpop.permute.xlu0 %3555
        %3557 = vrot.lane.b32.xlu0 %v3524, 48
        %v3558 = vpop.permute.xlu0 %3557
        %3576 = vst.msk [vmem:[#allocation2 + $0x8] sm:$0xff] %vm2406, %v3526
        %3577 = vst.msk [vmem:[#allocation2 + $0x18] sm:$0xff] %vm2406, %v3528
        %3578 = vst.msk [vmem:[#allocation2 + $0x28] sm:$0xff] %vm2406, %v3530
        %3579 = vst.msk [vmem:[#allocation2 + $0x38] sm:$0xff] %vm2406, %v3532
        %3580 = vst.msk [vmem:[#allocation2 + $0x48] sm:$0xff] %vm2406, %v3534
        %3581 = vst.msk [vmem:[#allocation2 + $0x58] sm:$0xff] %vm2406, %v3536
        %3582 = vst.msk [vmem:[#allocation2 + $0x68] sm:$0xff] %vm2406, %v3538
        %3583 = vst.msk [vmem:[#allocation2 + $0x78] sm:$0xff] %vm2406, %v3540
        %3584 = vst.msk [vmem:[#allocation2 + $0x88] sm:$0xff] %vm2406, %v3542
        %3585 = vst.msk [vmem:[#allocation2 + $0x98] sm:$0xff] %vm2406, %v3544
        %3586 = vst.msk [vmem:[#allocation2 + $0xa8] sm:$0xff] %vm2406, %v3546
        %3587 = vst.msk [vmem:[#allocation2 + $0xb8] sm:$0xff] %vm2406, %v3548
        %3588 = vst.msk [vmem:[#allocation2 + $0xc8] sm:$0xff] %vm2406, %v3550
        %3589 = vst.msk [vmem:[#allocation2 + $0xd8] sm:$0xff] %vm2406, %v3552
        %3590 = vst.msk [vmem:[#allocation2 + $0xe8] sm:$0xff] %vm2406, %v3554
        %3591 = vst.msk [vmem:[#allocation2 + $0xf8] sm:$0xff] %vm2406, %v3556
        %3592 = vst.msk [vmem:[#allocation2 + $0x108] sm:$0xff] %vm2406, %v3558
        %v3593 = vrot.slane %v1756, 3
        %v3594 = vsel %vm2004, %v3121, %v3593
        %v3595 = vrot.slane %v1757, 3
        %v3596 = vsel %vm2004, %v3593, %v3595
        %3597 = vrot.lane.b32.xlu0 %v2021, 56
        %v3598 = vpop.permute.xlu0 %3597
        %3599 = vrot.lane.b32.xlu0 %v2023, 56
        %v3600 = vpop.permute.xlu0 %3599
        %3601 = vrot.lane.b32.xlu0 %v2025, 56
        %v3602 = vpop.permute.xlu0 %3601
        %3603 = vrot.lane.b32.xlu0 %v2027, 56
        %v3604 = vpop.permute.xlu0 %3603
        %3605 = vrot.lane.b32.xlu0 %v2029, 56
        %v3606 = vpop.permute.xlu0 %3605
        %3607 = vrot.lane.b32.xlu0 %v2031, 56
        %v3608 = vpop.permute.xlu0 %3607
        %3609 = vrot.lane.b32.xlu0 %v2033, 56
        %v3610 = vpop.permute.xlu0 %3609
        %3611 = vrot.lane.b32.xlu0 %v2035, 56
        %v3612 = vpop.permute.xlu0 %3611
        %3613 = vrot.lane.b32.xlu0 %v2037, 56
        %v3614 = vpop.permute.xlu0 %3613
        %3615 = vrot.lane.b32.xlu0 %v2039, 56
        %v3616 = vpop.permute.xlu0 %3615
        %3617 = vrot.lane.b32.xlu0 %v3114, 56
        %v3618 = vpop.permute.xlu0 %3617
        %3619 = vrot.lane.b32.xlu0 %v3116, 56
        %v3620 = vpop.permute.xlu0 %3619
        %3621 = vrot.lane.b32.xlu0 %v3118, 56
        %v3622 = vpop.permute.xlu0 %3621
        %3623 = vrot.lane.b32.xlu0 %v3120, 56
        %v3624 = vpop.permute.xlu0 %3623
        %3625 = vrot.lane.b32.xlu0 %v3122, 56
        %v3626 = vpop.permute.xlu0 %3625
        %3627 = vrot.lane.b32.xlu0 %v3594, 56
        %v3628 = vpop.permute.xlu0 %3627
        %3629 = vrot.lane.b32.xlu0 %v3596, 56
        %v3630 = vpop.permute.xlu0 %3629
        %3648 = vst.msk [vmem:[#allocation2 + $0x8] sm:$0xff] %vm2475, %v3598
        %3649 = vst.msk [vmem:[#allocation2 + $0x18] sm:$0xff] %vm2475, %v3600
        %3650 = vst.msk [vmem:[#allocation2 + $0x28] sm:$0xff] %vm2475, %v3602
        %3651 = vst.msk [vmem:[#allocation2 + $0x38] sm:$0xff] %vm2475, %v3604
        %3652 = vst.msk [vmem:[#allocation2 + $0x48] sm:$0xff] %vm2475, %v3606
        %3653 = vst.msk [vmem:[#allocation2 + $0x58] sm:$0xff] %vm2475, %v3608
        %3654 = vst.msk [vmem:[#allocation2 + $0x68] sm:$0xff] %vm2475, %v3610
        %3655 = vst.msk [vmem:[#allocation2 + $0x78] sm:$0xff] %vm2475, %v3612
        %3656 = vst.msk [vmem:[#allocation2 + $0x88] sm:$0xff] %vm2475, %v3614
        %3657 = vst.msk [vmem:[#allocation2 + $0x98] sm:$0xff] %vm2475, %v3616
        %3658 = vst.msk [vmem:[#allocation2 + $0xa8] sm:$0xff] %vm2475, %v3618
        %3659 = vst.msk [vmem:[#allocation2 + $0xb8] sm:$0xff] %vm2475, %v3620
        %3660 = vst.msk [vmem:[#allocation2 + $0xc8] sm:$0xff] %vm2475, %v3622
        %3661 = vst.msk [vmem:[#allocation2 + $0xd8] sm:$0xff] %vm2475, %v3624
        %3662 = vst.msk [vmem:[#allocation2 + $0xe8] sm:$0xff] %vm2475, %v3626
        %3663 = vst.msk [vmem:[#allocation2 + $0xf8] sm:$0xff] %vm2475, %v3628
        %3664 = vst.msk [vmem:[#allocation2 + $0x108] sm:$0xff] %vm2475, %v3630
        %v3665 = vrot.slane %v1756, 4
        %v3666 = vsel %vm1509, %v3159, %v3665
        %v3667 = vrot.slane %v1757, 4
        %v3668 = vsel %vm1509, %v3665, %v3667
        %3669 = vrot.lane.b32.xlu0 %v2125, 64
        %v3670 = vpop.permute.xlu0 %3669
        %3671 = vrot.lane.b32.xlu0 %v2127, 64
        %v3672 = vpop.permute.xlu0 %3671
        %3673 = vrot.lane.b32.xlu0 %v2129, 64
        %v3674 = vpop.permute.xlu0 %3673
        %3675 = vrot.lane.b32.xlu0 %v2131, 64
        %v3676 = vpop.permute.xlu0 %3675
        %3677 = vrot.lane.b32.xlu0 %v2133, 64
        %v3678 = vpop.permute.xlu0 %3677
        %3679 = vrot.lane.b32.xlu0 %v2135, 64
        %v3680 = vpop.permute.xlu0 %3679
        %3681 = vrot.lane.b32.xlu0 %v2137, 64
        %v3682 = vpop.permute.xlu0 %3681
        %3683 = vrot.lane.b32.xlu0 %v2139, 64
        %v3684 = vpop.permute.xlu0 %3683
        %3685 = vrot.lane.b32.xlu0 %v2141, 64
        %v3686 = vpop.permute.xlu0 %3685
        %3687 = vrot.lane.b32.xlu0 %v2143, 64
        %v3688 = vpop.permute.xlu0 %3687
        %3689 = vrot.lane.b32.xlu0 %v2642, 64
        %v3690 = vpop.permute.xlu0 %3689
        %3691 = vrot.lane.b32.xlu0 %v2644, 64
        %v3692 = vpop.permute.xlu0 %3691
        %3693 = vrot.lane.b32.xlu0 %v2646, 64
        %v3694 = vpop.permute.xlu0 %3693
        %3695 = vrot.lane.b32.xlu0 %v3158, 64
        %v3696 = vpop.permute.xlu0 %3695
        %3697 = vrot.lane.b32.xlu0 %v3160, 64
        %v3698 = vpop.permute.xlu0 %3697
        %3699 = vrot.lane.b32.xlu0 %v3666, 64
        %v3700 = vpop.permute.xlu0 %3699
        %3701 = vrot.lane.b32.xlu0 %v3668, 64
        %v3702 = vpop.permute.xlu0 %3701
        %3720 = vst.msk [vmem:[#allocation2 + $0x8] sm:$0xff] %vm2549, %v3670
        %3721 = vst.msk [vmem:[#allocation2 + $0x18] sm:$0xff] %vm2549, %v3672
        %3722 = vst.msk [vmem:[#allocation2 + $0x28] sm:$0xff] %vm2549, %v3674
        %3723 = vst.msk [vmem:[#allocation2 + $0x38] sm:$0xff] %vm2549, %v3676
        %3724 = vst.msk [vmem:[#allocation2 + $0x48] sm:$0xff] %vm2549, %v3678
        %3725 = vst.msk [vmem:[#allocation2 + $0x58] sm:$0xff] %vm2549, %v3680
        %3726 = vst.msk [vmem:[#allocation2 + $0x68] sm:$0xff] %vm2549, %v3682
        %3727 = vst.msk [vmem:[#allocation2 + $0x78] sm:$0xff] %vm2549, %v3684
        %3728 = vst.msk [vmem:[#allocation2 + $0x88] sm:$0xff] %vm2549, %v3686
        %3729 = vst.msk [vmem:[#allocation2 + $0x98] sm:$0xff] %vm2549, %v3688
        %3730 = vst.msk [vmem:[#allocation2 + $0xa8] sm:$0xff] %vm2549, %v3690
        %3731 = vst.msk [vmem:[#allocation2 + $0xb8] sm:$0xff] %vm2549, %v3692
        %3732 = vst.msk [vmem:[#allocation2 + $0xc8] sm:$0xff] %vm2549, %v3694
        %3733 = vst.msk [vmem:[#allocation2 + $0xd8] sm:$0xff] %vm2549, %v3696
        %3734 = vst.msk [vmem:[#allocation2 + $0xe8] sm:$0xff] %vm2549, %v3698
        %3735 = vst.msk [vmem:[#allocation2 + $0xf8] sm:$0xff] %vm2549, %v3700
        %3736 = vst.msk [vmem:[#allocation2 + $0x108] sm:$0xff] %vm2549, %v3702
        %v3737 = vld [vmem:[#allocation2] sm:$0xff]
        %v3738 = vld [vmem:[#allocation2 + $0x8] sm:$0xff]
        %v3739 = vld [vmem:[#allocation2 + $0x10] sm:$0xff]
        %v3740 = vld [vmem:[#allocation2 + $0x18] sm:$0xff]
        %v3741 = vld [vmem:[#allocation2 + $0x20] sm:$0xff]
        %v3742 = vld [vmem:[#allocation2 + $0x28] sm:$0xff]
        %v3743 = vld [vmem:[#allocation2 + $0x30] sm:$0xff]
        %v3744 = vld [vmem:[#allocation2 + $0x38] sm:$0xff]
        %v3745 = vld [vmem:[#allocation2 + $0x40] sm:$0xff]
        %v3746 = vld [vmem:[#allocation2 + $0x48] sm:$0xff]
        %v3747 = vld [vmem:[#allocation2 + $0x50] sm:$0xff]
        %v3748 = vld [vmem:[#allocation2 + $0x58] sm:$0xff]
        %v3749 = vld [vmem:[#allocation2 + $0x60] sm:$0xff]
        %v3750 = vld [vmem:[#allocation2 + $0x68] sm:$0xff]
        %v3751 = vld [vmem:[#allocation2 + $0x70] sm:$0xff]
        %v3752 = vld [vmem:[#allocation2 + $0x78] sm:$0xff]
        %v3753 = vld [vmem:[#allocation2 + $0x80] sm:$0xff]
        %v3754 = vld [vmem:[#allocation2 + $0x88] sm:$0xff]
        %v3755 = vld [vmem:[#allocation2 + $0x90] sm:$0xff]
        %v3756 = vld [vmem:[#allocation2 + $0x98] sm:$0xff]
        %v3757 = vld [vmem:[#allocation2 + $0xa0] sm:$0xff]
        %v3758 = vld [vmem:[#allocation2 + $0xa8] sm:$0xff]
        %v3759 = vld [vmem:[#allocation2 + $0xb0] sm:$0xff]
        %v3760 = vld [vmem:[#allocation2 + $0xb8] sm:$0xff]
        %v3761 = vld [vmem:[#allocation2 + $0xc0] sm:$0xff]
        %v3762 = vld [vmem:[#allocation2 + $0xc8] sm:$0xff]
        %v3763 = vld [vmem:[#allocation2 + $0xd0] sm:$0xff]
        %v3764 = vld [vmem:[#allocation2 + $0xd8] sm:$0xff]
        %v3765 = vld [vmem:[#allocation2 + $0xe0] sm:$0xff]
        %v3766 = vld [vmem:[#allocation2 + $0xe8] sm:$0xff]
        %v3767 = vld [vmem:[#allocation2 + $0xf0] sm:$0xff]
        %v3768 = vld [vmem:[#allocation2 + $0xf8] sm:$0xff]
        %v3769 = vld [vmem:[#allocation2 + $0x100] sm:$0xff]
        %v3770 = vld [vmem:[#allocation2 + $0x108] sm:$0xff]
        %v3771 = vld [vmem:[%s3] sm:$0xff]
        %v3772 = vld [vmem:[%s3 + $0x8] sm:$0xff]
        %v3773 = vld [vmem:[%s3 + $0x10] sm:$0xff]
        %v3774 = vld [vmem:[%s3 + $0x18] sm:$0xff]
        %v3775 = vld [vmem:[%s3 + $0x20] sm:$0xff]
        %v3776 = vld [vmem:[%s3 + $0x28] sm:$0xff]
        %v3777 = vld [vmem:[%s3 + $0x30] sm:$0xff]
        %v3778 = vld [vmem:[%s3 + $0x38] sm:$0xff]
        %v3779 = vld [vmem:[%s3 + $0x40] sm:$0xff]
        %v3780 = vld [vmem:[%s3 + $0x48] sm:$0xff]
        %v3781 = vld [vmem:[%s3 + $0x50] sm:$0xff]
        %v3782 = vld [vmem:[%s3 + $0x58] sm:$0xff]
        %v3783 = vld [vmem:[%s3 + $0x60] sm:$0xff]
        %v3784 = vld [vmem:[%s3 + $0x68] sm:$0xff]
        %v3785 = vld [vmem:[%s3 + $0x70] sm:$0xff]
        %v3786 = vld [vmem:[%s3 + $0x78] sm:$0xff]
        %v3787 = vld [vmem:[%s3 + $0x80] sm:$0xff]
        %v3788 = vld [vmem:[%s3 + $0x88] sm:$0xff]
        %v3789 = vld [vmem:[%s3 + $0x90] sm:$0xff]
        %v3790 = vld [vmem:[%s3 + $0x98] sm:$0xff]
        %v3791 = vld [vmem:[%s3 + $0xa0] sm:$0xff]
        %v3792 = vld [vmem:[%s3 + $0xa8] sm:$0xff]
        %v3793 = vld [vmem:[%s3 + $0xb0] sm:$0xff]
        %v3794 = vld [vmem:[%s3 + $0xb8] sm:$0xff]
        %v3795 = vld [vmem:[%s3 + $0xc0] sm:$0xff]
        %v3796 = vld [vmem:[%s4] sm:$0x1]
        %v3798 = vlaneseq
        %v3799 = vshrl.u32 %v3798, 7
        %v3800 = vsub.s32 0, %v3799
        %v3801 = vrot.slane %v3796, %v3800
        %vm3803 = vcmask 588800
        %v3805 = vsel %vm3803, %v3738, 0
        %v3808 = vsel %vm3803, %v3740, 0
        %v3811 = vsel %vm3803, %v3742, 0
        %v3814 = vsel %vm3803, %v3744, 0
        %v3817 = vsel %vm3803, %v3746, 0
        %v3820 = vsel %vm3803, %v3748, 0
        %v3823 = vsel %vm3803, %v3750, 0
        %v3826 = vsel %vm3803, %v3752, 0
        %v3829 = vsel %vm3803, %v3754, 0
        %v3832 = vsel %vm3803, %v3756, 0
        %v3835 = vsel %vm3803, %v3758, 0
        %v3838 = vsel %vm3803, %v3760, 0
        %v3841 = vsel %vm3803, %v3762, 0
        %v3844 = vsel %vm3803, %v3764, 0
        %v3847 = vsel %vm3803, %v3766, 0
        %v3850 = vsel %vm3803, %v3768, 0
        %v3853 = vsel %vm3803, %v3770, 0
        %3855 = vmatprep.subr.mxu0 0.0
        %3856 = vmatpush1.msra.mxu0 %v3771
        %3857 = vmatprep.subr.mxu0 0.0
        %3858 = vmatpush1.msra.mxu0 %v3772
        %3859 = vmatprep.subr.mxu0 0.0
        %3860 = vmatpush1.msra.mxu0 %v3773
        %3861 = vmatprep.subr.mxu0 0.0
        %3862 = vmatpush1.msra.mxu0 %v3774
        %3863 = vmatprep.subr.mxu0 0.0
        %3864 = vmatpush1.msra.mxu0 %v3775
        %3865 = vmatprep.subr.mxu0 0.0
        %3866 = vmatpush1.msra.mxu0 %v3776
        %3867 = vmatprep.subr.mxu0 0.0
        %3868 = vmatpush1.msra.mxu0 %v3777
        %3869 = vmatprep.subr.mxu0 0.0
        %3870 = vmatpush1.msra.mxu0 %v3778
        %3871 = vmatprep.subr.mxu0 0.0
        %3872 = vmatpush1.msra.mxu0 %v3779
        %3873 = vmatprep.subr.mxu0 0.0
        %3874 = vmatpush1.msra.mxu0 %v3780
        %3875 = vmatprep.subr.mxu0 0.0
        %3876 = vmatpush1.msra.mxu0 %v3781
        %3877 = vmatprep.subr.mxu0 0.0
        %3878 = vmatpush1.msra.mxu0 %v3782
        %3879 = vmatprep.subr.mxu0 0.0
        %3880 = vmatpush1.msra.mxu0 %v3783
        %3881 = vmatprep.subr.mxu0 0.0
        %3882 = vmatpush1.msra.mxu0 %v3784
        %3883 = vmatprep.subr.mxu0 0.0
        %3884 = vmatpush1.msra.mxu0 %v3785
        %3885 = vmatprep.subr.mxu0 0.0
        %3886 = vmatpush1.msra.mxu0 %v3786
        %3887 = vmatprep.subr.mxu0 0.0
        %3888 = vmatpush1.msra.mxu0 %v3787
        %3889 = vmatprep.subr.mxu0 0.0
        %3890 = vmatpush1.msra.mxu0 %v3788
        %3891 = vmatprep.subr.mxu0 0.0
        %3892 = vmatpush1.msra.mxu0 %v3789
        %3893 = vmatprep.subr.mxu0 0.0
        %3894 = vmatpush1.msra.mxu0 %v3790
        %3895 = vmatprep.subr.mxu0 0.0
        %3896 = vmatpush1.msra.mxu0 %v3791
        %3897 = vmatprep.subr.mxu0 0.0
        %3898 = vmatpush1.msra.mxu0 %v3792
        %3899 = vmatprep.subr.mxu0 0.0
        %3900 = vmatpush1.msra.mxu0 %v3793
        %3901 = vmatprep.subr.mxu0 0.0
        %3902 = vmatpush1.msra.mxu0 %v3794
        %3903 = vmatprep.subr.mxu0 0.0
        %3904 = vmatpush1.msra.mxu0 %v3795
        %3905 = vmatprep.subr.mxu0 0.0
        %3906 = vmatpush1.msra.mxu0 0.0
        %3907 = vmatprep.subr.mxu0 0.0
        %3908 = vmatpush1.msra.mxu0 0.0
        %3909 = vmatprep.subr.mxu0 0.0
        %3910 = vmatpush1.msra.mxu0 0.0
        %3911 = vmatprep.subr.mxu0 0.0
        %3912 = vmatpush1.msra.mxu0 0.0
        %3913 = vmatprep.subr.mxu0 0.0
        %3914 = vmatpush1.msra.mxu0 0.0
        %3915 = vmatprep.subr.mxu0 0.0
        %3916 = vmatpush1.msra.mxu0 0.0
        %3917 = vmatprep.subr.mxu0 0.0
        %3918 = vmatpush1.msra.mxu0 0.0
        %3919 = vmatprep.mubr.f32.mxu0 %v3805
        %3920 = vmatmul.mubr.f32.gmra.mrb[0].mxu0 %v3737
        %v3921 = vpop.f32.mrb[0].mxu0
        %v3922 = vadd.f32 %v3801, %v3921
        %v3923 = vpop.f32.mrb[0].mxu0
        %3924 = vmatprep.mubr.f32.mxu0 %v3808
        %3925 = vmatmul.mubr.f32.gmra.mrb[0].mxu0 %v3739
        %v3926 = vpop.f32.mrb[0].mxu0
        %v3927 = vadd.f32 %v3801, %v3926
        %v3928 = vpop.f32.mrb[0].mxu0
        %3929 = vmatprep.mubr.f32.mxu0 %v3811
        %3930 = vmatmul.mubr.f32.gmra.mrb[0].mxu0 %v3741
        %v3931 = vpop.f32.mrb[0].mxu0
        %v3932 = vadd.f32 %v3801, %v3931
        %v3933 = vpop.f32.mrb[0].mxu0
        %3934 = vmatprep.mubr.f32.mxu0 %v3814
        %3935 = vmatmul.mubr.f32.gmra.mrb[0].mxu0 %v3743
        %v3936 = vpop.f32.mrb[0].mxu0
        %v3937 = vadd.f32 %v3801, %v3936
        %v3938 = vpop.f32.mrb[0].mxu0
        %3939 = vmatprep.mubr.f32.mxu0 %v3817
        %3940 = vmatmul.mubr.f32.gmra.mrb[0].mxu0 %v3745
        %v3941 = vpop.f32.mrb[0].mxu0
        %v3942 = vadd.f32 %v3801, %v3941
        %v3943 = vpop.f32.mrb[0].mxu0
        %3944 = vmatprep.mubr.f32.mxu0 %v3820
        %3945 = vmatmul.mubr.f32.gmra.mrb[0].mxu0 %v3747
        %v3946 = vpop.f32.mrb[0].mxu0
        %v3947 = vadd.f32 %v3801, %v3946
        %v3948 = vpop.f32.mrb[0].mxu0
        %3949 = vmatprep.mubr.f32.mxu0 %v3823
        %3950 = vmatmul.mubr.f32.gmra.mrb[0].mxu0 %v3749
        %v3951 = vpop.f32.mrb[0].mxu0
        %v3952 = vadd.f32 %v3801, %v3951
        %v3953 = vpop.f32.mrb[0].mxu0
        %3954 = vmatprep.mubr.f32.mxu0 %v3826
        %3955 = vmatmul.mubr.f32.gmra.mrb[0].mxu0 %v3751
        %v3956 = vpop.f32.mrb[0].mxu0
        %v3957 = vadd.f32 %v3801, %v3956
        %v3958 = vpop.f32.mrb[0].mxu0
        %3959 = vmatprep.mubr.f32.mxu0 %v3829
        %3960 = vmatmul.mubr.f32.gmra.mrb[0].mxu0 %v3753
        %v3961 = vpop.f32.mrb[0].mxu0
        %v3962 = vadd.f32 %v3801, %v3961
        %v3963 = vpop.f32.mrb[0].mxu0
        %3964 = vmatprep.mubr.f32.mxu0 %v3832
        %3965 = vmatmul.mubr.f32.gmra.mrb[0].mxu0 %v3755
        %v3966 = vpop.f32.mrb[0].mxu0
        %v3967 = vadd.f32 %v3801, %v3966
        %v3968 = vpop.f32.mrb[0].mxu0
        %3969 = vmatprep.mubr.f32.mxu0 %v3835
        %3970 = vmatmul.mubr.f32.gmra.mrb[0].mxu0 %v3757
        %v3971 = vpop.f32.mrb[0].mxu0
        %v3972 = vadd.f32 %v3801, %v3971
        %v3973 = vpop.f32.mrb[0].mxu0
        %3974 = vmatprep.mubr.f32.mxu0 %v3838
        %3975 = vmatmul.mubr.f32.gmra.mrb[0].mxu0 %v3759
        %v3976 = vpop.f32.mrb[0].mxu0
        %v3977 = vadd.f32 %v3801, %v3976
        %v3978 = vpop.f32.mrb[0].mxu0
        %3979 = vmatprep.mubr.f32.mxu0 %v3841
        %3980 = vmatmul.mubr.f32.gmra.mrb[0].mxu0 %v3761
        %v3981 = vpop.f32.mrb[0].mxu0
        %v3982 = vadd.f32 %v3801, %v3981
        %v3983 = vpop.f32.mrb[0].mxu0
        %3984 = vmatprep.mubr.f32.mxu0 %v3844
        %3985 = vmatmul.mubr.f32.gmra.mrb[0].mxu0 %v3763
        %v3986 = vpop.f32.mrb[0].mxu0
        %v3987 = vadd.f32 %v3801, %v3986
        %v3988 = vpop.f32.mrb[0].mxu0
        %3989 = vmatprep.mubr.f32.mxu0 %v3847
        %3990 = vmatmul.mubr.f32.gmra.mrb[0].mxu0 %v3765
        %v3991 = vpop.f32.mrb[0].mxu0
        %v3992 = vadd.f32 %v3801, %v3991
        %v3993 = vpop.f32.mrb[0].mxu0
        %3994 = vmatprep.mubr.f32.mxu0 %v3850
        %3995 = vmatmul.mubr.f32.gmra.mrb[0].mxu0 %v3767
        %v3996 = vpop.f32.mrb[0].mxu0
        %v3997 = vadd.f32 %v3801, %v3996
        %v3998 = vpop.f32.mrb[0].mxu0
        %3999 = vmatprep.mubr.f32.mxu0 %v3853
        %4000 = vmatmul.mubr.f32.gmra.mrb[0].mxu0 %v3769
        %v4001 = vpop.f32.mrb[0].mxu0
        %v4002 = vadd.f32 %v3801, %v4001
        %v4003 = vpop.f32.mrb[0].mxu0
        %4004 = vdwg.mxu0
        %v4005 = vmax.f32 %v3922, 0.0
        %v4006 = vmax.f32 %v3927, 0.0
        %v4007 = vmax.f32 %v3932, 0.0
        %v4008 = vmax.f32 %v3937, 0.0
        %v4009 = vmax.f32 %v3942, 0.0
        %v4010 = vmax.f32 %v3947, 0.0
        %v4011 = vmax.f32 %v3952, 0.0
        %v4012 = vmax.f32 %v3957, 0.0
        %v4013 = vmax.f32 %v3962, 0.0
        %v4014 = vmax.f32 %v3967, 0.0
        %v4015 = vmax.f32 %v3972, 0.0
        %v4016 = vmax.f32 %v3977, 0.0
        %v4017 = vmax.f32 %v3982, 0.0
        %v4018 = vmax.f32 %v3987, 0.0
        %v4019 = vmax.f32 %v3992, 0.0
        %v4020 = vmax.f32 %v3997, 0.0
        %v4021 = vmax.f32 %v4002, 0.0
        %v4039 = vrot.slane %v4005, 1
        %v4040 = vrot.slane %v4006, 1
        %v4041 = vsel %vm1794, %v4039, %v4040
        %v4042 = vrot.slane %v4007, 1
        %v4043 = vsel %vm1794, %v4040, %v4042
        %v4044 = vrot.slane %v4008, 1
        %v4045 = vsel %vm1794, %v4042, %v4044
        %v4046 = vrot.slane %v4009, 1
        %v4047 = vsel %vm1794, %v4044, %v4046
        %v4048 = vrot.slane %v4010, 1
        %v4049 = vsel %vm1794, %v4046, %v4048
        %v4050 = vrot.slane %v4011, 1
        %v4051 = vsel %vm1794, %v4048, %v4050
        %v4052 = vrot.slane %v4012, 1
        %v4053 = vsel %vm1794, %v4050, %v4052
        %v4054 = vrot.slane %v4013, 1
        %v4055 = vsel %vm1794, %v4052, %v4054
        %v4056 = vrot.slane %v4014, 1
        %v4057 = vsel %vm1794, %v4054, %v4056
        %v4058 = vrot.slane %v4015, 1
        %v4059 = vsel %vm1794, %v4056, %v4058
        %v4060 = vrot.slane %v4016, 1
        %v4061 = vsel %vm1794, %v4058, %v4060
        %v4062 = vrot.slane %v4017, 1
        %v4063 = vsel %vm1794, %v4060, %v4062
        %v4064 = vrot.slane %v4018, 1
        %v4065 = vsel %vm1794, %v4062, %v4064
        %v4066 = vrot.slane %v4019, 1
        %v4067 = vsel %vm1794, %v4064, %v4066
        %v4068 = vrot.slane %v4020, 1
        %v4069 = vsel %vm1794, %v4066, %v4068
        %v4070 = vrot.slane %v4021, 1
        %v4071 = vsel %vm1794, %v4068, %v4070
        %v4089 = vmax.f32 %v4005, %v4041
        %v4090 = vmax.f32 %v4006, %v4043
        %v4091 = vmax.f32 %v4007, %v4045
        %v4092 = vmax.f32 %v4008, %v4047
        %v4093 = vmax.f32 %v4009, %v4049
        %v4094 = vmax.f32 %v4010, %v4051
        %v4095 = vmax.f32 %v4011, %v4053
        %v4096 = vmax.f32 %v4012, %v4055
        %v4097 = vmax.f32 %v4013, %v4057
        %v4098 = vmax.f32 %v4014, %v4059
        %v4099 = vmax.f32 %v4015, %v4061
        %v4100 = vmax.f32 %v4016, %v4063
        %v4101 = vmax.f32 %v4017, %v4065
        %v4102 = vmax.f32 %v4018, %v4067
        %v4103 = vmax.f32 %v4019, %v4069
        %v4104 = vmax.f32 %v4020, %v4071
        %v4105 = vmax.f32 %v4021, %v4070
        %v4120 = vrot.slane %v4090, 6
        %v4121 = vrot.slane %v4091, 6
        %v4122 = vsel %vm2214, %v4120, %v4121
        %v4123 = vrot.slane %v4092, 6
        %v4124 = vsel %vm2214, %v4121, %v4123
        %v4125 = vrot.slane %v4093, 6
        %v4126 = vrot.slane %v4094, 6
        %v4127 = vsel %vm2214, %v4125, %v4126
        %v4128 = vrot.slane %v4095, 6
        %v4129 = vsel %vm2214, %v4126, %v4128
        %v4130 = vrot.slane %v4097, 6
        %v4131 = vrot.slane %v4098, 6
        %v4132 = vsel %vm2214, %v4130, %v4131
        %v4133 = vrot.slane %v4099, 6
        %v4134 = vsel %vm2214, %v4131, %v4133
        %v4135 = vrot.slane %v4100, 6
        %v4136 = vrot.slane %v4101, 6
        %v4137 = vsel %vm2214, %v4135, %v4136
        %v4138 = vrot.slane %v4102, 6
        %v4139 = vsel %vm2214, %v4136, %v4138
        %v4140 = vrot.slane %v4104, 6
        %v4141 = vrot.slane %v4105, 6
        %v4142 = vsel %vm2214, %v4140, %v4141
        %v4153 = vmax.f32 %v4089, %v4122
        %v4154 = vmax.f32 %v4090, %v4124
        %v4155 = vmax.f32 %v4092, %v4127
        %v4156 = vmax.f32 %v4093, %v4129
        %v4157 = vmax.f32 %v4096, %v4132
        %v4158 = vmax.f32 %v4097, %v4134
        %v4159 = vmax.f32 %v4099, %v4137
        %v4160 = vmax.f32 %v4100, %v4139
        %v4161 = vmax.f32 %v4103, %v4142
        %v4162 = vmax.f32 %v4104, %v4141
        %v4163 = vlaneseq
        %vm4164 = vcmp.ge.s32.totalorder %v4163, 0
        %vm4165 = vcmp.lt.s32.totalorder %v4163, 16
        %vm4166 = vmand %vm4164, %vm4165
        %4167 = vst.msk [vmem:[#allocation3] sm:$0x1] %vm4166, %v4153
        %v4170 = vunpack.c.l.s4 1966171168
        %v4171 = vunpack.c.0.s8 %v4170
        %v4172 = vlaneseq
        %v4173 = vshrl.u32 %v4172, 7
        %v4174 = vsub.s32 %v4171, %v4173
        %v4175 = vrot.slane %v4153, %v4174
        %v4177 = vunpack.c.l.s4 1966171168
        %v4178 = vunpack.c.0.s8 %v4177
        %v4179 = vlaneseq
        %v4180 = vshrl.u32 %v4179, 7
        %v4181 = vsub.s32 %v4178, %v4180
        %v4182 = vrot.slane %v4175, %v4181
        %v4183 = vcombine.high %v4182, %v4182
        %4184 = vrot.lane.b32.xlu0 %v4183, 16
        %v4185 = vpop.permute.xlu0 %4184
        %vm4187 = vcmp.ge.s32.totalorder %v4163, 16
        %vm4188 = vcmp.lt.s32.totalorder %v4163, 32
        %vm4189 = vmand %vm4187, %vm4188
        %4190 = vst.msk [vmem:[#allocation3] sm:$0x1] %vm4189, %v4185
        %v4191 = vcombine.high %v4153, %v4153
        %v4193 = vunpack.c.l.s4 1966171168
        %v4194 = vunpack.c.0.s8 %v4193
        %v4195 = vlaneseq
        %v4196 = vshrl.u32 %v4195, 7
        %v4197 = vsub.s32 %v4194, %v4196
        %v4198 = vrot.slane %v4191, %v4197
        %v4200 = vunpack.c.l.s4 1966171168
        %v4201 = vunpack.c.0.s8 %v4200
        %v4202 = vlaneseq
        %v4203 = vshrl.u32 %v4202, 7
        %v4204 = vsub.s32 %v4201, %v4203
        %v4205 = vrot.slane %v4198, %v4204
        %4206 = vrot.lane.b32.xlu0 %v4205, 32
        %v4207 = vpop.permute.xlu0 %4206
        %vm4209 = vcmp.ge.s32.totalorder %v4163, 32
        %vm4210 = vcmp.lt.s32.totalorder %v4163, 48
        %vm4211 = vmand %vm4209, %vm4210
        %4212 = vst.msk [vmem:[#allocation3] sm:$0x1] %vm4211, %v4207
        %v4213 = vcombine.high %v4205, %v4205
        %4214 = vrot.lane.b32.xlu0 %v4213, 48
        %v4215 = vpop.permute.xlu0 %4214
        %vm4217 = vcmp.ge.s32.totalorder %v4163, 48
        %vm4218 = vcmp.lt.s32.totalorder %v4163, 64
        %vm4219 = vmand %vm4217, %vm4218
        %4220 = vst.msk [vmem:[#allocation3] sm:$0x1] %vm4219, %v4215
        %v4223 = vunpack.c.l.s4 1966171168
        %v4224 = vunpack.c.0.s8 %v4223
        %v4225 = vlaneseq
        %v4226 = vshrl.u32 %v4225, 7
        %v4227 = vsub.s32 %v4224, %v4226
        %v4228 = vrot.slane %v4154, %v4227
        %v4230 = vunpack.c.l.s4 1966171168
        %v4231 = vunpack.c.0.s8 %v4230
        %v4232 = vlaneseq
        %v4233 = vshrl.u32 %v4232, 7
        %v4234 = vsub.s32 %v4231, %v4233
        %v4235 = vrot.slane %v4228, %v4234
        %4236 = vrot.lane.b32.xlu0 %v4235, 64
        %v4237 = vpop.permute.xlu0 %4236
        %vm4239 = vcmp.ge.s32.totalorder %v4163, 64
        %vm4240 = vcmp.lt.s32.totalorder %v4163, 80
        %vm4241 = vmand %vm4239, %vm4240
        %4242 = vst.msk [vmem:[#allocation3] sm:$0x1] %vm4241, %v4237
        %v4244 = vcombine.high %v4155, %v4155
        %v4246 = vunpack.c.l.s4 1966171168
        %v4247 = vunpack.c.0.s8 %v4246
        %v4248 = vlaneseq
        %v4249 = vshrl.u32 %v4248, 7
        %v4250 = vsub.s32 %v4247, %v4249
        %v4251 = vrot.slane %v4244, %v4250
        %v4253 = vunpack.c.l.s4 1966171168
        %v4254 = vunpack.c.0.s8 %v4253
        %v4255 = vlaneseq
        %v4256 = vshrl.u32 %v4255, 7
        %v4257 = vsub.s32 %v4254, %v4256
        %v4258 = vrot.slane %v4251, %v4257
        %4259 = vrot.lane.b32.xlu0 %v4258, 80
        %v4260 = vpop.permute.xlu0 %4259
        %vm4262 = vcmp.ge.s32.totalorder %v4163, 80
        %vm4263 = vcmp.lt.s32.totalorder %v4163, 96
        %vm4264 = vmand %vm4262, %vm4263
        %4265 = vst.msk [vmem:[#allocation3] sm:$0x1] %vm4264, %v4260
        %v4266 = vcombine.high %v4258, %v4258
        %4267 = vrot.lane.b32.xlu0 %v4266, 96
        %v4268 = vpop.permute.xlu0 %4267
        %vm4270 = vcmp.ge.s32.totalorder %v4163, 96
        %vm4271 = vcmp.lt.s32.totalorder %v4163, 112
        %vm4272 = vmand %vm4270, %vm4271
        %4273 = vst.msk [vmem:[#allocation3] sm:$0x1] %vm4272, %v4268
        %v4276 = vunpack.c.l.s4 1966171168
        %v4277 = vunpack.c.0.s8 %v4276
        %v4278 = vlaneseq
        %v4279 = vshrl.u32 %v4278, 7
        %v4280 = vsub.s32 %v4277, %v4279
        %v4281 = vrot.slane %v4156, %v4280
        %v4283 = vunpack.c.l.s4 1966171168
        %v4284 = vunpack.c.0.s8 %v4283
        %v4285 = vlaneseq
        %v4286 = vshrl.u32 %v4285, 7
        %v4287 = vsub.s32 %v4284, %v4286
        %v4288 = vrot.slane %v4281, %v4287
        %4289 = vrot.lane.b32.xlu0 %v4288, 112
        %v4290 = vpop.permute.xlu0 %4289
        %vm4292 = vcmp.ge.s32.totalorder %v4163, 112
        %vm4293 = vcmp.lt.s32.totalorder %v4163, 128
        %vm4294 = vmand %vm4292, %vm4293
        %4295 = vst.msk [vmem:[#allocation3] sm:$0x1] %vm4294, %v4290
        %v4296 = vcombine.high %v4288, %v4288
        %4298 = vst.msk [vmem:[#allocation3 + $0x1] sm:$0x1] %vm4166, %v4296
        %v4299 = vcombine.high %v4156, %v4156
        %v4301 = vunpack.c.l.s4 1966171168
        %v4302 = vunpack.c.0.s8 %v4301
        %v4303 = vlaneseq
        %v4304 = vshrl.u32 %v4303, 7
        %v4305 = vsub.s32 %v4302, %v4304
        %v4306 = vrot.slane %v4299, %v4305
        %v4308 = vunpack.c.l.s4 1966171168
        %v4309 = vunpack.c.0.s8 %v4308
        %v4310 = vlaneseq
        %v4311 = vshrl.u32 %v4310, 7
        %v4312 = vsub.s32 %v4309, %v4311
        %v4313 = vrot.slane %v4306, %v4312
        %4314 = vrot.lane.b32.xlu0 %v4313, 16
        %v4315 = vpop.permute.xlu0 %4314
        %4317 = vst.msk [vmem:[#allocation3 + $0x1] sm:$0x1] %vm4189, %v4315
        %v4320 = vunpack.c.l.s4 1966171168
        %v4321 = vunpack.c.0.s8 %v4320
        %v4322 = vlaneseq
        %v4323 = vshrl.u32 %v4322, 7
        %v4324 = vsub.s32 %v4321, %v4323
        %v4325 = vrot.slane %v4157, %v4324
        %v4327 = vunpack.c.l.s4 1966171168
        %v4328 = vunpack.c.0.s8 %v4327
        %v4329 = vlaneseq
        %v4330 = vshrl.u32 %v4329, 7
        %v4331 = vsub.s32 %v4328, %v4330
        %v4332 = vrot.slane %v4325, %v4331
        %4333 = vrot.lane.b32.xlu0 %v4332, 32
        %v4334 = vpop.permute.xlu0 %4333
        %4336 = vst.msk [vmem:[#allocation3 + $0x1] sm:$0x1] %vm4211, %v4334
        %v4337 = vcombine.high %v4332, %v4332
        %4338 = vrot.lane.b32.xlu0 %v4337, 48
        %v4339 = vpop.permute.xlu0 %4338
        %4341 = vst.msk [vmem:[#allocation3 + $0x1] sm:$0x1] %vm4219, %v4339
        %v4342 = vcombine.high %v4157, %v4157
        %v4344 = vunpack.c.l.s4 1966171168
        %v4345 = vunpack.c.0.s8 %v4344
        %v4346 = vlaneseq
        %v4347 = vshrl.u32 %v4346, 7
        %v4348 = vsub.s32 %v4345, %v4347
        %v4349 = vrot.slane %v4342, %v4348
        %v4351 = vunpack.c.l.s4 1966171168
        %v4352 = vunpack.c.0.s8 %v4351
        %v4353 = vlaneseq
        %v4354 = vshrl.u32 %v4353, 7
        %v4355 = vsub.s32 %v4352, %v4354
        %v4356 = vrot.slane %v4349, %v4355
        %4357 = vrot.lane.b32.xlu0 %v4356, 64
        %v4358 = vpop.permute.xlu0 %4357
        %4360 = vst.msk [vmem:[#allocation3 + $0x1] sm:$0x1] %vm4241, %v4358
        %v4361 = vcombine.high %v4356, %v4356
        %4362 = vrot.lane.b32.xlu0 %v4361, 80
        %v4363 = vpop.permute.xlu0 %4362
        %4365 = vst.msk [vmem:[#allocation3 + $0x1] sm:$0x1] %vm4264, %v4363
        %v4368 = vunpack.c.l.s4 1966171168
        %v4369 = vunpack.c.0.s8 %v4368
        %v4370 = vlaneseq
        %v4371 = vshrl.u32 %v4370, 7
        %v4372 = vsub.s32 %v4369, %v4371
        %v4373 = vrot.slane %v4158, %v4372
        %v4375 = vunpack.c.l.s4 1966171168
        %v4376 = vunpack.c.0.s8 %v4375
        %v4377 = vlaneseq
        %v4378 = vshrl.u32 %v4377, 7
        %v4379 = vsub.s32 %v4376, %v4378
        %v4380 = vrot.slane %v4373, %v4379
        %4381 = vrot.lane.b32.xlu0 %v4380, 96
        %v4382 = vpop.permute.xlu0 %4381
        %4384 = vst.msk [vmem:[#allocation3 + $0x1] sm:$0x1] %vm4272, %v4382
        %v4386 = vcombine.high %v4159, %v4159
        %v4388 = vunpack.c.l.s4 1966171168
        %v4389 = vunpack.c.0.s8 %v4388
        %v4390 = vlaneseq
        %v4391 = vshrl.u32 %v4390, 7
        %v4392 = vsub.s32 %v4389, %v4391
        %v4393 = vrot.slane %v4386, %v4392
        %v4395 = vunpack.c.l.s4 1966171168
        %v4396 = vunpack.c.0.s8 %v4395
        %v4397 = vlaneseq
        %v4398 = vshrl.u32 %v4397, 7
        %v4399 = vsub.s32 %v4396, %v4398
        %v4400 = vrot.slane %v4393, %v4399
        %4401 = vrot.lane.b32.xlu0 %v4400, 112
        %v4402 = vpop.permute.xlu0 %4401
        %4404 = vst.msk [vmem:[#allocation3 + $0x1] sm:$0x1] %vm4294, %v4402
        %v4405 = vcombine.high %v4400, %v4400
        %4407 = vst.msk [vmem:[#allocation3 + $0x2] sm:$0x1] %vm4166, %v4405
        %v4410 = vunpack.c.l.s4 1966171168
        %v4411 = vunpack.c.0.s8 %v4410
        %v4412 = vlaneseq
        %v4413 = vshrl.u32 %v4412, 7
        %v4414 = vsub.s32 %v4411, %v4413
        %v4415 = vrot.slane %v4160, %v4414
        %v4417 = vunpack.c.l.s4 1966171168
        %v4418 = vunpack.c.0.s8 %v4417
        %v4419 = vlaneseq
        %v4420 = vshrl.u32 %v4419, 7
        %v4421 = vsub.s32 %v4418, %v4420
        %v4422 = vrot.slane %v4415, %v4421
        %4423 = vrot.lane.b32.xlu0 %v4422, 16
        %v4424 = vpop.permute.xlu0 %4423
        %4426 = vst.msk [vmem:[#allocation3 + $0x2] sm:$0x1] %vm4189, %v4424
        %v4427 = vcombine.high %v4422, %v4422
        %4428 = vrot.lane.b32.xlu0 %v4427, 32
        %v4429 = vpop.permute.xlu0 %4428
        %4431 = vst.msk [vmem:[#allocation3 + $0x2] sm:$0x1] %vm4211, %v4429
        %v4432 = vcombine.high %v4160, %v4160
        %v4434 = vunpack.c.l.s4 1966171168
        %v4435 = vunpack.c.0.s8 %v4434
        %v4436 = vlaneseq
        %v4437 = vshrl.u32 %v4436, 7
        %v4438 = vsub.s32 %v4435, %v4437
        %v4439 = vrot.slane %v4432, %v4438
        %v4441 = vunpack.c.l.s4 1966171168
        %v4442 = vunpack.c.0.s8 %v4441
        %v4443 = vlaneseq
        %v4444 = vshrl.u32 %v4443, 7
        %v4445 = vsub.s32 %v4442, %v4444
        %v4446 = vrot.slane %v4439, %v4445
        %4447 = vrot.lane.b32.xlu0 %v4446, 48
        %v4448 = vpop.permute.xlu0 %4447
        %4450 = vst.msk [vmem:[#allocation3 + $0x2] sm:$0x1] %vm4219, %v4448
        %v4453 = vunpack.c.l.s4 1966171168
        %v4454 = vunpack.c.0.s8 %v4453
        %v4455 = vlaneseq
        %v4456 = vshrl.u32 %v4455, 7
        %v4457 = vsub.s32 %v4454, %v4456
        %v4458 = vrot.slane %v4161, %v4457
        %v4460 = vunpack.c.l.s4 1966171168
        %v4461 = vunpack.c.0.s8 %v4460
        %v4462 = vlaneseq
        %v4463 = vshrl.u32 %v4462, 7
        %v4464 = vsub.s32 %v4461, %v4463
        %v4465 = vrot.slane %v4458, %v4464
        %4466 = vrot.lane.b32.xlu0 %v4465, 64
        %v4467 = vpop.permute.xlu0 %4466
        %4469 = vst.msk [vmem:[#allocation3 + $0x2] sm:$0x1] %vm4241, %v4467
        %v4470 = vcombine.high %v4465, %v4465
        %4471 = vrot.lane.b32.xlu0 %v4470, 80
        %v4472 = vpop.permute.xlu0 %4471
        %4474 = vst.msk [vmem:[#allocation3 + $0x2] sm:$0x1] %vm4264, %v4472
        %v4475 = vcombine.high %v4161, %v4161
        %v4477 = vunpack.c.l.s4 1966171168
        %v4478 = vunpack.c.0.s8 %v4477
        %v4479 = vlaneseq
        %v4480 = vshrl.u32 %v4479, 7
        %v4481 = vsub.s32 %v4478, %v4480
        %v4482 = vrot.slane %v4475, %v4481
        %v4484 = vunpack.c.l.s4 1966171168
        %v4485 = vunpack.c.0.s8 %v4484
        %v4486 = vlaneseq
        %v4487 = vshrl.u32 %v4486, 7
        %v4488 = vsub.s32 %v4485, %v4487
        %v4489 = vrot.slane %v4482, %v4488
        %4490 = vrot.lane.b32.xlu0 %v4489, 96
        %v4491 = vpop.permute.xlu0 %4490
        %4493 = vst.msk [vmem:[#allocation3 + $0x2] sm:$0x1] %vm4272, %v4491
        %v4494 = vcombine.high %v4489, %v4489
        %4495 = vrot.lane.b32.xlu0 %v4494, 112
        %v4496 = vpop.permute.xlu0 %4495
        %4498 = vst.msk [vmem:[#allocation3 + $0x2] sm:$0x1] %vm4294, %v4496
        %4499 = vst.msk [vmem:[#allocation3 + $0x3] sm:$0x1] %vm4166, %v4162
        %v4500 = vld [vmem:[#allocation3] sm:$0xf]
        %v4501 = vld [vmem:[%s5] sm:$0xff]
        %v4502 = vld [vmem:[%s5 + $0x8] sm:$0xff]
        %v4503 = vld [vmem:[%s5 + $0x10] sm:$0xff]
        %v4504 = vld [vmem:[%s5 + $0x18] sm:$0xff]
        %v4505 = vld [vmem:[%s5 + $0x20] sm:$0xff]
        %v4506 = vld [vmem:[%s5 + $0x28] sm:$0xff]
        %v4507 = vld [vmem:[%s5 + $0x30] sm:$0xff]
        %v4508 = vld [vmem:[%s5 + $0x38] sm:$0xff]
        %v4509 = vld [vmem:[%s5 + $0x40] sm:$0xff]
        %v4510 = vld [vmem:[%s5 + $0x48] sm:$0xff]
        %v4511 = vld [vmem:[%s5 + $0x50] sm:$0xff]
        %v4512 = vld [vmem:[%s5 + $0x58] sm:$0xff]
        %v4513 = vld [vmem:[%s5 + $0x60] sm:$0xff]
        %v4514 = vld [vmem:[%s5 + $0x68] sm:$0xff]
        %v4515 = vld [vmem:[%s5 + $0x70] sm:$0xff]
        %v4516 = vld [vmem:[%s5 + $0x78] sm:$0xff]
        %v4517 = vld [vmem:[%s5 + $0x80] sm:$0xff]
        %v4518 = vld [vmem:[%s5 + $0x88] sm:$0xff]
        %v4519 = vld [vmem:[%s5 + $0x90] sm:$0xff]
        %v4520 = vld [vmem:[%s5 + $0x98] sm:$0xff]
        %v4521 = vld [vmem:[%s5 + $0xa0] sm:$0xff]
        %v4522 = vld [vmem:[%s5 + $0xa8] sm:$0xff]
        %v4523 = vld [vmem:[%s5 + $0xb0] sm:$0xff]
        %v4524 = vld [vmem:[%s5 + $0xb8] sm:$0xff]
        %v4525 = vld [vmem:[%s5 + $0xc0] sm:$0xff]
        %v4526 = vld [vmem:[%s5 + $0xc8] sm:$0xff]
        %v4527 = vld [vmem:[%s5 + $0xd0] sm:$0xff]
        %v4528 = vld [vmem:[%s5 + $0xd8] sm:$0xff]
        %v4529 = vld [vmem:[%s5 + $0xe0] sm:$0xff]
        %v4530 = vld [vmem:[%s5 + $0xe8] sm:$0xff]
        %v4531 = vld [vmem:[%s5 + $0xf0] sm:$0xff]
        %v4532 = vld [vmem:[%s5 + $0xf8] sm:$0xff]
        %v4533 = vld [vmem:[%s5 + $0x100] sm:$0xff]
        %v4534 = vld [vmem:[%s5 + $0x108] sm:$0xff]
        %v4535 = vld [vmem:[%s5 + $0x110] sm:$0xff]
        %v4536 = vld [vmem:[%s5 + $0x118] sm:$0xff]
        %v4537 = vld [vmem:[%s5 + $0x120] sm:$0xff]
        %v4538 = vld [vmem:[%s5 + $0x128] sm:$0xff]
        %v4539 = vld [vmem:[%s5 + $0x130] sm:$0xff]
        %v4540 = vld [vmem:[%s5 + $0x138] sm:$0xff]
        %v4541 = vld [vmem:[%s5 + $0x140] sm:$0xff]
        %v4542 = vld [vmem:[%s5 + $0x148] sm:$0xff]
        %v4543 = vld [vmem:[%s5 + $0x150] sm:$0xff]
        %v4544 = vld [vmem:[%s5 + $0x158] sm:$0xff]
        %v4545 = vld [vmem:[%s5 + $0x160] sm:$0xff]
        %v4546 = vld [vmem:[%s5 + $0x168] sm:$0xff]
        %v4547 = vld [vmem:[%s5 + $0x170] sm:$0xff]
        %v4548 = vld [vmem:[%s5 + $0x178] sm:$0xff]
        %v4549 = vld [vmem:[%s5 + $0x180] sm:$0xff]
        %v4550 = vld [vmem:[%s5 + $0x188] sm:$0xff]
        %v4551 = vld [vmem:[%s6] sm:$0x1]
        %v4553 = vlaneseq
        %v4554 = vshrl.u32 %v4553, 7
        %v4555 = vsub.s32 0, %v4554
        %v4556 = vrot.slane %v4500, %v4555
        %v4557 = vlaneseq
        %v4558 = vshrl.u32 %v4557, 7
        %v4559 = vsub.s32 1, %v4558
        %v4560 = vrot.slane %v4500, %v4559
        %v4561 = vlaneseq
        %v4562 = vshrl.u32 %v4561, 7
        %v4563 = vsub.s32 2, %v4562
        %v4564 = vrot.slane %v4500, %v4563
        %v4565 = vlaneseq
        %v4566 = vshrl.u32 %v4565, 7
        %v4567 = vsub.s32 3, %v4566
        %v4568 = vrot.slane %v4500, %v4567
        %vm4572 = vcmask 130048
        %v4573 = vsel %vm4572, %v4568, 0
        %4575 = vmatprep.subr.mxu0 0.0
        %4576 = vmatpush1.msra.mxu0 %v4501
        %4577 = vmatprep.subr.mxu0 0.0
        %4578 = vmatpush1.msra.mxu0 %v4502
        %4579 = vmatprep.subr.mxu0 0.0
        %4580 = vmatpush1.msra.mxu0 %v4503
        %4581 = vmatprep.subr.mxu0 0.0
        %4582 = vmatpush1.msra.mxu0 %v4504
        %4583 = vmatprep.subr.mxu0 0.0
        %4584 = vmatpush1.msra.mxu0 %v4505
        %4585 = vmatprep.subr.mxu0 0.0
        %4586 = vmatpush1.msra.mxu0 %v4506
        %4587 = vmatprep.subr.mxu0 0.0
        %4588 = vmatpush1.msra.mxu0 %v4507
        %4589 = vmatprep.subr.mxu0 0.0
        %4590 = vmatpush1.msra.mxu0 %v4508
        %4591 = vmatprep.subr.mxu0 0.0
        %4592 = vmatpush1.msra.mxu0 %v4509
        %4593 = vmatprep.subr.mxu0 0.0
        %4594 = vmatpush1.msra.mxu0 %v4510
        %4595 = vmatprep.subr.mxu0 0.0
        %4596 = vmatpush1.msra.mxu0 %v4511
        %4597 = vmatprep.subr.mxu0 0.0
        %4598 = vmatpush1.msra.mxu0 %v4512
        %4599 = vmatprep.subr.mxu0 0.0
        %4600 = vmatpush1.msra.mxu0 %v4513
        %4601 = vmatprep.subr.mxu0 0.0
        %4602 = vmatpush1.msra.mxu0 %v4514
        %4603 = vmatprep.subr.mxu0 0.0
        %4604 = vmatpush1.msra.mxu0 %v4515
        %4605 = vmatprep.subr.mxu0 0.0
        %4606 = vmatpush1.msra.mxu0 %v4516
        %4607 = vmatprep.subr.mxu0 0.0
        %4608 = vmatpush1.msra.mxu0 %v4517
        %4609 = vmatprep.subr.mxu0 0.0
        %4610 = vmatpush1.msra.mxu0 %v4518
        %4611 = vmatprep.subr.mxu0 0.0
        %4612 = vmatpush1.msra.mxu0 %v4519
        %4613 = vmatprep.subr.mxu0 0.0
        %4614 = vmatpush1.msra.mxu0 %v4520
        %4615 = vmatprep.subr.mxu0 0.0
        %4616 = vmatpush1.msra.mxu0 %v4521
        %4617 = vmatprep.subr.mxu0 0.0
        %4618 = vmatpush1.msra.mxu0 %v4522
        %4619 = vmatprep.subr.mxu0 0.0
        %4620 = vmatpush1.msra.mxu0 %v4523
        %4621 = vmatprep.subr.mxu0 0.0
        %4622 = vmatpush1.msra.mxu0 %v4524
        %4623 = vmatprep.subr.mxu0 0.0
        %4624 = vmatpush1.msra.mxu0 %v4525
        %4625 = vmatprep.subr.mxu0 0.0
        %4626 = vmatpush1.msra.mxu0 %v4526
        %4627 = vmatprep.subr.mxu0 0.0
        %4628 = vmatpush1.msra.mxu0 %v4527
        %4629 = vmatprep.subr.mxu0 0.0
        %4630 = vmatpush1.msra.mxu0 %v4528
        %4631 = vmatprep.subr.mxu0 0.0
        %4632 = vmatpush1.msra.mxu0 %v4529
        %4633 = vmatprep.subr.mxu0 0.0
        %4634 = vmatpush1.msra.mxu0 %v4530
        %4635 = vmatprep.subr.mxu0 0.0
        %4636 = vmatpush1.msra.mxu0 %v4531
        %4637 = vmatprep.subr.mxu0 0.0
        %4638 = vmatpush1.msra.mxu0 %v4532
        %4639 = vmatprep.mubr.f32.mxu0 %v4560
        %4640 = vmatmul.mubr.f32.gmra.mrb[0].mxu0 %v4556
        %v4641 = vpop.f32.mrb[0].mxu0
        %v4642 = vadd.f32 %v4551, %v4641
        %v4643 = vpop.f32.mrb[0].mxu0
        %4644 = vdwg.mxu0
        %4645 = vmatprep.subr.mxu0 0.0
        %4646 = vmatpush1.msra.mxu0 %v4533
        %4647 = vmatprep.subr.mxu0 0.0
        %4648 = vmatpush1.msra.mxu0 %v4534
        %4649 = vmatprep.subr.mxu0 0.0
        %4650 = vmatpush1.msra.mxu0 %v4535
        %4651 = vmatprep.subr.mxu0 0.0
        %4652 = vmatpush1.msra.mxu0 %v4536
        %4653 = vmatprep.subr.mxu0 0.0
        %4654 = vmatpush1.msra.mxu0 %v4537
        %4655 = vmatprep.subr.mxu0 0.0
        %4656 = vmatpush1.msra.mxu0 %v4538
        %4657 = vmatprep.subr.mxu0 0.0
        %4658 = vmatpush1.msra.mxu0 %v4539
        %4659 = vmatprep.subr.mxu0 0.0
        %4660 = vmatpush1.msra.mxu0 %v4540
        %4661 = vmatprep.subr.mxu0 0.0
        %4662 = vmatpush1.msra.mxu0 %v4541
        %4663 = vmatprep.subr.mxu0 0.0
        %4664 = vmatpush1.msra.mxu0 %v4542
        %4665 = vmatprep.subr.mxu0 0.0
        %4666 = vmatpush1.msra.mxu0 %v4543
        %4667 = vmatprep.subr.mxu0 0.0
        %4668 = vmatpush1.msra.mxu0 %v4544
        %4669 = vmatprep.subr.mxu0 0.0
        %4670 = vmatpush1.msra.mxu0 %v4545
        %4671 = vmatprep.subr.mxu0 0.0
        %4672 = vmatpush1.msra.mxu0 %v4546
        %4673 = vmatprep.subr.mxu0 0.0
        %4674 = vmatpush1.msra.mxu0 %v4547
        %4675 = vmatprep.subr.mxu0 0.0
        %4676 = vmatpush1.msra.mxu0 %v4548
        %4677 = vmatprep.subr.mxu0 0.0
        %4678 = vmatpush1.msra.mxu0 %v4549
        %4679 = vmatprep.subr.mxu0 0.0
        %4680 = vmatpush1.msra.mxu0 %v4550
        %4681 = vmatprep.subr.mxu0 0.0
        %4682 = vmatpush1.msra.mxu0 0.0
        %4683 = vmatprep.subr.mxu0 0.0
        %4684 = vmatpush1.msra.mxu0 0.0
        %4685 = vmatprep.subr.mxu0 0.0
        %4686 = vmatpush1.msra.mxu0 0.0
        %4687 = vmatprep.subr.mxu0 0.0
        %4688 = vmatpush1.msra.mxu0 0.0
        %4689 = vmatprep.subr.mxu0 0.0
        %4690 = vmatpush1.msra.mxu0 0.0
        %4691 = vmatprep.subr.mxu0 0.0
        %4692 = vmatpush1.msra.mxu0 0.0
        %4693 = vmatprep.subr.mxu0 0.0
        %4694 = vmatpush1.msra.mxu0 0.0
        %4695 = vmatprep.subr.mxu0 0.0
        %4696 = vmatpush1.msra.mxu0 0.0
        %4697 = vmatprep.subr.mxu0 0.0
        %4698 = vmatpush1.msra.mxu0 0.0
        %4699 = vmatprep.subr.mxu0 0.0
        %4700 = vmatpush1.msra.mxu0 0.0
        %4701 = vmatprep.subr.mxu0 0.0
        %4702 = vmatpush1.msra.mxu0 0.0
        %4703 = vmatprep.subr.mxu0 0.0
        %4704 = vmatpush1.msra.mxu0 0.0
        %4705 = vmatprep.subr.mxu0 0.0
        %4706 = vmatpush1.msra.mxu0 0.0
        %4707 = vmatprep.subr.mxu0 0.0
        %4708 = vmatpush1.msra.mxu0 0.0
        %4709 = vmatprep.mubr.f32.mxu0 %v4573
        %4710 = vmatmul.mubr.f32.gmra.mrb[0].mxu0 %v4564
        %v4711 = vpop.f32.mrb[0].mxu0
        %v4712 = vadd.f32 %v4642, %v4711
        %v4713 = vpop.f32.mrb[0].mxu0
        %4714 = vdwg.mxu0
        %v4715 = vmax.f32 %v4712, 0.0
        %v4716 = vld [vmem:[%s7] sm:$0xff]
        %v4717 = vld [vmem:[%s7 + $0x8] sm:$0xff]
        %v4718 = vld [vmem:[%s7 + $0x10] sm:$0xff]
        %v4719 = vld [vmem:[%s7 + $0x18] sm:$0xff]
        %v4720 = vld [vmem:[%s7 + $0x20] sm:$0xff]
        %v4721 = vld [vmem:[%s7 + $0x28] sm:$0xff]
        %v4722 = vld [vmem:[%s7 + $0x30] sm:$0xff]
        %v4723 = vld [vmem:[%s7 + $0x38] sm:$0xff]
        %v4724 = vld [vmem:[%s7 + $0x40] sm:$0xff]
        %v4725 = vld [vmem:[%s7 + $0x48] sm:$0xff]
        %v4726 = vld [vmem:[%s7 + $0x50] sm:$0xff]
        %v4727 = vld [vmem:[%s7 + $0x58] sm:$0xff]
        %v4728 = vld [vmem:[%s7 + $0x60] sm:$0xff]
        %v4729 = vld [vmem:[%s7 + $0x68] sm:$0xff]
        %v4730 = vld [vmem:[%s7 + $0x70] sm:$0xff]
        %v4731 = vld [vmem:[%s7 + $0x78] sm:$0xff]
        %v4732 = vld [vmem:[%s8] sm:$0x1]
        %4733 = vmatprep.subr.mxu0 0.0
        %4734 = vmatpush1.msra.mxu0 %v4716
        %4735 = vmatprep.subr.mxu0 0.0
        %4736 = vmatpush1.msra.mxu0 %v4717
        %4737 = vmatprep.subr.mxu0 0.0
        %4738 = vmatpush1.msra.mxu0 %v4718
        %4739 = vmatprep.subr.mxu0 0.0
        %4740 = vmatpush1.msra.mxu0 %v4719
        %4741 = vmatprep.subr.mxu0 0.0
        %4742 = vmatpush1.msra.mxu0 %v4720
        %4743 = vmatprep.subr.mxu0 0.0
        %4744 = vmatpush1.msra.mxu0 %v4721
        %4745 = vmatprep.subr.mxu0 0.0
        %4746 = vmatpush1.msra.mxu0 %v4722
        %4747 = vmatprep.subr.mxu0 0.0
        %4748 = vmatpush1.msra.mxu0 %v4723
        %4749 = vmatprep.subr.mxu0 0.0
        %4750 = vmatpush1.msra.mxu0 %v4724
        %4751 = vmatprep.subr.mxu0 0.0
        %4752 = vmatpush1.msra.mxu0 %v4725
        %4753 = vmatprep.subr.mxu0 0.0
        %4754 = vmatpush1.msra.mxu0 %v4726
        %4755 = vmatprep.subr.mxu0 0.0
        %4756 = vmatpush1.msra.mxu0 %v4727
        %4757 = vmatprep.subr.mxu0 0.0
        %4758 = vmatpush1.msra.mxu0 %v4728
        %4759 = vmatprep.subr.mxu0 0.0
        %4760 = vmatpush1.msra.mxu0 %v4729
        %4761 = vmatprep.subr.mxu0 0.0
        %4762 = vmatpush1.msra.mxu0 %v4730
        %4763 = vmatprep.subr.mxu0 0.0
        %4764 = vmatpush1.msra.mxu0 %v4731
        %4765 = vmatprep.subr.mxu0 0.0
        %4766 = vmatpush1.msra.mxu0 0.0
        %4767 = vmatprep.subr.mxu0 0.0
        %4768 = vmatpush1.msra.mxu0 0.0
        %4769 = vmatprep.subr.mxu0 0.0
        %4770 = vmatpush1.msra.mxu0 0.0
        %4771 = vmatprep.subr.mxu0 0.0
        %4772 = vmatpush1.msra.mxu0 0.0
        %4773 = vmatprep.subr.mxu0 0.0
        %4774 = vmatpush1.msra.mxu0 0.0
        %4775 = vmatprep.subr.mxu0 0.0
        %4776 = vmatpush1.msra.mxu0 0.0
        %4777 = vmatprep.subr.mxu0 0.0
        %4778 = vmatpush1.msra.mxu0 0.0
        %4779 = vmatprep.subr.mxu0 0.0
        %4780 = vmatpush1.msra.mxu0 0.0
        %4781 = vmatprep.subr.mxu0 0.0
        %4782 = vmatpush1.msra.mxu0 0.0
        %4783 = vmatprep.subr.mxu0 0.0
        %4784 = vmatpush1.msra.mxu0 0.0
        %4785 = vmatprep.subr.mxu0 0.0
        %4786 = vmatpush1.msra.mxu0 0.0
        %4787 = vmatprep.subr.mxu0 0.0
        %4788 = vmatpush1.msra.mxu0 0.0
        %4789 = vmatprep.subr.mxu0 0.0
        %4790 = vmatpush1.msra.mxu0 0.0
        %4791 = vmatprep.subr.mxu0 0.0
        %4792 = vmatpush1.msra.mxu0 0.0
        %4793 = vmatprep.subr.mxu0 0.0
        %4794 = vmatpush1.msra.mxu0 0.0
        %4795 = vmatprep.subr.mxu0 0.0
        %4796 = vmatpush1.msra.mxu0 0.0
        %4797 = vmatprep.mubr.f32.mxu0 0.0
        %4798 = vmatmul.mubr.f32.gmra.mrb[0].mxu0 %v4715
        %v4799 = vpop.f32.mrb[0].mxu0
        %v4800 = vadd.f32 %v4732, %v4799
        %v4801 = vpop.f32.mrb[0].mxu0
        %4802 = vdwg.mxu0
        %v4803 = vmax.f32 %v4800, 0.0
        %v4804 = vld [vmem:[%s9] sm:$0xff]
        %v4805 = vld [vmem:[%s9 + $0x8] sm:$0xff]
        %v4806 = vld [vmem:[%s9 + $0x10] sm:$0xff]
        %v4807 = vld [vmem:[%s9 + $0x18] sm:$0xff]
        %v4808 = vld [vmem:[%s9 + $0x20] sm:$0xff]
        %v4809 = vld [vmem:[%s9 + $0x28] sm:$0xff]
        %v4810 = vld [vmem:[%s9 + $0x30] sm:$0xff]
        %v4811 = vld [vmem:[%s9 + $0x38] sm:$0xff]
        %v4812 = vld [vmem:[%s9 + $0x40] sm:$0xff]
        %v4813 = vld [vmem:[%s9 + $0x48] sm:$0xff]
        %v4814 = vld [vmem:[%s9 + $0x50] sm:$0xff]
        %v4815 = vld [vmem:[%s9 + $0x58] sm:$0xff]
        %v4816 = vld [vmem:[%s9 + $0x60] sm:$0xff]
        %v4817 = vld [vmem:[%s9 + $0x68] sm:$0xff]
        %v4818 = vld [vmem:[%s9 + $0x70] sm:$0xff]
        %v4819 = vld [vmem:[%s9 + $0x78] sm:$0xff]
        %v4820 = vld [vmem:[%s10] sm:$0x1]
        %4821 = vmatprep.subr.mxu0 0.0
        %4822 = vmatpush1.msra.mxu0 %v4804
        %4823 = vmatprep.subr.mxu0 0.0
        %4824 = vmatpush1.msra.mxu0 %v4805
        %4825 = vmatprep.subr.mxu0 0.0
        %4826 = vmatpush1.msra.mxu0 %v4806
        %4827 = vmatprep.subr.mxu0 0.0
        %4828 = vmatpush1.msra.mxu0 %v4807
        %4829 = vmatprep.subr.mxu0 0.0
        %4830 = vmatpush1.msra.mxu0 %v4808
        %4831 = vmatprep.subr.mxu0 0.0
        %4832 = vmatpush1.msra.mxu0 %v4809
        %4833 = vmatprep.subr.mxu0 0.0
        %4834 = vmatpush1.msra.mxu0 %v4810
        %4835 = vmatprep.subr.mxu0 0.0
        %4836 = vmatpush1.msra.mxu0 %v4811
        %4837 = vmatprep.subr.mxu0 0.0
        %4838 = vmatpush1.msra.mxu0 %v4812
        %4839 = vmatprep.subr.mxu0 0.0
        %4840 = vmatpush1.msra.mxu0 %v4813
        %4841 = vmatprep.subr.mxu0 0.0
        %4842 = vmatpush1.msra.mxu0 %v4814
        %4843 = vmatprep.subr.mxu0 0.0
        %4844 = vmatpush1.msra.mxu0 %v4815
        %4845 = vmatprep.subr.mxu0 0.0
        %4846 = vmatpush1.msra.mxu0 %v4816
        %4847 = vmatprep.subr.mxu0 0.0
        %4848 = vmatpush1.msra.mxu0 %v4817
        %4849 = vmatprep.subr.mxu0 0.0
        %4850 = vmatpush1.msra.mxu0 %v4818
        %4851 = vmatprep.subr.mxu0 0.0
        %4852 = vmatpush1.msra.mxu0 %v4819
        %4853 = vmatprep.subr.mxu0 0.0
        %4854 = vmatpush1.msra.mxu0 0.0
        %4855 = vmatprep.subr.mxu0 0.0
        %4856 = vmatpush1.msra.mxu0 0.0
        %4857 = vmatprep.subr.mxu0 0.0
        %4858 = vmatpush1.msra.mxu0 0.0
        %4859 = vmatprep.subr.mxu0 0.0
        %4860 = vmatpush1.msra.mxu0 0.0
        %4861 = vmatprep.subr.mxu0 0.0
        %4862 = vmatpush1.msra.mxu0 0.0
        %4863 = vmatprep.subr.mxu0 0.0
        %4864 = vmatpush1.msra.mxu0 0.0
        %4865 = vmatprep.subr.mxu0 0.0
        %4866 = vmatpush1.msra.mxu0 0.0
        %4867 = vmatprep.subr.mxu0 0.0
        %4868 = vmatpush1.msra.mxu0 0.0
        %4869 = vmatprep.subr.mxu0 0.0
        %4870 = vmatpush1.msra.mxu0 0.0
        %4871 = vmatprep.subr.mxu0 0.0
        %4872 = vmatpush1.msra.mxu0 0.0
        %4873 = vmatprep.subr.mxu0 0.0
        %4874 = vmatpush1.msra.mxu0 0.0
        %4875 = vmatprep.subr.mxu0 0.0
        %4876 = vmatpush1.msra.mxu0 0.0
        %4877 = vmatprep.subr.mxu0 0.0
        %4878 = vmatpush1.msra.mxu0 0.0
        %4879 = vmatprep.subr.mxu0 0.0
        %4880 = vmatpush1.msra.mxu0 0.0
        %4881 = vmatprep.subr.mxu0 0.0
        %4882 = vmatpush1.msra.mxu0 0.0
        %4883 = vmatprep.subr.mxu0 0.0
        %4884 = vmatpush1.msra.mxu0 0.0
        %4885 = vmatprep.mubr.f32.mxu0 0.0
        %4886 = vmatmul.mubr.f32.gmra.mrb[0].mxu0 %v4803
        %v4887 = vpop.f32.mrb[0].mxu0
        %v4888 = vadd.f32 %v4820, %v4887
        %v4889 = vpop.f32.mrb[0].mxu0
        %4890 = vdwg.mxu0
        %v4891 = vlaneseq
        %v4892 = vand.u32 %v4891, 127
        %vm4893 = vcmp.lt.s32.totalorder %v4892, 10
        %v4894 = vsel %vm4893, %v4888, -1e+30
        %v4895 = vsel %vm2319, %v4894, -inf
        %4896 = vmax.xlane.f32.xlu0 %v4895
        %v4897 = vpop.xlane.xlu0 %4896
        %v4898 = vsub.f32 %v4894, %v4897
        %v4899 = vmul.f32 %v4898, 1.442695
        %v4900 = vpow.pop %v4899
        %v4901 = vsel %vm2319, %v4900, 0.0
        %4902 = vadd.xlane.f32.xlu0 %v4901
        %v4903 = vpop.xlane.xlu0 %4902
        %v4904 = vrcp.pop %v4903
        %v4905 = vmul.f32 %v4900, %v4904
        %vm4906 = vcmask 73728
        %4907 = vst.msk [vmem:[%s409] sm:$0x1] %vm4906, %v4888
        %4908 = vst.msk [vmem:[%s415] sm:$0x1] %vm4906, %v4905
        %s4909 = sand.u32 %s274, 1
        %s4910 = scalar_lea.sflag [#allocation5], %s4909
        %s4911 = sand.u32 %s274, 1
        %s4912 = scalar_lea.vmem [#allocation4], %s4911
        %s4913 = sand.u32 %s300, 1
        %s4914 = scalar_lea.sflag [#allocation7], %s4913
        %s4915 = sand.u32 %s300, 1
        %s4916 = scalar_lea.vmem [#allocation6], %s4915
        // Predicated region
        $region65: #{lenet5_forward.1} parent=63 // pred_check
          %p4917 = pneg %p284
        $region66: #{lenet5_forward.1} parent=63 // pred_check_branch
          %4919 = sbr.rel (%p4917) target = $region68
        $region67: #{lenet5_forward.1} parent=63 // pred_region
          %s4921 = ssub.s32 16, 16
          %4922 = vsyncadd %s4910, %s4921
          %s4923 = smul.addr %s30, 16
          %s4924 = scalar_lea.hbm %s11, %s4923
          %s4926 = sshll.u32 %s4912, 4
          %s4927 = int_to_ptr.vmem [resolvable:$true] %s4926
          %4929 = dma.vmem_to_hbm [thread:$0]  %s4927, 16, %s4924, %s4910
        $region68: #{lenet5_forward.1} parent=63 // pred_fallthru
          _
        // Predicated region
        $region69: #{lenet5_forward.1} parent=63 // pred_check
          %p4930 = pneg %p310
        $region70: #{lenet5_forward.1} parent=63 // pred_check_branch
          %4932 = sbr.rel (%p4930) target = $region72
        $region71: #{lenet5_forward.1} parent=63 // pred_region
          %s4934 = ssub.s32 16, 16
          %4935 = vsyncadd %s4914, %s4934
          %s4936 = smul.addr %s30, 16
          %s4937 = scalar_lea.hbm %s12, %s4936
          %s4939 = sshll.u32 %s4916, 4
          %s4940 = int_to_ptr.vmem [resolvable:$true] %s4939
          %4942 = dma.vmem_to_hbm [thread:$0]  %s4940, 16, %s4937, %s4914
        $region72: #{lenet5_forward.1} parent=63 // pred_fallthru
          _
      $region64: #{lenet5_forward.1} parent=5 // pred_fallthru
        _
      %p4943 = scmp.le.s32.totalorder 2, %s25
      // Predicated region
      $region73: #{lenet5_forward.1} parent=5 // pred_check
        %p4944 = pneg %p4943
      $region74: #{lenet5_forward.1} parent=5 // pred_check_branch
        %4946 = sbr.rel (%p4944) target = $region76
      $region75: #{lenet5_forward.1} parent=5 // pred_region
        %s4947 = ssub.s32 %s25, 2
        // Predicated region
        $region77: #{lenet5_forward.1} parent=75 // pred_check
          %p4948 = pneg %p290
        $region78: #{lenet5_forward.1} parent=75 // pred_check_branch
          %4950 = sbr.rel (%p4948) target = $region80
        $region79: #{lenet5_forward.1} parent=75 // pred_region
          %s4951 = sand.u32 %s275, 1
          %s4952 = scalar_lea.sflag [#allocation5], %s4951
          %s4953 = sand.u32 %s275, 1
          %s4954 = scalar_lea.vmem [#allocation4], %s4953
          %4955 = dma.done %s4952, 16
        $region80: #{lenet5_forward.1} parent=75 // pred_fallthru
          _
        // Predicated region
        $region81: #{lenet5_forward.1} parent=75 // pred_check
          %p4956 = pneg %p316
        $region82: #{lenet5_forward.1} parent=75 // pred_check_branch
          %4958 = sbr.rel (%p4956) target = $region84
        $region83: #{lenet5_forward.1} parent=75 // pred_region
          %s4959 = sand.u32 %s301, 1
          %s4960 = scalar_lea.sflag [#allocation7], %s4959
          %s4961 = sand.u32 %s301, 1
          %s4962 = scalar_lea.vmem [#allocation6], %s4961
          %4963 = dma.done %s4960, 16
        $region84: #{lenet5_forward.1} parent=75 // pred_fallthru
          _
      $region76: #{lenet5_forward.1} parent=5 // pred_fallthru
        _
    $region6: #{lenet5_forward.1} parent=1 // loop_footer
      %s29 = sadd.s32 1, %s25
    $region7: #{lenet5_forward.1} parent=1 // loop_footer_branch
      %24 = sbr.rel target = $region3
    $region8: #{lenet5_forward.1} parent=1 // loop_exit
      _
    %4964 = vsyncpa [#allocation5], 1
    %s4965 = scalar_lea.sflag [#allocation5], 1
    %4966 = vsyncpa %s4965, 1
    %4967 = vsyncpa [#allocation7], 1
    %s4968 = scalar_lea.sflag [#allocation7], 1
    %4969 = vsyncpa %s4968, 1

</llo_original>
